<compile_context>
chip_gen: v5e
topology: v5e:2x2
jax: 0.10.0
libtpu: 0.0.40
codegen_flags: <defaults>
</compile_context>

<pallas_src>
import functools

import numpy as np
import jax
import jax.numpy as jnp
from jax import lax
from jax.experimental import pallas as pl
from jax.experimental.pallas import tpu as pltpu

K = 5      # kernel_size
PAD = 2    # padding (same conv, stride 1)


def _round_up(n, m):
    return (n + m - 1) // m * m


# ---------------------------------------------------------------------------
# Pallas kernel: the bidirectional recurrence (h-path only) in one call.
#   grid = (direction, time); h/c persist in VMEM scratch across time steps.
# ---------------------------------------------------------------------------
def _biconvlstm_recurrent_kernel(gx_ref, mh_ref, out_ref, hbuf, cbuf,
                                 *, B, H, W, Ch, HL, mm_dtype):
    t = pl.program_id(1)

    @pl.when(t == 0)                      # init_state (zeros) for this direction
    def _():
        hbuf[...] = jnp.zeros_like(hbuf)
        cbuf[...] = jnp.zeros_like(cbuf)

    BH = B * H
    WC = W * Ch                           # folded (width, channel) lane dim

    # Gate pre-activations, seeded from the precomputed input-path gates
    # (bias already folded in by the wrapper); f32 throughout.
    acc = gx_ref[0, 0]                    # (BH, 4*WC)

    # 5x5 "same" conv over h as 5 banded matmuls (dy loop explicit; dx / channel
    # structure and the horizontal halo are pre-folded into the weights):
    #   (B*H, W*Ch) x (W*Ch, 4*W*Ch)
    hp = hbuf[...].astype(mm_dtype)       # one cast per step, sliced per dy
    for dy in range(K):
        hs = hp[:, dy:dy + H, :].reshape(BH, HL)
        acc = acc + jnp.dot(hs, mh_ref[0, dy],
                            preferred_element_type=jnp.float32)

    # gate order matches torch .chunk(4, dim=1): in, remember, out, cell
    i_g = jax.nn.sigmoid(acc[:, 0 * WC:1 * WC])
    f_g = jax.nn.sigmoid(acc[:, 1 * WC:2 * WC])
    o_g = jax.nn.sigmoid(acc[:, 2 * WC:3 * WC])
    g_g = jnp.tanh(acc[:, 3 * WC:4 * WC])

    c_new = f_g * cbuf[...] + i_g * g_g
    h_new = o_g * jnp.tanh(c_new)

    cbuf[...] = c_new
    # Lane-aligned writeback: h is stored at lane offset 0 of hbuf (full lane
    # width when HL == WC); the vertical halo rows (0..PAD-1, PAD+H..) stay zero.
    if HL == WC:
        hbuf[:, PAD:PAD + H, :] = h_new.reshape(B, H, WC)
    else:
        hbuf[:, PAD:PAD + H, :WC] = h_new.reshape(B, H, WC)
    out_ref[...] = h_new.reshape(1, 1, BH, WC).astype(out_ref.dtype)


# ---------------------------------------------------------------------------
# Wrapper: layout plumbing, input-path gate precompute, one pallas_call
# ---------------------------------------------------------------------------
def biconvlstm_forward(sequence_nchw, prep):
    """sequence_nchw: (T, B, Cin, H, W) -> (T, B, hidden_size, H, W) float32."""
    T, B, Cin, H, W = sequence_nchw.shape
    ch_f, ch_b = prep["chs"]
    Chp = prep["chp"]
    mm_dtype = prep["mx"].dtype
    out_dtype = mm_dtype                  # bf16 output in the perf configuration

    Hp, Wp = H + 2 * PAD, W + 2 * PAD
    XL = prep["mx"].shape[2]              # lane-aligned x contraction dim
    HL = prep["mh"].shape[2]              # lane-aligned h contraction dim (== W*Chp here)
    BH, WC = B * H, W * Chp
    G = 4 * WC

    # NHWC, halo-pad ONCE for the whole sequence, fold (W, Cin) into the lane
    # axis and zero-pad the lane dim to XL (lane-aligned input slab).
    seq = jnp.transpose(sequence_nchw, (0, 1, 3, 4, 2)).astype(jnp.float32)
    seq = jnp.pad(seq, ((0, 0), (0, 0), (PAD, PAD), (PAD, PAD), (0, 0)))
    xfold = seq.reshape(T, B, Hp, Wp * Cin)
    xfold = jnp.pad(xfold, ((0, 0), (0, 0), (0, 0), (0, XL - Wp * Cin)))
    xfold = xfold.astype(mm_dtype)

    # --- input-path gate precompute (non-recurrent, full-MXU-occupancy GEMM) ---
    # gx[d, t] = bias[d] + sum_dy xfold[t][:, dy:dy+H, :] @ mx[d, dy]
    xs_all = jnp.stack([xfold[:, :, dy:dy + H, :] for dy in range(K)], axis=1)
    xs_all = xs_all.reshape(T, K, BH, XL)
    gx = jnp.einsum("tkml,dklg->dtmg", xs_all, prep["mx"],
                    preferred_element_type=jnp.float32,
                    precision=lax.Precision.HIGHEST)
    gx = gx + prep["b"][:, None, None, :]          # (2, T, BH, G) f32

    kernel = functools.partial(_biconvlstm_recurrent_kernel,
                               B=B, H=H, W=W, Ch=Chp, HL=HL, mm_dtype=mm_dtype)

    # time index actually processed at grid point (d, t): t for fwd, T-1-t for bwd
    def tmap(d, t):
        return t + d * (T - 1 - 2 * t)

    grid_spec = pltpu.PrefetchScalarGridSpec(
        num_scalar_prefetch=0,
        grid=(2, T),
        in_specs=[
            pl.BlockSpec((1, 1, BH, G), lambda d, t: (d, tmap(d, t), 0, 0)),   # gx
            pl.BlockSpec((1, K, HL, G), lambda d, t: (d, 0, 0, 0)),            # mh
        ],
        out_specs=pl.BlockSpec((1, 1, BH, WC), lambda d, t: (d, tmap(d, t), 0, 0)),
        scratch_shapes=[
            pltpu.VMEM((B, Hp, HL), jnp.float32),   # hidden state (vertical halo only)
            pltpu.VMEM((BH, WC), jnp.float32),      # cell state
        ],
    )

    # VMEM budget from the actual (double-buffered) block + scratch footprint.
    mm_bytes = jnp.dtype(mm_dtype).itemsize
    out_bytes = jnp.dtype(out_dtype).itemsize
    footprint = (2 * (BH * G * 4 + K * HL * G * mm_bytes + BH * WC * out_bytes)
                 + B * Hp * HL * 4 + BH * WC * 4)
    vmem_limit = int(min(32 * 1024 * 1024, max(2 * footprint, 16 * 1024 * 1024)))

    out = pl.pallas_call(
        kernel,
        grid_spec=grid_spec,
        out_shape=jax.ShapeDtypeStruct((2, T, BH, WC), out_dtype),
        compiler_params=pltpu.CompilerParams(
            dimension_semantics=("parallel", "arbitrary"),
            vmem_limit_bytes=vmem_limit,
        ),
    )(gx, prep["mh"])

    out = out.astype(jnp.float32).reshape(2, T, B, H, W, Chp)
    res = jnp.concatenate([out[0, ..., :ch_f], out[1, ..., :ch_b]], axis=-1)
    return jnp.transpose(res, (0, 1, 4, 2, 3))               # back to NCHW


# ---------------------------------------------------------------------------
# One-time parameter preparation: fold conv weights into banded matmul weights
# ---------------------------------------------------------------------------
def _pad_gate_cols(w, ch, chp):
    """(25, cin, 4*ch) -> (25, cin, 4*chp): zero-pad each of the 4 gate blocks."""
    w = np.asarray(w, np.float32)
    cin = w.shape[1]
    w = w.reshape(K * K, cin, 4, ch)
    out = np.zeros((K * K, cin, 4, chp), np.float32)
    out[..., :ch] = w
    return out.reshape(K * K, cin, 4 * chp)


def _banded_x(w_taps, cin, chp, W, rows):
    """Banded x-path weights for the physically halo-padded x slab.

    w_taps: (25, cin, 4*chp), tap index dy*5+dx.  LHS column j' (padded width)
    maps to output column j when j' = j + dx, 0 <= dx < 5.
    Returns (5, rows, 4*W*chp); rows beyond (W+2*PAD)*cin are zero.
    """
    w5 = np.asarray(w_taps, np.float32).reshape(K, K, cin, 4, chp)
    core = np.zeros((K, W + 2 * PAD, cin, 4, W, chp), np.float32)
    for dx in range(K):
        for j in range(W):
            core[:, j + dx, :, :, j, :] = w5[:, dx]
    core = core.reshape(K, (W + 2 * PAD) * cin, 4 * W * chp)
    if rows > core.shape[1]:
        core = np.pad(core, ((0, 0), (0, rows - core.shape[1]), (0, 0)))
    return core


def _banded_h(w_taps, chp, W, rows):
    """Banded h-path weights for the UNPADDED, lane-offset-0 hidden slab.

    w_taps: (25, chp, 4*chp), tap index dy*5+dx.  LHS column j' (unpadded width)
    maps to output column j when j' = j + dx - PAD; taps that fall on the conv
    zero-padding (j' outside [0, W)) contribute zero and are simply omitted.
    Returns (5, rows, 4*W*chp); rows beyond W*chp are zero.
    """
    w5 = np.asarray(w_taps, np.float32).reshape(K, K, chp, 4, chp)
    core = np.zeros((K, W, chp, 4, W, chp), np.float32)
    for dx in range(K):
        for j in range(W):
            jp = j + dx - PAD
            if 0 <= jp < W:
                core[:, jp, :, :, j, :] = w5[:, dx]
    core = core.reshape(K, W * chp, 4 * W * chp)
    if rows > core.shape[1]:
        core = np.pad(core, ((0, 0), (0, rows - core.shape[1]), (0, 0)))
    return core


def _fold_bias(b, ch, chp, W):
    bp = np.zeros((4, chp), np.float32)
    bp[:, :ch] = np.asarray(b, np.float32).reshape(4, ch)
    return np.tile(bp[:, None, :], (1, W, 1)).reshape(4 * W * chp)


def prepare_params(params, W, mm_dtype=jnp.bfloat16):
    """Pre-fold both directions' conv weights into lane-dense matmul weights."""
    ch_f = params["fwd"]["b"].shape[0] // 4
    ch_b = params["bwd"]["b"].shape[0] // 4
    chp = max(ch_f, ch_b)
    cin = params["fwd"]["wx"].shape[1]
    xl = _round_up((W + 2 * PAD) * cin, 128)   # lane-aligned x contraction dim
    hl = _round_up(W * chp, 128)               # lane-aligned h contraction dim

    mxs, mhs, bs = [], [], []
    for name, ch in (("fwd", ch_f), ("bwd", ch_b)):
        p = params[name]
        wx = _pad_gate_cols(p["wx"], ch, chp)                 # (25, cin, 4*chp)
        wh = _pad_gate_cols(p["wh"], ch, chp)                 # (25, ch,  4*chp)
        whp = np.zeros((K * K, chp, 4 * chp), np.float32)
        whp[:, :ch, :] = wh                                   # pad hidden-in dim
        mxs.append(_banded_x(wx, cin, chp, W, xl))
        mhs.append(_banded_h(whp, chp, W, hl))
        bs.append(_fold_bias(p["b"], ch, chp, W))

    return {
        "mx": jnp.asarray(np.stack(mxs), mm_dtype),   # (2, 5, xl, 4*W*chp)
        "mh": jnp.asarray(np.stack(mhs), mm_dtype),   # (2, 5, hl, 4*W*chp)
        "b": jnp.asarray(np.stack(bs), jnp.float32),  # (2, 4*W*chp)
        "chs": (ch_f, ch_b),
        "chp": chp,
    }


# ---------------------------------------------------------------------------
# Pure-JAX reference (for correctness check of the Pallas kernel)
# ---------------------------------------------------------------------------
def _ref_step(x, h, c, wx, wh, b):
    Ch = h.shape[-1]
    w = jnp.concatenate([wx.reshape(K, K, -1, 4 * Ch),
                         wh.reshape(K, K, -1, 4 * Ch)], axis=2)   # HWIO
    inp = jnp.concatenate([x, h], axis=-1)
    gates = lax.conv_general_dilated(
        inp, w, window_strides=(1, 1), padding="SAME",
        dimension_numbers=("NHWC", "HWIO", "NHWC")) + b
    i_g = jax.nn.sigmoid(gates[..., 0 * Ch:1 * Ch])
    f_g = jax.nn.sigmoid(gates[..., 1 * Ch:2 * Ch])
    o_g = jax.nn.sigmoid(gates[..., 2 * Ch:3 * Ch])
    g_g = jnp.tanh(gates[..., 3 * Ch:4 * Ch])
    c_new = f_g * c + i_g * g_g
    return o_g * jnp.tanh(c_new), c_new


def biconvlstm_reference(sequence_nchw, params):
    T, B, Cin, H, W = sequence_nchw.shape
    seq = jnp.transpose(sequence_nchw, (0, 1, 3, 4, 2)).astype(jnp.float32)

    def run(order, p):
        Ch = p["b"].shape[0] // 4
        h = jnp.zeros((B, H, W, Ch), jnp.float32)
        c = jnp.zeros((B, H, W, Ch), jnp.float32)
        outs = [None] * T
        for t in order:
            h, c = _ref_step(seq[t], h, c, p["wx"], p["wh"], p["b"])
            outs[t] = h
        return jnp.stack(outs, axis=0)

    out = jnp.concatenate([run(list(range(T)), params["fwd"]),
                           run(list(range(T - 1, -1, -1)), params["bwd"])], axis=-1)
    return jnp.transpose(out, (0, 1, 4, 2, 3))


# ---------------------------------------------------------------------------
def make_params(key, input_size, hidden_size):
    """Deterministic synthetic parameters (gates conv of each ConvLSTMCell)."""
    hid_fwd = hidden_size // 2
    hid_bwd = hidden_size - hid_fwd
    params = {}
    for name, ch in (("fwd", hid_fwd), ("bwd", hid_bwd)):
        key, k1, k2, k3 = jax.random.split(key, 4)
        params[name] = {
            "wx": 0.1 * jax.random.normal(k1, (K * K, input_size, 4 * ch), jnp.float32),
            "wh": 0.1 * jax.random.normal(k2, (K * K, ch, 4 * ch), jnp.float32),
            "b":  0.1 * jax.random.normal(k3, (4 * ch,), jnp.float32),
        }
    return params


if __name__ == "__main__":
    T, B, Cin, H, W = 8, 2, 4, 16, 16
    hidden_size = 32

    key = jax.random.PRNGKey(0)
    key, kx = jax.random.split(key)
    sequence = jax.random.normal(kx, (T, B, Cin, H, W), jnp.float32)
    params = make_params(key, Cin, hidden_size)

    ref = jax.block_until_ready(biconvlstm_reference(sequence, params))

    # f32 MXU operands: checks the fused-kernel math / banded layout / gx precompute.
    prep_f32 = prepare_params(params, W, mm_dtype=jnp.float32)
    out_f32 = jax.block_until_ready(biconvlstm_forward(sequence, prep_f32))
    assert out_f32.shape == (T, B, hidden_size, H, W), out_f32.shape
    err_f32 = float(jnp.max(jnp.abs(out_f32 - ref)))
    assert err_f32 < 5e-3, f"f32 kernel mismatch vs reference: {err_f32}"

    # bf16 MXU operands + bf16 kernel output (f32 accumulation, f32 gate math):
    # the perf configuration.
    prep_bf16 = prepare_params(params, W, mm_dtype=jnp.bfloat16)
    out_bf16 = jax.block_until_ready(biconvlstm_forward(sequence, prep_bf16))
    assert out_bf16.shape == (T, B, hidden_size, H, W), out_bf16.shape
    err_bf16 = float(jnp.max(jnp.abs(out_bf16 - ref)))
    assert err_bf16 < 5e-2, f"bf16 kernel mismatch vs reference: {err_bf16}"

    print("KERNEL_OK")
</pallas_src>

<mosaic_0001>
module attributes {stable_mosaic.version = 11 : i64} {
  func.func @_biconvlstm_recurrent_kernel(%arg0: i32, %arg1: i32, %arg2: memref<1x1x32x1024xf32, #tpu.memory_space<vmem>>, %arg3: memref<1x5x256x1024xf32, #tpu.memory_space<vmem>>, %arg4: memref<1x1x32x256xf32, #tpu.memory_space<vmem>>, %arg5: memref<2x20x256xf32, #tpu.memory_space<vmem>>, %arg6: memref<32x256xf32, #tpu.memory_space<vmem>>) attributes {dimension_semantics = [#tpu.dimension_semantics<parallel>, #tpu.dimension_semantics<arbitrary>], iteration_bounds = array<i64: 2, 8>, scalar_prefetch = 0 : i64, scratch_operands = 2 : i64, tpu.core_type = #tpu.core_type<tc>, window_params = [{transform_indices = @transform_0, window_bounds = array<i64: 1, 1, 32, 1024>}, {transform_indices = @transform_1, window_bounds = array<i64: 1, 5, 256, 1024>}, {transform_indices = @transform_2, window_bounds = array<i64: 1, 1, 32, 256>}]} {
    %c0_i32 = arith.constant 0 : i32
    %0 = arith.cmpi eq, %arg1, %c0_i32 : i32
    %1 = arith.extui %0 : i1 to i32
    %c0_i32_0 = arith.constant 0 : i32
    %2 = arith.cmpi ne, %1, %c0_i32_0 : i32
    scf.if %2 {
      %cst_41 = arith.constant 0.000000e+00 : f32
      %67 = vector.broadcast %cst_41 : f32 to vector<2x20x256xf32>
      %c0_42 = arith.constant 0 : index
      %c0_43 = arith.constant 0 : index
      %c0_44 = arith.constant 0 : index
      %68 = vector.load %arg5[%c0_42, %c0_43, %c0_44] : memref<2x20x256xf32, #tpu.memory_space<vmem>>, vector<2x20x256xf32>
      tpu.vector_store %arg5[%c0_42, %c0_43, %c0_44], %67 {strides = array<i32>} : memref<2x20x256xf32, #tpu.memory_space<vmem>>, vector<2x20x256xf32>,
      %cst_45 = arith.constant 0.000000e+00 : f32
      %69 = vector.broadcast %cst_45 : f32 to vector<32x256xf32>
      %c0_46 = arith.constant 0 : index
      %c0_47 = arith.constant 0 : index
      %70 = vector.load %arg6[%c0_46, %c0_47] : memref<32x256xf32, #tpu.memory_space<vmem>>, vector<32x256xf32>
      tpu.vector_store %arg6[%c0_46, %c0_47], %69 {strides = array<i32>} : memref<32x256xf32, #tpu.memory_space<vmem>>, vector<32x256xf32>,
    } else {
    }
    %c0 = arith.constant 0 : index
    %c0_1 = arith.constant 0 : index
    %c0_2 = arith.constant 0 : index
    %c0_3 = arith.constant 0 : index
    %3 = vector.load %arg2[%c0, %c0_1, %c0_2, %c0_3] : memref<1x1x32x1024xf32, #tpu.memory_space<vmem>>, vector<1x1x32x1024xf32>
    %4 = vector.shape_cast %3 : vector<1x1x32x1024xf32> to vector<32x1024xf32>
    %c0_4 = arith.constant 0 : index
    %c0_5 = arith.constant 0 : index
    %c0_6 = arith.constant 0 : index
    %5 = vector.load %arg5[%c0_4, %c0_5, %c0_6] : memref<2x20x256xf32, #tpu.memory_space<vmem>>, vector<2x20x256xf32>
    %6 = vector.extract_strided_slice %5 {offsets = [0, 0, 0], sizes = [2, 16, 256], strides = [1, 1, 1]} : vector<2x20x256xf32> to vector<2x16x256xf32>
    %7 = vector.shape_cast %6 : vector<2x16x256xf32> to vector<32x256xf32>
    %c0_7 = arith.constant 0 : index
    %c0_8 = arith.constant 0 : index
    %c0_9 = arith.constant 0 : index
    %c0_10 = arith.constant 0 : index
    %8 = vector.load %arg3[%c0_7, %c0_8, %c0_9, %c0_10] : memref<1x5x256x1024xf32, #tpu.memory_space<vmem>>, vector<1x1x256x1024xf32>
    %9 = vector.shape_cast %8 : vector<1x1x256x1024xf32> to vector<256x1024xf32>
    %cst = arith.constant dense<0.000000e+00> : vector<32x1024xf32>
    %10 = tpu.matmul %7, %9, %cst {dimension_numbers = #tpu.dot_dimension_numbers<[1], [0], [0], [1], [0, 0, 1, 1], [], []>} : vector<32x256xf32>, vector<256x1024xf32>, vector<32x1024xf32> -> vector<32x1024xf32>
    %11 = arith.addf %4, %10 : vector<32x1024xf32>
    %12 = vector.extract_strided_slice %5 {offsets = [0, 1, 0], sizes = [2, 16, 256], strides = [1, 1, 1]} : vector<2x20x256xf32> to vector<2x16x256xf32>
    %13 = vector.shape_cast %12 : vector<2x16x256xf32> to vector<32x256xf32>
    %c0_11 = arith.constant 0 : index
    %c1 = arith.constant 1 : index
    %c0_12 = arith.constant 0 : index
    %c0_13 = arith.constant 0 : index
    %14 = vector.load %arg3[%c0_11, %c1, %c0_12, %c0_13] : memref<1x5x256x1024xf32, #tpu.memory_space<vmem>>, vector<1x1x256x1024xf32>
    %15 = vector.shape_cast %14 : vector<1x1x256x1024xf32> to vector<256x1024xf32>
    %cst_14 = arith.constant dense<0.000000e+00> : vector<32x1024xf32>
    %16 = tpu.matmul %13, %15, %cst_14 {dimension_numbers = #tpu.dot_dimension_numbers<[1], [0], [0], [1], [0, 0, 1, 1], [], []>} : vector<32x256xf32>, vector<256x1024xf32>, vector<32x1024xf32> -> vector<32x1024xf32>
    %17 = arith.addf %11, %16 : vector<32x1024xf32>
    %18 = vector.extract_strided_slice %5 {offsets = [0, 2, 0], sizes = [2, 16, 256], strides = [1, 1, 1]} : vector<2x20x256xf32> to vector<2x16x256xf32>
    %19 = vector.shape_cast %18 : vector<2x16x256xf32> to vector<32x256xf32>
    %c0_15 = arith.constant 0 : index
    %c2 = arith.constant 2 : index
    %c0_16 = arith.constant 0 : index
    %c0_17 = arith.constant 0 : index
    %20 = vector.load %arg3[%c0_15, %c2, %c0_16, %c0_17] : memref<1x5x256x1024xf32, #tpu.memory_space<vmem>>, vector<1x1x256x1024xf32>
    %21 = vector.shape_cast %20 : vector<1x1x256x1024xf32> to vector<256x1024xf32>
    %cst_18 = arith.constant dense<0.000000e+00> : vector<32x1024xf32>
    %22 = tpu.matmul %19, %21, %cst_18 {dimension_numbers = #tpu.dot_dimension_numbers<[1], [0], [0], [1], [0, 0, 1, 1], [], []>} : vector<32x256xf32>, vector<256x1024xf32>, vector<32x1024xf32> -> vector<32x1024xf32>
    %23 = arith.addf %17, %22 : vector<32x1024xf32>
    %24 = vector.extract_strided_slice %5 {offsets = [0, 3, 0], sizes = [2, 16, 256], strides = [1, 1, 1]} : vector<2x20x256xf32> to vector<2x16x256xf32>
    %25 = vector.shape_cast %24 : vector<2x16x256xf32> to vector<32x256xf32>
    %c0_19 = arith.constant 0 : index
    %c3 = arith.constant 3 : index
    %c0_20 = arith.constant 0 : index
    %c0_21 = arith.constant 0 : index
    %26 = vector.load %arg3[%c0_19, %c3, %c0_20, %c0_21] : memref<1x5x256x1024xf32, #tpu.memory_space<vmem>>, vector<1x1x256x1024xf32>
    %27 = vector.shape_cast %26 : vector<1x1x256x1024xf32> to vector<256x1024xf32>
    %cst_22 = arith.constant dense<0.000000e+00> : vector<32x1024xf32>
    %28 = tpu.matmul %25, %27, %cst_22 {dimension_numbers = #tpu.dot_dimension_numbers<[1], [0], [0], [1], [0, 0, 1, 1], [], []>} : vector<32x256xf32>, vector<256x1024xf32>, vector<32x1024xf32> -> vector<32x1024xf32>
    %29 = arith.addf %23, %28 : vector<32x1024xf32>
    %30 = vector.extract_strided_slice %5 {offsets = [0, 4, 0], sizes = [2, 16, 256], strides = [1, 1, 1]} : vector<2x20x256xf32> to vector<2x16x256xf32>
    %31 = vector.shape_cast %30 : vector<2x16x256xf32> to vector<32x256xf32>
    %c0_23 = arith.constant 0 : index
    %c4 = arith.constant 4 : index
    %c0_24 = arith.constant 0 : index
    %c0_25 = arith.constant 0 : index
    %32 = vector.load %arg3[%c0_23, %c4, %c0_24, %c0_25] : memref<1x5x256x1024xf32, #tpu.memory_space<vmem>>, vector<1x1x256x1024xf32>
    %33 = vector.shape_cast %32 : vector<1x1x256x1024xf32> to vector<256x1024xf32>
    %cst_26 = arith.constant dense<0.000000e+00> : vector<32x1024xf32>
    %34 = tpu.matmul %31, %33, %cst_26 {dimension_numbers = #tpu.dot_dimension_numbers<[1], [0], [0], [1], [0, 0, 1, 1], [], []>} : vector<32x256xf32>, vector<256x1024xf32>, vector<32x1024xf32> -> vector<32x1024xf32>
    %35 = arith.addf %29, %34 : vector<32x1024xf32>
    %36 = vector.extract_strided_slice %35 {offsets = [0, 0], sizes = [32, 256], strides = [1, 1]} : vector<32x1024xf32> to vector<32x256xf32>
    %37 = arith.negf %36 : vector<32x256xf32>
    %38 = math.exp %37 : vector<32x256xf32>
    %cst_27 = arith.constant 1.000000e+00 : f32
    %39 = vector.broadcast %cst_27 : f32 to vector<32x256xf32>
    %40 = arith.addf %39, %38 : vector<32x256xf32>
    %41 = arith.divf %39, %40 : vector<32x256xf32>
    %42 = vector.extract_strided_slice %35 {offsets = [0, 256], sizes = [32, 256], strides = [1, 1]} : vector<32x1024xf32> to vector<32x256xf32>
    %43 = arith.negf %42 : vector<32x256xf32>
    %44 = math.exp %43 : vector<32x256xf32>
    %cst_28 = arith.constant 1.000000e+00 : f32
    %45 = vector.broadcast %cst_28 : f32 to vector<32x256xf32>
    %46 = arith.addf %45, %44 : vector<32x256xf32>
    %47 = arith.divf %45, %46 : vector<32x256xf32>
    %48 = vector.extract_strided_slice %35 {offsets = [0, 512], sizes = [32, 256], strides = [1, 1]} : vector<32x1024xf32> to vector<32x256xf32>
    %49 = arith.negf %48 : vector<32x256xf32>
    %50 = math.exp %49 : vector<32x256xf32>
    %cst_29 = arith.constant 1.000000e+00 : f32
    %51 = vector.broadcast %cst_29 : f32 to vector<32x256xf32>
    %52 = arith.addf %51, %50 : vector<32x256xf32>
    %53 = arith.divf %51, %52 : vector<32x256xf32>
    %54 = vector.extract_strided_slice %35 {offsets = [0, 768], sizes = [32, 256], strides = [1, 1]} : vector<32x1024xf32> to vector<32x256xf32>
    %55 = math.tanh %54 : vector<32x256xf32>
    %c0_30 = arith.constant 0 : index
    %c0_31 = arith.constant 0 : index
    %56 = vector.load %arg6[%c0_30, %c0_31] : memref<32x256xf32, #tpu.memory_space<vmem>>, vector<32x256xf32>
    %57 = arith.mulf %47, %56 : vector<32x256xf32>
    %58 = arith.mulf %41, %55 : vector<32x256xf32>
    %59 = arith.addf %57, %58 : vector<32x256xf32>
    %60 = math.tanh %59 : vector<32x256xf32>
    %61 = arith.mulf %53, %60 : vector<32x256xf32>
    %c0_32 = arith.constant 0 : index
    %c0_33 = arith.constant 0 : index
    %62 = vector.load %arg6[%c0_32, %c0_33] : memref<32x256xf32, #tpu.memory_space<vmem>>, vector<32x256xf32>
    tpu.vector_store %arg6[%c0_32, %c0_33], %59 {strides = array<i32>} : memref<32x256xf32, #tpu.memory_space<vmem>>, vector<32x256xf32>,
    %63 = vector.shape_cast %61 : vector<32x256xf32> to vector<2x16x256xf32>
    %c0_34 = arith.constant 0 : index
    %c2_35 = arith.constant 2 : index
    %c0_36 = arith.constant 0 : index
    %64 = vector.load %arg5[%c0_34, %c2_35, %c0_36] : memref<2x20x256xf32, #tpu.memory_space<vmem>>, vector<2x16x256xf32>
    tpu.vector_store %arg5[%c0_34, %c2_35, %c0_36], %63 {strides = array<i32>} : memref<2x20x256xf32, #tpu.memory_space<vmem>>, vector<2x16x256xf32>,
    %65 = vector.shape_cast %61 : vector<32x256xf32> to vector<1x1x32x256xf32>
    %c0_37 = arith.constant 0 : index
    %c0_38 = arith.constant 0 : index
    %c0_39 = arith.constant 0 : index
    %c0_40 = arith.constant 0 : index
    %66 = vector.load %arg4[%c0_37, %c0_38, %c0_39, %c0_40] : memref<1x1x32x256xf32, #tpu.memory_space<vmem>>, vector<1x1x32x256xf32>
    tpu.vector_store %arg4[%c0_37, %c0_38, %c0_39, %c0_40], %65 {strides = array<i32>} : memref<1x1x32x256xf32, #tpu.memory_space<vmem>>, vector<1x1x32x256xf32>,
    return
  }
  func.func @transform_0(%arg0: i32, %arg1: i32) -> (i32, i32, i32, i32) {
    %c2_i32 = arith.constant 2 : i32
    %0 = arith.muli %c2_i32, %arg1 : i32
    %c7_i32 = arith.constant 7 : i32
    %1 = arith.subi %c7_i32, %0 : i32
    %2 = arith.muli %arg0, %1 : i32
    %3 = arith.addi %arg1, %2 : i32
    %c0_i32 = arith.constant 0 : i32
    %c0_i32_0 = arith.constant 0 : i32
    %c0_i32_1 = arith.constant 0 : i32
    return %arg0, %3, %c0_i32, %c0_i32_0 : i32, i32, i32, i32
  }
  func.func @transform_1(%arg0: i32, %arg1: i32) -> (i32, i32, i32, i32) {
    %c0_i32 = arith.constant 0 : i32
    %c0_i32_0 = arith.constant 0 : i32
    %c0_i32_1 = arith.constant 0 : i32
    %c0_i32_2 = arith.constant 0 : i32
    return %arg0, %c0_i32, %c0_i32_0, %c0_i32_1 : i32, i32, i32, i32
  }
  func.func @transform_2(%arg0: i32, %arg1: i32) -> (i32, i32, i32, i32) {
    %c2_i32 = arith.constant 2 : i32
    %0 = arith.muli %c2_i32, %arg1 : i32
    %c7_i32 = arith.constant 7 : i32
    %1 = arith.subi %c7_i32, %0 : i32
    %2 = arith.muli %arg0, %1 : i32
    %3 = arith.addi %arg1, %2 : i32
    %c0_i32 = arith.constant 0 : i32
    %c0_i32_0 = arith.constant 0 : i32
    %c0_i32_1 = arith.constant 0 : i32
    return %arg0, %3, %c0_i32, %c0_i32_0 : i32, i32, i32, i32
  }
}

</mosaic_0001>

<llo_original>
// kernel: tpu_custom_call.1
$region0: #{tpu_custom_call.1}
  #allocation0 [shape = 'u32[]', space=smem, size = 0x4, offset = 0x4, fixed_abs, tag = 'smem constant byte address 0x4 - core index']
  #allocation1 [shape = 'u32[72,128]{1,0:T(1,128)}', space=vmem, size = 0x9000, scoped, tag = 'internal scratch']
  #allocation2 [shape = 'f32[2,20,256]{2,1,0:T(8,128)}', space=vmem, size = 0xc000, scoped, tag = 'scratch operand']
  #allocation3 [shape = 'f32[32,256]{1,0:T(8,128)}', space=vmem, size = 0x8000, scoped, tag = 'scratch operand']
  %s0 = inlined_call_operand.hbm [shape: f32[2,8,32,1024], index: 0, kind: input, shape index: {}]
  %s1 = inlined_call_operand.hbm [shape: f32[2,5,256,1024], index: 1, kind: input, shape index: {}]
  %s2 = inlined_call_operand.hbm [shape: f32[2,8,32,256], index: 2, kind: output, shape index: {}]
  %s3 = sld [smem:[#allocation0]]
  $region53: #{tpu_custom_call.1} parent=0
    _
  %s5 = ssub.s32 1, %s3
  %s6 = scalar_select 0, %s5, %s3
  $region1: #{tpu_custom_call.1} parent=0
    #allocation4 [shape = 'u8[262144]{0}', space=vmem, size = 0x40000, scoped, tag = 'input window, operand 0']
    #allocation5 [shape = 's32[2]{0}', space=sflag, size = 0x8, scoped, tag = 'scoped memory for tpu_custom_call.1']
    #allocation6 [shape = 's32[2]{0}', space=sflag, size = 0x8, scoped, tag = 'scoped memory for tpu_custom_call.1']
    #allocation7 [shape = 'u8[10485760]{0}', space=vmem, size = 0xa00000, scoped, tag = 'input window, operand 1']
    #allocation8 [shape = 's32[2]{0}', space=sflag, size = 0x8, scoped, tag = 'scoped memory for tpu_custom_call.1']
    #allocation9 [shape = 'u8[65536]{0}', space=vmem, size = 0x10000, scoped, tag = 'output window, operand 0']
    %7 = vsyncpa [#allocation5], 0
    %s8 = scalar_lea.sflag [#allocation5], 1
    %9 = vsyncpa %s8, 0
    %10 = vsyncpa [#allocation8], 0
    %s11 = scalar_lea.sflag [#allocation8], 1
    %12 = vsyncpa %s11, 0
    %13 = vsyncpa [#allocation6], 0
    %s14 = scalar_lea.sflag [#allocation6], 1
    %15 = vsyncpa %s14, 0
    loop: start=0, step=1, limit=18
    $region2: #{tpu_custom_call.1} parent=1 // loop_pre_header
      _
    $region3: #{tpu_custom_call.1} parent=1 // loop_header
      %s17 = sphi 0, %s21
      %p18 = scmp.ge.s32.totalorder %s17, 18
      %s24 = sphi 0, %s36
      %s25 = sphi 0, %s32
      %s26 = sphi 0, %s24
      %s27 = sphi 0, %s25
      %s28 = sphi 0, %s26
      %s29 = sphi 0, %s27
      %s49 = sphi 0, %s51
      %s52 = sphi 0, %s49
      %s53 = sphi 0, %s52
      %s69 = sphi 0, %s53
      %s75 = sphi 0, %s77
      %s78 = sphi 0, %s75
      %s79 = sphi 0, %s78
      %s95 = sphi 0, %s79
      %s111 = sphi 0, %s113
      %s114 = sphi 0, %s111
      %s115 = sphi 0, %s114
      %s131 = sphi 0, %s115
    $region4: #{tpu_custom_call.1} parent=1 // loop_header_branch
      %20 = sbr.rel (%p18) target = $region8
    $region5: #{tpu_custom_call.1} parent=1 // loop_body
      %s22 = ssub.s32 %s17, 1
      %s23 = ssub.s32 %s17, 2
      %s30 = sadd.s32 1, %s25
      %p31 = scmp.ge.s32.totalorder %s30, 8
      %s32 = scalar_select %p31, 0, %s30
      %s33 = sadd.s32 1, %s24
      %s34 = scalar_select %p31, %s33, %s24
      %p35 = scmp.ge.s32.totalorder %s34, 2
      %s36 = scalar_select %p35, 0, %s34
      %s37 = smul.u32 %s25, 2
      %s38 = ssub.s32 7, %s37
      %s39 = smul.u32 %s24, %s38
      %s40 = sadd.s32 %s25, %s39
      %s41 = smul.u32 %s32, 2
      %s42 = ssub.s32 7, %s41
      %s43 = smul.u32 %s36, %s42
      %s44 = sadd.s32 %s32, %s43
      %s45 = ssub.s32 %s24, %s36
      %s46 = ssub.s32 %s40, %s44
      %s47 = sor.u32 %s45, %s46
      %p48 = scmp.eq.s32.totalorder %s47, 0
      %s50 = sadd.s32 %s49, 1
      %s51 = scalar_select %p48, %s49, %s50
      %p54 = pneg %p48
      %p55 = scmp.eq.s32.totalorder %s17, 15
      %p56 = por %p54, %p55
      %p57 = scmp.ne.s32.totalorder %s49, %s52
      %p58 = scmp.eq.s32.totalorder %s17, 0
      %p59 = por %p57, %p58
      %p60 = scmp.ne.s32.totalorder %s49, %s52
      %p61 = scmp.eq.s32.totalorder %s22, 15
      %p62 = por %p60, %p61
      %p63 = scmp.ne.s32.totalorder %s52, %s53
      %p64 = scmp.eq.s32.totalorder %s22, 0
      %p65 = por %p63, %p64
      %p66 = scmp.ne.s32.totalorder %s52, %s53
      %p67 = scmp.eq.s32.totalorder %s23, 15
      %p68 = por %p66, %p67
      %p70 = scmp.ne.s32.totalorder %s53, %s69
      %p71 = scmp.eq.s32.totalorder %s23, 0
      %p72 = por %p70, %p71
      %s73 = ssub.s32 %s24, %s36
      %p74 = scmp.eq.s32.totalorder %s73, 0
      %s76 = sadd.s32 %s75, 1
      %s77 = scalar_select %p74, %s75, %s76
      %p80 = pneg %p74
      %p81 = scmp.eq.s32.totalorder %s17, 15
      %p82 = por %p80, %p81
      %p83 = scmp.ne.s32.totalorder %s75, %s78
      %p84 = scmp.eq.s32.totalorder %s17, 0
      %p85 = por %p83, %p84
      %p86 = scmp.ne.s32.totalorder %s75, %s78
      %p87 = scmp.eq.s32.totalorder %s22, 15
      %p88 = por %p86, %p87
      %p89 = scmp.ne.s32.totalorder %s78, %s79
      %p90 = scmp.eq.s32.totalorder %s22, 0
      %p91 = por %p89, %p90
      %p92 = scmp.ne.s32.totalorder %s78, %s79
      %p93 = scmp.eq.s32.totalorder %s23, 15
      %p94 = por %p92, %p93
      %p96 = scmp.ne.s32.totalorder %s79, %s95
      %p97 = scmp.eq.s32.totalorder %s23, 0
      %p98 = por %p96, %p97
      %s99 = smul.u32 %s25, 2
      %s100 = ssub.s32 7, %s99
      %s101 = smul.u32 %s24, %s100
      %s102 = sadd.s32 %s25, %s101
      %s103 = smul.u32 %s32, 2
      %s104 = ssub.s32 7, %s103
      %s105 = smul.u32 %s36, %s104
      %s106 = sadd.s32 %s32, %s105
      %s107 = ssub.s32 %s24, %s36
      %s108 = ssub.s32 %s102, %s106
      %s109 = sor.u32 %s107, %s108
      %p110 = scmp.eq.s32.totalorder %s109, 0
      %s112 = sadd.s32 %s111, 1
      %s113 = scalar_select %p110, %s111, %s112
      %p116 = pneg %p110
      %p117 = scmp.eq.s32.totalorder %s17, 15
      %p118 = por %p116, %p117
      %p119 = scmp.ne.s32.totalorder %s111, %s114
      %p120 = scmp.eq.s32.totalorder %s17, 0
      %p121 = por %p119, %p120
      %p122 = scmp.ne.s32.totalorder %s111, %s114
      %p123 = scmp.eq.s32.totalorder %s22, 15
      %p124 = por %p122, %p123
      %p125 = scmp.ne.s32.totalorder %s114, %s115
      %p126 = scmp.eq.s32.totalorder %s22, 0
      %p127 = por %p125, %p126
      %p128 = scmp.ne.s32.totalorder %s114, %s115
      %p129 = scmp.eq.s32.totalorder %s23, 15
      %p130 = por %p128, %p129
      %p132 = scmp.ne.s32.totalorder %s115, %s131
      %p133 = scmp.eq.s32.totalorder %s23, 0
      %p134 = por %p132, %p133
      %p135 = scmp.le.s32.totalorder 1, %s17
      %p136 = scmp.lt.s32.totalorder %s17, 17
      %p137 = pnand %p135, %p136
      %p138 = pneg %p137
      // Predicated region
      $region9: #{tpu_custom_call.1} parent=5 // pred_check
        _
      $region10: #{tpu_custom_call.1} parent=5 // pred_check_branch
        %140 = sbr.rel (%p137) target = $region12
      $region11: #{tpu_custom_call.1} parent=5 // pred_region
        %s141 = ssub.s32 %s17, 1
      $region12: #{tpu_custom_call.1} parent=5 // pred_fallthru
        _
      %p142 = scmp.lt.s32.totalorder %s17, 16
      // Predicated region
      $region13: #{tpu_custom_call.1} parent=5 // pred_check
        %p143 = pneg %p142
      $region14: #{tpu_custom_call.1} parent=5 // pred_check_branch
        %145 = sbr.rel (%p143) target = $region16
      $region15: #{tpu_custom_call.1} parent=5 // pred_region
        // Predicated region
        $region17: #{tpu_custom_call.1} parent=15 // pred_check
          %p146 = pneg %p59
        $region18: #{tpu_custom_call.1} parent=15 // pred_check_branch
          %148 = sbr.rel (%p146) target = $region20
        $region19: #{tpu_custom_call.1} parent=15 // pred_region
          %s149 = sand.u32 %s49, 1
          %s150 = scalar_lea.sflag [#allocation5], %s149
          %s151 = sand.u32 %s49, 1
          %s152 = smul.addr %s151, 256
          %s153 = scalar_lea.vmem [#allocation4], %s152
          %s154 = smul.u32 %s25, 2
          %s155 = ssub.s32 7, %s154
          %s156 = smul.u32 %s24, %s155
          %s157 = sadd.s32 %s25, %s156
          %159 = vsyncadd %s150, 0
          %s160 = smul.addr %s157, 32
          %s161 = smul.addr %s24, 256
          %s162 = sadd.s32 %s160, %s161
          %s163 = smul.addr %s162, 8
          %s164 = scalar_lea.hbm %s0, %s163
          %s165 = sshll.u32 %s164, 4
          %s166 = int_to_ptr.hbm [resolvable:$true] %s165
          %s167 = sshll.u32 %s153, 4
          %s168 = int_to_ptr.vmem [resolvable:$true] %s167
          %173 = dma.hbm_to_vmem [thread:$0]  %s166, 4096, %s168, %s150, 1024, 1024, 64
        $region20: #{tpu_custom_call.1} parent=15 // pred_fallthru
          _
        // Predicated region
        $region21: #{tpu_custom_call.1} parent=15 // pred_check
          %p174 = pneg %p85
        $region22: #{tpu_custom_call.1} parent=15 // pred_check_branch
          %176 = sbr.rel (%p174) target = $region24
        $region23: #{tpu_custom_call.1} parent=15 // pred_region
          %s177 = sand.u32 %s75, 1
          %s178 = scalar_lea.sflag [#allocation8], %s177
          %s179 = sand.u32 %s75, 1
          %s180 = smul.addr %s179, 10240
          %s181 = scalar_lea.vmem [#allocation7], %s180
          %183 = vsyncadd %s178, 0
          %s184 = smul.addr %s24, 1280
          %s185 = smul.addr %s184, 8
          %s186 = scalar_lea.hbm %s1, %s185
          %s187 = sshll.u32 %s186, 4
          %s188 = int_to_ptr.hbm [resolvable:$true] %s187
          %s189 = sshll.u32 %s181, 4
          %s190 = int_to_ptr.vmem [resolvable:$true] %s189
          %195 = dma.hbm_to_vmem [thread:$0]  %s188, 163840, %s190, %s178, 1024, 1024, 64
        $region24: #{tpu_custom_call.1} parent=15 // pred_fallthru
          _
      $region16: #{tpu_custom_call.1} parent=5 // pred_fallthru
        _
      %p196 = scmp.le.s32.totalorder 1, %s17
      %p197 = scmp.lt.s32.totalorder %s17, 17
      %p198 = pnand %p196, %p197
      %p199 = pneg %p198
      // Predicated region
      $region25: #{tpu_custom_call.1} parent=5 // pred_check
        _
      $region26: #{tpu_custom_call.1} parent=5 // pred_check_branch
        %201 = sbr.rel (%p198) target = $region28
      $region27: #{tpu_custom_call.1} parent=5 // pred_region
        %s202 = ssub.s32 %s17, 1
        %s203 = sand.u32 %s52, 1
        %s204 = scalar_lea.sflag [#allocation5], %s203
        %s205 = sand.u32 %s52, 1
        %s206 = smul.addr %s205, 256
        %s207 = scalar_lea.vmem [#allocation4], %s206
        // Predicated region
        $region29: #{tpu_custom_call.1} parent=27 // pred_check
          %p208 = pneg %p65
        $region30: #{tpu_custom_call.1} parent=27 // pred_check_branch
          %210 = sbr.rel (%p208) target = $region32
        $region31: #{tpu_custom_call.1} parent=27 // pred_region
          %212 = dma.done %s204, 4096
        $region32: #{tpu_custom_call.1} parent=27 // pred_fallthru
          _
        %s213 = sand.u32 %s78, 1
        %s214 = scalar_lea.sflag [#allocation8], %s213
        %s215 = sand.u32 %s78, 1
        %s216 = smul.addr %s215, 10240
        %s217 = scalar_lea.vmem [#allocation7], %s216
        // Predicated region
        $region33: #{tpu_custom_call.1} parent=27 // pred_check
          %p218 = pneg %p91
        $region34: #{tpu_custom_call.1} parent=27 // pred_check_branch
          %220 = sbr.rel (%p218) target = $region36
        $region35: #{tpu_custom_call.1} parent=27 // pred_region
          %222 = dma.done %s214, 163840
        $region36: #{tpu_custom_call.1} parent=27 // pred_fallthru
          _
        %s223 = sand.u32 %s52, 1
        %s224 = scalar_lea.sflag [#allocation5], %s223
        %s225 = sand.u32 %s52, 1
        %s226 = smul.addr %s225, 256
        %s227 = scalar_lea.vmem [#allocation4], %s226
        %p228 = pneg %p65
        %p229 = pneg %p62
        %s230 = sand.u32 %s78, 1
        %s231 = scalar_lea.sflag [#allocation8], %s230
        %s232 = sand.u32 %s78, 1
        %s233 = smul.addr %s232, 10240
        %s234 = scalar_lea.vmem [#allocation7], %s233
        %p235 = pneg %p91
        %p236 = pneg %p88
        %p237 = pneg %p127
        %p238 = pneg %p124
        %s239 = sand.u32 %s114, 1
        %s240 = scalar_lea.sflag [#allocation6], %s239
        %s241 = sand.u32 %s114, 1
        %s242 = smul.addr %s241, 64
        %s243 = scalar_lea.vmem [#allocation9], %s242
        %s244 = smul.u32 %s27, 2
        %s245 = ssub.s32 7, %s244
        %s246 = smul.u32 %s26, %s245
        %s247 = sadd.s32 %s27, %s246
        %s248 = smul.u32 %s27, 2
        %s249 = ssub.s32 7, %s248
        %s250 = smul.u32 %s26, %s249
        %s251 = sadd.s32 %s27, %s250
        %p252 = scmp.eq.s32.totalorder %s27, 0
        // Predicated region
        $region37: #{tpu_custom_call.1} parent=27 // pred_check
          %p253 = pneg %p252
        $region38: #{tpu_custom_call.1} parent=27 // pred_check_branch
          %255 = sbr.rel (%p253) target = $region40
        $region39: #{tpu_custom_call.1} parent=27 // pred_region
          %256 = vst [vmem:[#allocation2] sm:$0xff] 0.0
          %257 = vst [vmem:[#allocation2 + $0x8] sm:$0xff] 0.0
          %258 = vst [vmem:[#allocation2 + $0x10] sm:$0xff] 0.0
          %259 = vst [vmem:[#allocation2 + $0x18] sm:$0xff] 0.0
          %260 = vst [vmem:[#allocation2 + $0x20] sm:$0xf] 0.0
          %261 = vst [vmem:[#allocation2 + $0x28] sm:$0xf] 0.0
          %262 = vst [vmem:[#allocation2 + $0x30] sm:$0xff] 0.0
          %263 = vst [vmem:[#allocation2 + $0x38] sm:$0xff] 0.0
          %264 = vst [vmem:[#allocation2 + $0x40] sm:$0xff] 0.0
          %265 = vst [vmem:[#allocation2 + $0x48] sm:$0xff] 0.0
          %266 = vst [vmem:[#allocation2 + $0x50] sm:$0xf] 0.0
          %267 = vst [vmem:[#allocation2 + $0x58] sm:$0xf] 0.0
          %268 = vst [vmem:[#allocation3] sm:$0xff] 0.0
          %269 = vst [vmem:[#allocation3 + $0x8] sm:$0xff] 0.0
          %270 = vst [vmem:[#allocation3 + $0x10] sm:$0xff] 0.0
          %271 = vst [vmem:[#allocation3 + $0x18] sm:$0xff] 0.0
          %272 = vst [vmem:[#allocation3 + $0x20] sm:$0xff] 0.0
          %273 = vst [vmem:[#allocation3 + $0x28] sm:$0xff] 0.0
          %274 = vst [vmem:[#allocation3 + $0x30] sm:$0xff] 0.0
          %275 = vst [vmem:[#allocation3 + $0x38] sm:$0xff] 0.0
        $region40: #{tpu_custom_call.1} parent=27 // pred_fallthru
          _
        %v276 = vld [vmem:[%s207] sm:$0xff]
        %v277 = vld [vmem:[%s207 + $0x8] sm:$0xff]
        %v278 = vld [vmem:[%s207 + $0x10] sm:$0xff]
        %v279 = vld [vmem:[%s207 + $0x18] sm:$0xff]
        %v280 = vld [vmem:[%s207 + $0x20] sm:$0xff]
        %v281 = vld [vmem:[%s207 + $0x28] sm:$0xff]
        %v282 = vld [vmem:[%s207 + $0x30] sm:$0xff]
        %v283 = vld [vmem:[%s207 + $0x38] sm:$0xff]
        %v284 = vld [vmem:[%s207 + $0x40] sm:$0xff]
        %v285 = vld [vmem:[%s207 + $0x48] sm:$0xff]
        %v286 = vld [vmem:[%s207 + $0x50] sm:$0xff]
        %v287 = vld [vmem:[%s207 + $0x58] sm:$0xff]
        %v288 = vld [vmem:[%s207 + $0x60] sm:$0xff]
        %v289 = vld [vmem:[%s207 + $0x68] sm:$0xff]
        %v290 = vld [vmem:[%s207 + $0x70] sm:$0xff]
        %v291 = vld [vmem:[%s207 + $0x78] sm:$0xff]
        %v292 = vld [vmem:[%s207 + $0x80] sm:$0xff]
        %v293 = vld [vmem:[%s207 + $0x88] sm:$0xff]
        %v294 = vld [vmem:[%s207 + $0x90] sm:$0xff]
        %v295 = vld [vmem:[%s207 + $0x98] sm:$0xff]
        %v296 = vld [vmem:[%s207 + $0xa0] sm:$0xff]
        %v297 = vld [vmem:[%s207 + $0xa8] sm:$0xff]
        %v298 = vld [vmem:[%s207 + $0xb0] sm:$0xff]
        %v299 = vld [vmem:[%s207 + $0xb8] sm:$0xff]
        %v300 = vld [vmem:[%s207 + $0xc0] sm:$0xff]
        %v301 = vld [vmem:[%s207 + $0xc8] sm:$0xff]
        %v302 = vld [vmem:[%s207 + $0xd0] sm:$0xff]
        %v303 = vld [vmem:[%s207 + $0xd8] sm:$0xff]
        %v304 = vld [vmem:[%s207 + $0xe0] sm:$0xff]
        %v305 = vld [vmem:[%s207 + $0xe8] sm:$0xff]
        %v306 = vld [vmem:[%s207 + $0xf0] sm:$0xff]
        %v307 = vld [vmem:[%s207 + $0xf8] sm:$0xff]
        %v308 = vld [vmem:[#allocation2] sm:$0xff]
        %v309 = vld [vmem:[#allocation2 + $0x8] sm:$0xff]
        %v310 = vld [vmem:[#allocation2 + $0x10] sm:$0xff]
        %v311 = vld [vmem:[#allocation2 + $0x18] sm:$0xff]
        %v312 = vld [vmem:[#allocation2 + $0x20] sm:$0xf]
        %v313 = vld [vmem:[#allocation2 + $0x28] sm:$0xf]
        %v314 = vld [vmem:[#allocation2 + $0x30] sm:$0xff]
        %v315 = vld [vmem:[#allocation2 + $0x38] sm:$0xff]
        %v316 = vld [vmem:[#allocation2 + $0x40] sm:$0xff]
        %v317 = vld [vmem:[#allocation2 + $0x48] sm:$0xff]
        %v318 = vld [vmem:[#allocation2 + $0x50] sm:$0xf]
        %v319 = vld [vmem:[#allocation2 + $0x58] sm:$0xf]
        %v320 = vld [vmem:[%s217] sm:$0xff]
        %v321 = vld [vmem:[%s217 + $0x8] sm:$0xff]
        %v322 = vld [vmem:[%s217 + $0x10] sm:$0xff]
        %v323 = vld [vmem:[%s217 + $0x18] sm:$0xff]
        %v324 = vld [vmem:[%s217 + $0x20] sm:$0xff]
        %v325 = vld [vmem:[%s217 + $0x28] sm:$0xff]
        %v326 = vld [vmem:[%s217 + $0x30] sm:$0xff]
        %v327 = vld [vmem:[%s217 + $0x38] sm:$0xff]
        %v328 = vld [vmem:[%s217 + $0x40] sm:$0xff]
        %v329 = vld [vmem:[%s217 + $0x48] sm:$0xff]
        %v330 = vld [vmem:[%s217 + $0x50] sm:$0xff]
        %v331 = vld [vmem:[%s217 + $0x58] sm:$0xff]
        %v332 = vld [vmem:[%s217 + $0x60] sm:$0xff]
        %v333 = vld [vmem:[%s217 + $0x68] sm:$0xff]
        %v334 = vld [vmem:[%s217 + $0x70] sm:$0xff]
        %v335 = vld [vmem:[%s217 + $0x78] sm:$0xff]
        %v336 = vld [vmem:[%s217 + $0x80] sm:$0xff]
        %v337 = vld [vmem:[%s217 + $0x88] sm:$0xff]
        %v338 = vld [vmem:[%s217 + $0x90] sm:$0xff]
        %v339 = vld [vmem:[%s217 + $0x98] sm:$0xff]
        %v340 = vld [vmem:[%s217 + $0xa0] sm:$0xff]
        %v341 = vld [vmem:[%s217 + $0xa8] sm:$0xff]
        %v342 = vld [vmem:[%s217 + $0xb0] sm:$0xff]
        %v343 = vld [vmem:[%s217 + $0xb8] sm:$0xff]
        %v344 = vld [vmem:[%s217 + $0xc0] sm:$0xff]
        %v345 = vld [vmem:[%s217 + $0xc8] sm:$0xff]
        %v346 = vld [vmem:[%s217 + $0xd0] sm:$0xff]
        %v347 = vld [vmem:[%s217 + $0xd8] sm:$0xff]
        %v348 = vld [vmem:[%s217 + $0xe0] sm:$0xff]
        %v349 = vld [vmem:[%s217 + $0xe8] sm:$0xff]
        %v350 = vld [vmem:[%s217 + $0xf0] sm:$0xff]
        %v351 = vld [vmem:[%s217 + $0xf8] sm:$0xff]
        %v352 = vld [vmem:[%s217 + $0x100] sm:$0xff]
        %v353 = vld [vmem:[%s217 + $0x108] sm:$0xff]
        %v354 = vld [vmem:[%s217 + $0x110] sm:$0xff]
        %v355 = vld [vmem:[%s217 + $0x118] sm:$0xff]
        %v356 = vld [vmem:[%s217 + $0x120] sm:$0xff]
        %v357 = vld [vmem:[%s217 + $0x128] sm:$0xff]
        %v358 = vld [vmem:[%s217 + $0x130] sm:$0xff]
        %v359 = vld [vmem:[%s217 + $0x138] sm:$0xff]
        %v360 = vld [vmem:[%s217 + $0x140] sm:$0xff]
        %v361 = vld [vmem:[%s217 + $0x148] sm:$0xff]
        %v362 = vld [vmem:[%s217 + $0x150] sm:$0xff]
        %v363 = vld [vmem:[%s217 + $0x158] sm:$0xff]
        %v364 = vld [vmem:[%s217 + $0x160] sm:$0xff]
        %v365 = vld [vmem:[%s217 + $0x168] sm:$0xff]
        %v366 = vld [vmem:[%s217 + $0x170] sm:$0xff]
        %v367 = vld [vmem:[%s217 + $0x178] sm:$0xff]
        %v368 = vld [vmem:[%s217 + $0x180] sm:$0xff]
        %v369 = vld [vmem:[%s217 + $0x188] sm:$0xff]
        %v370 = vld [vmem:[%s217 + $0x190] sm:$0xff]
        %v371 = vld [vmem:[%s217 + $0x198] sm:$0xff]
        %v372 = vld [vmem:[%s217 + $0x1a0] sm:$0xff]
        %v373 = vld [vmem:[%s217 + $0x1a8] sm:$0xff]
        %v374 = vld [vmem:[%s217 + $0x1b0] sm:$0xff]
        %v375 = vld [vmem:[%s217 + $0x1b8] sm:$0xff]
        %v376 = vld [vmem:[%s217 + $0x1c0] sm:$0xff]
        %v377 = vld [vmem:[%s217 + $0x1c8] sm:$0xff]
        %v378 = vld [vmem:[%s217 + $0x1d0] sm:$0xff]
        %v379 = vld [vmem:[%s217 + $0x1d8] sm:$0xff]
        %v380 = vld [vmem:[%s217 + $0x1e0] sm:$0xff]
        %v381 = vld [vmem:[%s217 + $0x1e8] sm:$0xff]
        %v382 = vld [vmem:[%s217 + $0x1f0] sm:$0xff]
        %v383 = vld [vmem:[%s217 + $0x1f8] sm:$0xff]
        %v384 = vld [vmem:[%s217 + $0x200] sm:$0xff]
        %v385 = vld [vmem:[%s217 + $0x208] sm:$0xff]
        %v386 = vld [vmem:[%s217 + $0x210] sm:$0xff]
        %v387 = vld [vmem:[%s217 + $0x218] sm:$0xff]
        %v388 = vld [vmem:[%s217 + $0x220] sm:$0xff]
        %v389 = vld [vmem:[%s217 + $0x228] sm:$0xff]
        %v390 = vld [vmem:[%s217 + $0x230] sm:$0xff]
        %v391 = vld [vmem:[%s217 + $0x238] sm:$0xff]
        %v392 = vld [vmem:[%s217 + $0x240] sm:$0xff]
        %v393 = vld [vmem:[%s217 + $0x248] sm:$0xff]
        %v394 = vld [vmem:[%s217 + $0x250] sm:$0xff]
        %v395 = vld [vmem:[%s217 + $0x258] sm:$0xff]
        %v396 = vld [vmem:[%s217 + $0x260] sm:$0xff]
        %v397 = vld [vmem:[%s217 + $0x268] sm:$0xff]
        %v398 = vld [vmem:[%s217 + $0x270] sm:$0xff]
        %v399 = vld [vmem:[%s217 + $0x278] sm:$0xff]
        %v400 = vld [vmem:[%s217 + $0x280] sm:$0xff]
        %v401 = vld [vmem:[%s217 + $0x288] sm:$0xff]
        %v402 = vld [vmem:[%s217 + $0x290] sm:$0xff]
        %v403 = vld [vmem:[%s217 + $0x298] sm:$0xff]
        %v404 = vld [vmem:[%s217 + $0x2a0] sm:$0xff]
        %v405 = vld [vmem:[%s217 + $0x2a8] sm:$0xff]
        %v406 = vld [vmem:[%s217 + $0x2b0] sm:$0xff]
        %v407 = vld [vmem:[%s217 + $0x2b8] sm:$0xff]
        %v408 = vld [vmem:[%s217 + $0x2c0] sm:$0xff]
        %v409 = vld [vmem:[%s217 + $0x2c8] sm:$0xff]
        %v410 = vld [vmem:[%s217 + $0x2d0] sm:$0xff]
        %v411 = vld [vmem:[%s217 + $0x2d8] sm:$0xff]
        %v412 = vld [vmem:[%s217 + $0x2e0] sm:$0xff]
        %v413 = vld [vmem:[%s217 + $0x2e8] sm:$0xff]
        %v414 = vld [vmem:[%s217 + $0x2f0] sm:$0xff]
        %v415 = vld [vmem:[%s217 + $0x2f8] sm:$0xff]
        %v416 = vld [vmem:[%s217 + $0x300] sm:$0xff]
        %v417 = vld [vmem:[%s217 + $0x308] sm:$0xff]
        %v418 = vld [vmem:[%s217 + $0x310] sm:$0xff]
        %v419 = vld [vmem:[%s217 + $0x318] sm:$0xff]
        %v420 = vld [vmem:[%s217 + $0x320] sm:$0xff]
        %v421 = vld [vmem:[%s217 + $0x328] sm:$0xff]
        %v422 = vld [vmem:[%s217 + $0x330] sm:$0xff]
        %v423 = vld [vmem:[%s217 + $0x338] sm:$0xff]
        %v424 = vld [vmem:[%s217 + $0x340] sm:$0xff]
        %v425 = vld [vmem:[%s217 + $0x348] sm:$0xff]
        %v426 = vld [vmem:[%s217 + $0x350] sm:$0xff]
        %v427 = vld [vmem:[%s217 + $0x358] sm:$0xff]
        %v428 = vld [vmem:[%s217 + $0x360] sm:$0xff]
        %v429 = vld [vmem:[%s217 + $0x368] sm:$0xff]
        %v430 = vld [vmem:[%s217 + $0x370] sm:$0xff]
        %v431 = vld [vmem:[%s217 + $0x378] sm:$0xff]
        %v432 = vld [vmem:[%s217 + $0x380] sm:$0xff]
        %v433 = vld [vmem:[%s217 + $0x388] sm:$0xff]
        %v434 = vld [vmem:[%s217 + $0x390] sm:$0xff]
        %v435 = vld [vmem:[%s217 + $0x398] sm:$0xff]
        %v436 = vld [vmem:[%s217 + $0x3a0] sm:$0xff]
        %v437 = vld [vmem:[%s217 + $0x3a8] sm:$0xff]
        %v438 = vld [vmem:[%s217 + $0x3b0] sm:$0xff]
        %v439 = vld [vmem:[%s217 + $0x3b8] sm:$0xff]
        %v440 = vld [vmem:[%s217 + $0x3c0] sm:$0xff]
        %v441 = vld [vmem:[%s217 + $0x3c8] sm:$0xff]
        %v442 = vld [vmem:[%s217 + $0x3d0] sm:$0xff]
        %v443 = vld [vmem:[%s217 + $0x3d8] sm:$0xff]
        %v444 = vld [vmem:[%s217 + $0x3e0] sm:$0xff]
        %v445 = vld [vmem:[%s217 + $0x3e8] sm:$0xff]
        %v446 = vld [vmem:[%s217 + $0x3f0] sm:$0xff]
        %v447 = vld [vmem:[%s217 + $0x3f8] sm:$0xff]
        %v448 = vld [vmem:[%s217 + $0x400] sm:$0xff]
        %v449 = vld [vmem:[%s217 + $0x408] sm:$0xff]
        %v450 = vld [vmem:[%s217 + $0x410] sm:$0xff]
        %v451 = vld [vmem:[%s217 + $0x418] sm:$0xff]
        %v452 = vld [vmem:[%s217 + $0x420] sm:$0xff]
        %v453 = vld [vmem:[%s217 + $0x428] sm:$0xff]
        %v454 = vld [vmem:[%s217 + $0x430] sm:$0xff]
        %v455 = vld [vmem:[%s217 + $0x438] sm:$0xff]
        %v456 = vld [vmem:[%s217 + $0x440] sm:$0xff]
        %v457 = vld [vmem:[%s217 + $0x448] sm:$0xff]
        %v458 = vld [vmem:[%s217 + $0x450] sm:$0xff]
        %v459 = vld [vmem:[%s217 + $0x458] sm:$0xff]
        %v460 = vld [vmem:[%s217 + $0x460] sm:$0xff]
        %v461 = vld [vmem:[%s217 + $0x468] sm:$0xff]
        %v462 = vld [vmem:[%s217 + $0x470] sm:$0xff]
        %v463 = vld [vmem:[%s217 + $0x478] sm:$0xff]
        %v464 = vld [vmem:[%s217 + $0x480] sm:$0xff]
        %v465 = vld [vmem:[%s217 + $0x488] sm:$0xff]
        %v466 = vld [vmem:[%s217 + $0x490] sm:$0xff]
        %v467 = vld [vmem:[%s217 + $0x498] sm:$0xff]
        %v468 = vld [vmem:[%s217 + $0x4a0] sm:$0xff]
        %v469 = vld [vmem:[%s217 + $0x4a8] sm:$0xff]
        %v470 = vld [vmem:[%s217 + $0x4b0] sm:$0xff]
        %v471 = vld [vmem:[%s217 + $0x4b8] sm:$0xff]
        %v472 = vld [vmem:[%s217 + $0x4c0] sm:$0xff]
        %v473 = vld [vmem:[%s217 + $0x4c8] sm:$0xff]
        %v474 = vld [vmem:[%s217 + $0x4d0] sm:$0xff]
        %v475 = vld [vmem:[%s217 + $0x4d8] sm:$0xff]
        %v476 = vld [vmem:[%s217 + $0x4e0] sm:$0xff]
        %v477 = vld [vmem:[%s217 + $0x4e8] sm:$0xff]
        %v478 = vld [vmem:[%s217 + $0x4f0] sm:$0xff]
        %v479 = vld [vmem:[%s217 + $0x4f8] sm:$0xff]
        %v480 = vld [vmem:[%s217 + $0x500] sm:$0xff]
        %v481 = vld [vmem:[%s217 + $0x508] sm:$0xff]
        %v482 = vld [vmem:[%s217 + $0x510] sm:$0xff]
        %v483 = vld [vmem:[%s217 + $0x518] sm:$0xff]
        %v484 = vld [vmem:[%s217 + $0x520] sm:$0xff]
        %v485 = vld [vmem:[%s217 + $0x528] sm:$0xff]
        %v486 = vld [vmem:[%s217 + $0x530] sm:$0xff]
        %v487 = vld [vmem:[%s217 + $0x538] sm:$0xff]
        %v488 = vld [vmem:[%s217 + $0x540] sm:$0xff]
        %v489 = vld [vmem:[%s217 + $0x548] sm:$0xff]
        %v490 = vld [vmem:[%s217 + $0x550] sm:$0xff]
        %v491 = vld [vmem:[%s217 + $0x558] sm:$0xff]
        %v492 = vld [vmem:[%s217 + $0x560] sm:$0xff]
        %v493 = vld [vmem:[%s217 + $0x568] sm:$0xff]
        %v494 = vld [vmem:[%s217 + $0x570] sm:$0xff]
        %v495 = vld [vmem:[%s217 + $0x578] sm:$0xff]
        %v496 = vld [vmem:[%s217 + $0x580] sm:$0xff]
        %v497 = vld [vmem:[%s217 + $0x588] sm:$0xff]
        %v498 = vld [vmem:[%s217 + $0x590] sm:$0xff]
        %v499 = vld [vmem:[%s217 + $0x598] sm:$0xff]
        %v500 = vld [vmem:[%s217 + $0x5a0] sm:$0xff]
        %v501 = vld [vmem:[%s217 + $0x5a8] sm:$0xff]
        %v502 = vld [vmem:[%s217 + $0x5b0] sm:$0xff]
        %v503 = vld [vmem:[%s217 + $0x5b8] sm:$0xff]
        %v504 = vld [vmem:[%s217 + $0x5c0] sm:$0xff]
        %v505 = vld [vmem:[%s217 + $0x5c8] sm:$0xff]
        %v506 = vld [vmem:[%s217 + $0x5d0] sm:$0xff]
        %v507 = vld [vmem:[%s217 + $0x5d8] sm:$0xff]
        %v508 = vld [vmem:[%s217 + $0x5e0] sm:$0xff]
        %v509 = vld [vmem:[%s217 + $0x5e8] sm:$0xff]
        %v510 = vld [vmem:[%s217 + $0x5f0] sm:$0xff]
        %v511 = vld [vmem:[%s217 + $0x5f8] sm:$0xff]
        %v512 = vld [vmem:[%s217 + $0x600] sm:$0xff]
        %v513 = vld [vmem:[%s217 + $0x608] sm:$0xff]
        %v514 = vld [vmem:[%s217 + $0x610] sm:$0xff]
        %v515 = vld [vmem:[%s217 + $0x618] sm:$0xff]
        %v516 = vld [vmem:[%s217 + $0x620] sm:$0xff]
        %v517 = vld [vmem:[%s217 + $0x628] sm:$0xff]
        %v518 = vld [vmem:[%s217 + $0x630] sm:$0xff]
        %v519 = vld [vmem:[%s217 + $0x638] sm:$0xff]
        %v520 = vld [vmem:[%s217 + $0x640] sm:$0xff]
        %v521 = vld [vmem:[%s217 + $0x648] sm:$0xff]
        %v522 = vld [vmem:[%s217 + $0x650] sm:$0xff]
        %v523 = vld [vmem:[%s217 + $0x658] sm:$0xff]
        %v524 = vld [vmem:[%s217 + $0x660] sm:$0xff]
        %v525 = vld [vmem:[%s217 + $0x668] sm:$0xff]
        %v526 = vld [vmem:[%s217 + $0x670] sm:$0xff]
        %v527 = vld [vmem:[%s217 + $0x678] sm:$0xff]
        %v528 = vld [vmem:[%s217 + $0x680] sm:$0xff]
        %v529 = vld [vmem:[%s217 + $0x688] sm:$0xff]
        %v530 = vld [vmem:[%s217 + $0x690] sm:$0xff]
        %v531 = vld [vmem:[%s217 + $0x698] sm:$0xff]
        %v532 = vld [vmem:[%s217 + $0x6a0] sm:$0xff]
        %v533 = vld [vmem:[%s217 + $0x6a8] sm:$0xff]
        %v534 = vld [vmem:[%s217 + $0x6b0] sm:$0xff]
        %v535 = vld [vmem:[%s217 + $0x6b8] sm:$0xff]
        %v536 = vld [vmem:[%s217 + $0x6c0] sm:$0xff]
        %v537 = vld [vmem:[%s217 + $0x6c8] sm:$0xff]
        %v538 = vld [vmem:[%s217 + $0x6d0] sm:$0xff]
        %v539 = vld [vmem:[%s217 + $0x6d8] sm:$0xff]
        %v540 = vld [vmem:[%s217 + $0x6e0] sm:$0xff]
        %v541 = vld [vmem:[%s217 + $0x6e8] sm:$0xff]
        %v542 = vld [vmem:[%s217 + $0x6f0] sm:$0xff]
        %v543 = vld [vmem:[%s217 + $0x6f8] sm:$0xff]
        %v544 = vld [vmem:[%s217 + $0x700] sm:$0xff]
        %v545 = vld [vmem:[%s217 + $0x708] sm:$0xff]
        %v546 = vld [vmem:[%s217 + $0x710] sm:$0xff]
        %v547 = vld [vmem:[%s217 + $0x718] sm:$0xff]
        %v548 = vld [vmem:[%s217 + $0x720] sm:$0xff]
        %v549 = vld [vmem:[%s217 + $0x728] sm:$0xff]
        %v550 = vld [vmem:[%s217 + $0x730] sm:$0xff]
        %v551 = vld [vmem:[%s217 + $0x738] sm:$0xff]
        %v552 = vld [vmem:[%s217 + $0x740] sm:$0xff]
        %v553 = vld [vmem:[%s217 + $0x748] sm:$0xff]
        %v554 = vld [vmem:[%s217 + $0x750] sm:$0xff]
        %v555 = vld [vmem:[%s217 + $0x758] sm:$0xff]
        %v556 = vld [vmem:[%s217 + $0x760] sm:$0xff]
        %v557 = vld [vmem:[%s217 + $0x768] sm:$0xff]
        %v558 = vld [vmem:[%s217 + $0x770] sm:$0xff]
        %v559 = vld [vmem:[%s217 + $0x778] sm:$0xff]
        %v560 = vld [vmem:[%s217 + $0x780] sm:$0xff]
        %v561 = vld [vmem:[%s217 + $0x788] sm:$0xff]
        %v562 = vld [vmem:[%s217 + $0x790] sm:$0xff]
        %v563 = vld [vmem:[%s217 + $0x798] sm:$0xff]
        %v564 = vld [vmem:[%s217 + $0x7a0] sm:$0xff]
        %v565 = vld [vmem:[%s217 + $0x7a8] sm:$0xff]
        %v566 = vld [vmem:[%s217 + $0x7b0] sm:$0xff]
        %v567 = vld [vmem:[%s217 + $0x7b8] sm:$0xff]
        %v568 = vld [vmem:[%s217 + $0x7c0] sm:$0xff]
        %v569 = vld [vmem:[%s217 + $0x7c8] sm:$0xff]
        %v570 = vld [vmem:[%s217 + $0x7d0] sm:$0xff]
        %v571 = vld [vmem:[%s217 + $0x7d8] sm:$0xff]
        %v572 = vld [vmem:[%s217 + $0x7e0] sm:$0xff]
        %v573 = vld [vmem:[%s217 + $0x7e8] sm:$0xff]
        %v574 = vld [vmem:[%s217 + $0x7f0] sm:$0xff]
        %v575 = vld [vmem:[%s217 + $0x7f8] sm:$0xff]
        %576 = vmatpush.msra.mxu0 %v440
        %577 = vmatpush.msra.mxu0 %v432
        %578 = vmatpush.msra.mxu0 %v424
        %579 = vmatpush.msra.mxu0 %v416
        %580 = vmatpush.msra.mxu0 %v408
        %581 = vmatpush.msra.mxu0 %v400
        %582 = vmatpush.msra.mxu0 %v392
        %583 = vmatpush.msra.mxu0 %v384
        %584 = vmatpush.msra.mxu0 %v376
        %585 = vmatpush.msra.mxu0 %v368
        %586 = vmatpush.msra.mxu0 %v360
        %587 = vmatpush.msra.mxu0 %v352
        %588 = vmatpush.msra.mxu0 %v344
        %589 = vmatpush.msra.mxu0 %v336
        %590 = vmatpush.msra.mxu0 %v328
        %591 = vmatpush.msra.mxu0 %v320
        %592 = vmatmul.f32.gmra.mxu0 %v308
        %v593 = vpop.f32.mrf.mxu0
        %v594 = vadd.f32 0.0, %v593
        %595 = vmatmul.f32.gmra.mxu0 %v310
        %v596 = vpop.f32.mrf.mxu0
        %v597 = vadd.f32 0.0, %v596
        %598 = vmatmul.f32.gmra.mxu0 %v314
        %v599 = vpop.f32.mrf.mxu0
        %v600 = vadd.f32 0.0, %v599
        %601 = vmatmul.f32.gmra.mxu0 %v316
        %v602 = vpop.f32.mrf.mxu0
        %v603 = vadd.f32 0.0, %v602
        %604 = vdwg.mxu0
        %605 = vmatpush.msra.mxu0 %v568
        %606 = vmatpush.msra.mxu0 %v560
        %607 = vmatpush.msra.mxu0 %v552
        %608 = vmatpush.msra.mxu0 %v544
        %609 = vmatpush.msra.mxu0 %v536
        %610 = vmatpush.msra.mxu0 %v528
        %611 = vmatpush.msra.mxu0 %v520
        %612 = vmatpush.msra.mxu0 %v512
        %613 = vmatpush.msra.mxu0 %v504
        %614 = vmatpush.msra.mxu0 %v496
        %615 = vmatpush.msra.mxu0 %v488
        %616 = vmatpush.msra.mxu0 %v480
        %617 = vmatpush.msra.mxu0 %v472
        %618 = vmatpush.msra.mxu0 %v464
        %619 = vmatpush.msra.mxu0 %v456
        %620 = vmatpush.msra.mxu0 %v448
        %621 = vmatmul.f32.gmra.mxu0 %v309
        %v622 = vpop.f32.mrf.mxu0
        %v623 = vadd.f32 %v594, %v622
        %624 = vmatmul.f32.gmra.mxu0 %v311
        %v625 = vpop.f32.mrf.mxu0
        %v626 = vadd.f32 %v597, %v625
        %627 = vmatmul.f32.gmra.mxu0 %v315
        %v628 = vpop.f32.mrf.mxu0
        %v629 = vadd.f32 %v600, %v628
        %630 = vmatmul.f32.gmra.mxu0 %v317
        %v631 = vpop.f32.mrf.mxu0
        %v632 = vadd.f32 %v603, %v631
        %633 = vdwg.mxu0
        %634 = vmatpush.msra.mxu0 %v441
        %635 = vmatpush.msra.mxu0 %v433
        %636 = vmatpush.msra.mxu0 %v425
        %637 = vmatpush.msra.mxu0 %v417
        %638 = vmatpush.msra.mxu0 %v409
        %639 = vmatpush.msra.mxu0 %v401
        %640 = vmatpush.msra.mxu0 %v393
        %641 = vmatpush.msra.mxu0 %v385
        %642 = vmatpush.msra.mxu0 %v377
        %643 = vmatpush.msra.mxu0 %v369
        %644 = vmatpush.msra.mxu0 %v361
        %645 = vmatpush.msra.mxu0 %v353
        %646 = vmatpush.msra.mxu0 %v345
        %647 = vmatpush.msra.mxu0 %v337
        %648 = vmatpush.msra.mxu0 %v329
        %649 = vmatpush.msra.mxu0 %v321
        %650 = vmatmul.f32.gmra.mxu0 %v308
        %v651 = vpop.f32.mrf.mxu0
        %v652 = vadd.f32 0.0, %v651
        %653 = vmatmul.f32.gmra.mxu0 %v310
        %v654 = vpop.f32.mrf.mxu0
        %v655 = vadd.f32 0.0, %v654
        %656 = vmatmul.f32.gmra.mxu0 %v314
        %v657 = vpop.f32.mrf.mxu0
        %v658 = vadd.f32 0.0, %v657
        %659 = vmatmul.f32.gmra.mxu0 %v316
        %v660 = vpop.f32.mrf.mxu0
        %v661 = vadd.f32 0.0, %v660
        %662 = vdwg.mxu0
        %663 = vmatpush.msra.mxu0 %v569
        %664 = vmatpush.msra.mxu0 %v561
        %665 = vmatpush.msra.mxu0 %v553
        %666 = vmatpush.msra.mxu0 %v545
        %667 = vmatpush.msra.mxu0 %v537
        %668 = vmatpush.msra.mxu0 %v529
        %669 = vmatpush.msra.mxu0 %v521
        %670 = vmatpush.msra.mxu0 %v513
        %671 = vmatpush.msra.mxu0 %v505
        %672 = vmatpush.msra.mxu0 %v497
        %673 = vmatpush.msra.mxu0 %v489
        %674 = vmatpush.msra.mxu0 %v481
        %675 = vmatpush.msra.mxu0 %v473
        %676 = vmatpush.msra.mxu0 %v465
        %677 = vmatpush.msra.mxu0 %v457
        %678 = vmatpush.msra.mxu0 %v449
        %679 = vmatmul.f32.gmra.mxu0 %v309
        %v680 = vpop.f32.mrf.mxu0
        %v681 = vadd.f32 %v652, %v680
        %682 = vmatmul.f32.gmra.mxu0 %v311
        %v683 = vpop.f32.mrf.mxu0
        %v684 = vadd.f32 %v655, %v683
        %685 = vmatmul.f32.gmra.mxu0 %v315
        %v686 = vpop.f32.mrf.mxu0
        %v687 = vadd.f32 %v658, %v686
        %688 = vmatmul.f32.gmra.mxu0 %v317
        %v689 = vpop.f32.mrf.mxu0
        %v690 = vadd.f32 %v661, %v689
        %691 = vdwg.mxu0
        %692 = vmatpush.msra.mxu0 %v442
        %693 = vmatpush.msra.mxu0 %v434
        %694 = vmatpush.msra.mxu0 %v426
        %695 = vmatpush.msra.mxu0 %v418
        %696 = vmatpush.msra.mxu0 %v410
        %697 = vmatpush.msra.mxu0 %v402
        %698 = vmatpush.msra.mxu0 %v394
        %699 = vmatpush.msra.mxu0 %v386
        %700 = vmatpush.msra.mxu0 %v378
        %701 = vmatpush.msra.mxu0 %v370
        %702 = vmatpush.msra.mxu0 %v362
        %703 = vmatpush.msra.mxu0 %v354
        %704 = vmatpush.msra.mxu0 %v346
        %705 = vmatpush.msra.mxu0 %v338
        %706 = vmatpush.msra.mxu0 %v330
        %707 = vmatpush.msra.mxu0 %v322
        %708 = vmatmul.f32.gmra.mxu0 %v308
        %v709 = vpop.f32.mrf.mxu0
        %v710 = vadd.f32 0.0, %v709
        %711 = vmatmul.f32.gmra.mxu0 %v310
        %v712 = vpop.f32.mrf.mxu0
        %v713 = vadd.f32 0.0, %v712
        %714 = vmatmul.f32.gmra.mxu0 %v314
        %v715 = vpop.f32.mrf.mxu0
        %v716 = vadd.f32 0.0, %v715
        %717 = vmatmul.f32.gmra.mxu0 %v316
        %v718 = vpop.f32.mrf.mxu0
        %v719 = vadd.f32 0.0, %v718
        %720 = vdwg.mxu0
        %721 = vmatpush.msra.mxu0 %v570
        %722 = vmatpush.msra.mxu0 %v562
        %723 = vmatpush.msra.mxu0 %v554
        %724 = vmatpush.msra.mxu0 %v546
        %725 = vmatpush.msra.mxu0 %v538
        %726 = vmatpush.msra.mxu0 %v530
        %727 = vmatpush.msra.mxu0 %v522
        %728 = vmatpush.msra.mxu0 %v514
        %729 = vmatpush.msra.mxu0 %v506
        %730 = vmatpush.msra.mxu0 %v498
        %731 = vmatpush.msra.mxu0 %v490
        %732 = vmatpush.msra.mxu0 %v482
        %733 = vmatpush.msra.mxu0 %v474
        %734 = vmatpush.msra.mxu0 %v466
        %735 = vmatpush.msra.mxu0 %v458
        %736 = vmatpush.msra.mxu0 %v450
        %737 = vmatmul.f32.gmra.mxu0 %v309
        %v738 = vpop.f32.mrf.mxu0
        %v739 = vadd.f32 %v710, %v738
        %740 = vmatmul.f32.gmra.mxu0 %v311
        %v741 = vpop.f32.mrf.mxu0
        %v742 = vadd.f32 %v713, %v741
        %743 = vmatmul.f32.gmra.mxu0 %v315
        %v744 = vpop.f32.mrf.mxu0
        %v745 = vadd.f32 %v716, %v744
        %746 = vmatmul.f32.gmra.mxu0 %v317
        %v747 = vpop.f32.mrf.mxu0
        %v748 = vadd.f32 %v719, %v747
        %749 = vdwg.mxu0
        %750 = vmatpush.msra.mxu0 %v443
        %751 = vmatpush.msra.mxu0 %v435
        %752 = vmatpush.msra.mxu0 %v427
        %753 = vmatpush.msra.mxu0 %v419
        %754 = vmatpush.msra.mxu0 %v411
        %755 = vmatpush.msra.mxu0 %v403
        %756 = vmatpush.msra.mxu0 %v395
        %757 = vmatpush.msra.mxu0 %v387
        %758 = vmatpush.msra.mxu0 %v379
        %759 = vmatpush.msra.mxu0 %v371
        %760 = vmatpush.msra.mxu0 %v363
        %761 = vmatpush.msra.mxu0 %v355
        %762 = vmatpush.msra.mxu0 %v347
        %763 = vmatpush.msra.mxu0 %v339
        %764 = vmatpush.msra.mxu0 %v331
        %765 = vmatpush.msra.mxu0 %v323
        %766 = vmatmul.f32.gmra.mxu0 %v308
        %v767 = vpop.f32.mrf.mxu0
        %v768 = vadd.f32 0.0, %v767
        %769 = vmatmul.f32.gmra.mxu0 %v310
        %v770 = vpop.f32.mrf.mxu0
        %v771 = vadd.f32 0.0, %v770
        %772 = vmatmul.f32.gmra.mxu0 %v314
        %v773 = vpop.f32.mrf.mxu0
        %v774 = vadd.f32 0.0, %v773
        %775 = vmatmul.f32.gmra.mxu0 %v316
        %v776 = vpop.f32.mrf.mxu0
        %v777 = vadd.f32 0.0, %v776
        %778 = vdwg.mxu0
        %779 = vmatpush.msra.mxu0 %v571
        %780 = vmatpush.msra.mxu0 %v563
        %781 = vmatpush.msra.mxu0 %v555
        %782 = vmatpush.msra.mxu0 %v547
        %783 = vmatpush.msra.mxu0 %v539
        %784 = vmatpush.msra.mxu0 %v531
        %785 = vmatpush.msra.mxu0 %v523
        %786 = vmatpush.msra.mxu0 %v515
        %787 = vmatpush.msra.mxu0 %v507
        %788 = vmatpush.msra.mxu0 %v499
        %789 = vmatpush.msra.mxu0 %v491
        %790 = vmatpush.msra.mxu0 %v483
        %791 = vmatpush.msra.mxu0 %v475
        %792 = vmatpush.msra.mxu0 %v467
        %793 = vmatpush.msra.mxu0 %v459
        %794 = vmatpush.msra.mxu0 %v451
        %795 = vmatmul.f32.gmra.mxu0 %v309
        %v796 = vpop.f32.mrf.mxu0
        %v797 = vadd.f32 %v768, %v796
        %798 = vmatmul.f32.gmra.mxu0 %v311
        %v799 = vpop.f32.mrf.mxu0
        %v800 = vadd.f32 %v771, %v799
        %801 = vmatmul.f32.gmra.mxu0 %v315
        %v802 = vpop.f32.mrf.mxu0
        %v803 = vadd.f32 %v774, %v802
        %804 = vmatmul.f32.gmra.mxu0 %v317
        %v805 = vpop.f32.mrf.mxu0
        %v806 = vadd.f32 %v777, %v805
        %807 = vdwg.mxu0
        %808 = vmatpush.msra.mxu0 %v444
        %809 = vmatpush.msra.mxu0 %v436
        %810 = vmatpush.msra.mxu0 %v428
        %811 = vmatpush.msra.mxu0 %v420
        %812 = vmatpush.msra.mxu0 %v412
        %813 = vmatpush.msra.mxu0 %v404
        %814 = vmatpush.msra.mxu0 %v396
        %815 = vmatpush.msra.mxu0 %v388
        %816 = vmatpush.msra.mxu0 %v380
        %817 = vmatpush.msra.mxu0 %v372
        %818 = vmatpush.msra.mxu0 %v364
        %819 = vmatpush.msra.mxu0 %v356
        %820 = vmatpush.msra.mxu0 %v348
        %821 = vmatpush.msra.mxu0 %v340
        %822 = vmatpush.msra.mxu0 %v332
        %823 = vmatpush.msra.mxu0 %v324
        %824 = vmatmul.f32.gmra.mxu0 %v308
        %v825 = vpop.f32.mrf.mxu0
        %v826 = vadd.f32 0.0, %v825
        %827 = vmatmul.f32.gmra.mxu0 %v310
        %v828 = vpop.f32.mrf.mxu0
        %v829 = vadd.f32 0.0, %v828
        %830 = vmatmul.f32.gmra.mxu0 %v314
        %v831 = vpop.f32.mrf.mxu0
        %v832 = vadd.f32 0.0, %v831
        %833 = vmatmul.f32.gmra.mxu0 %v316
        %v834 = vpop.f32.mrf.mxu0
        %v835 = vadd.f32 0.0, %v834
        %836 = vdwg.mxu0
        %837 = vmatpush.msra.mxu0 %v572
        %838 = vmatpush.msra.mxu0 %v564
        %839 = vmatpush.msra.mxu0 %v556
        %840 = vmatpush.msra.mxu0 %v548
        %841 = vmatpush.msra.mxu0 %v540
        %842 = vmatpush.msra.mxu0 %v532
        %843 = vmatpush.msra.mxu0 %v524
        %844 = vmatpush.msra.mxu0 %v516
        %845 = vmatpush.msra.mxu0 %v508
        %846 = vmatpush.msra.mxu0 %v500
        %847 = vmatpush.msra.mxu0 %v492
        %848 = vmatpush.msra.mxu0 %v484
        %849 = vmatpush.msra.mxu0 %v476
        %850 = vmatpush.msra.mxu0 %v468
        %851 = vmatpush.msra.mxu0 %v460
        %852 = vmatpush.msra.mxu0 %v452
        %853 = vmatmul.f32.gmra.mxu0 %v309
        %v854 = vpop.f32.mrf.mxu0
        %v855 = vadd.f32 %v826, %v854
        %856 = vmatmul.f32.gmra.mxu0 %v311
        %v857 = vpop.f32.mrf.mxu0
        %v858 = vadd.f32 %v829, %v857
        %859 = vmatmul.f32.gmra.mxu0 %v315
        %v860 = vpop.f32.mrf.mxu0
        %v861 = vadd.f32 %v832, %v860
        %862 = vmatmul.f32.gmra.mxu0 %v317
        %v863 = vpop.f32.mrf.mxu0
        %v864 = vadd.f32 %v835, %v863
        %865 = vdwg.mxu0
        %866 = vmatpush.msra.mxu0 %v445
        %867 = vmatpush.msra.mxu0 %v437
        %868 = vmatpush.msra.mxu0 %v429
        %869 = vmatpush.msra.mxu0 %v421
        %870 = vmatpush.msra.mxu0 %v413
        %871 = vmatpush.msra.mxu0 %v405
        %872 = vmatpush.msra.mxu0 %v397
        %873 = vmatpush.msra.mxu0 %v389
        %874 = vmatpush.msra.mxu0 %v381
        %875 = vmatpush.msra.mxu0 %v373
        %876 = vmatpush.msra.mxu0 %v365
        %877 = vmatpush.msra.mxu0 %v357
        %878 = vmatpush.msra.mxu0 %v349
        %879 = vmatpush.msra.mxu0 %v341
        %880 = vmatpush.msra.mxu0 %v333
        %881 = vmatpush.msra.mxu0 %v325
        %882 = vmatmul.f32.gmra.mxu0 %v308
        %v883 = vpop.f32.mrf.mxu0
        %v884 = vadd.f32 0.0, %v883
        %885 = vmatmul.f32.gmra.mxu0 %v310
        %v886 = vpop.f32.mrf.mxu0
        %v887 = vadd.f32 0.0, %v886
        %888 = vmatmul.f32.gmra.mxu0 %v314
        %v889 = vpop.f32.mrf.mxu0
        %v890 = vadd.f32 0.0, %v889
        %891 = vmatmul.f32.gmra.mxu0 %v316
        %v892 = vpop.f32.mrf.mxu0
        %v893 = vadd.f32 0.0, %v892
        %894 = vdwg.mxu0
        %895 = vmatpush.msra.mxu0 %v573
        %896 = vmatpush.msra.mxu0 %v565
        %897 = vmatpush.msra.mxu0 %v557
        %898 = vmatpush.msra.mxu0 %v549
        %899 = vmatpush.msra.mxu0 %v541
        %900 = vmatpush.msra.mxu0 %v533
        %901 = vmatpush.msra.mxu0 %v525
        %902 = vmatpush.msra.mxu0 %v517
        %903 = vmatpush.msra.mxu0 %v509
        %904 = vmatpush.msra.mxu0 %v501
        %905 = vmatpush.msra.mxu0 %v493
        %906 = vmatpush.msra.mxu0 %v485
        %907 = vmatpush.msra.mxu0 %v477
        %908 = vmatpush.msra.mxu0 %v469
        %909 = vmatpush.msra.mxu0 %v461
        %910 = vmatpush.msra.mxu0 %v453
        %911 = vmatmul.f32.gmra.mxu0 %v309
        %v912 = vpop.f32.mrf.mxu0
        %v913 = vadd.f32 %v884, %v912
        %914 = vmatmul.f32.gmra.mxu0 %v311
        %v915 = vpop.f32.mrf.mxu0
        %v916 = vadd.f32 %v887, %v915
        %917 = vmatmul.f32.gmra.mxu0 %v315
        %v918 = vpop.f32.mrf.mxu0
        %v919 = vadd.f32 %v890, %v918
        %920 = vmatmul.f32.gmra.mxu0 %v317
        %v921 = vpop.f32.mrf.mxu0
        %v922 = vadd.f32 %v893, %v921
        %923 = vdwg.mxu0
        %924 = vmatpush.msra.mxu0 %v446
        %925 = vmatpush.msra.mxu0 %v438
        %926 = vmatpush.msra.mxu0 %v430
        %927 = vmatpush.msra.mxu0 %v422
        %928 = vmatpush.msra.mxu0 %v414
        %929 = vmatpush.msra.mxu0 %v406
        %930 = vmatpush.msra.mxu0 %v398
        %931 = vmatpush.msra.mxu0 %v390
        %932 = vmatpush.msra.mxu0 %v382
        %933 = vmatpush.msra.mxu0 %v374
        %934 = vmatpush.msra.mxu0 %v366
        %935 = vmatpush.msra.mxu0 %v358
        %936 = vmatpush.msra.mxu0 %v350
        %937 = vmatpush.msra.mxu0 %v342
        %938 = vmatpush.msra.mxu0 %v334
        %939 = vmatpush.msra.mxu0 %v326
        %940 = vmatmul.f32.gmra.mxu0 %v308
        %v941 = vpop.f32.mrf.mxu0
        %v942 = vadd.f32 0.0, %v941
        %943 = vmatmul.f32.gmra.mxu0 %v310
        %v944 = vpop.f32.mrf.mxu0
        %v945 = vadd.f32 0.0, %v944
        %946 = vmatmul.f32.gmra.mxu0 %v314
        %v947 = vpop.f32.mrf.mxu0
        %v948 = vadd.f32 0.0, %v947
        %949 = vmatmul.f32.gmra.mxu0 %v316
        %v950 = vpop.f32.mrf.mxu0
        %v951 = vadd.f32 0.0, %v950
        %952 = vdwg.mxu0
        %953 = vmatpush.msra.mxu0 %v574
        %954 = vmatpush.msra.mxu0 %v566
        %955 = vmatpush.msra.mxu0 %v558
        %956 = vmatpush.msra.mxu0 %v550
        %957 = vmatpush.msra.mxu0 %v542
        %958 = vmatpush.msra.mxu0 %v534
        %959 = vmatpush.msra.mxu0 %v526
        %960 = vmatpush.msra.mxu0 %v518
        %961 = vmatpush.msra.mxu0 %v510
        %962 = vmatpush.msra.mxu0 %v502
        %963 = vmatpush.msra.mxu0 %v494
        %964 = vmatpush.msra.mxu0 %v486
        %965 = vmatpush.msra.mxu0 %v478
        %966 = vmatpush.msra.mxu0 %v470
        %967 = vmatpush.msra.mxu0 %v462
        %968 = vmatpush.msra.mxu0 %v454
        %969 = vmatmul.f32.gmra.mxu0 %v309
        %v970 = vpop.f32.mrf.mxu0
        %v971 = vadd.f32 %v942, %v970
        %972 = vmatmul.f32.gmra.mxu0 %v311
        %v973 = vpop.f32.mrf.mxu0
        %v974 = vadd.f32 %v945, %v973
        %975 = vmatmul.f32.gmra.mxu0 %v315
        %v976 = vpop.f32.mrf.mxu0
        %v977 = vadd.f32 %v948, %v976
        %978 = vmatmul.f32.gmra.mxu0 %v317
        %v979 = vpop.f32.mrf.mxu0
        %v980 = vadd.f32 %v951, %v979
        %981 = vdwg.mxu0
        %982 = vmatpush.msra.mxu0 %v447
        %983 = vmatpush.msra.mxu0 %v439
        %984 = vmatpush.msra.mxu0 %v431
        %985 = vmatpush.msra.mxu0 %v423
        %986 = vmatpush.msra.mxu0 %v415
        %987 = vmatpush.msra.mxu0 %v407
        %988 = vmatpush.msra.mxu0 %v399
        %989 = vmatpush.msra.mxu0 %v391
        %990 = vmatpush.msra.mxu0 %v383
        %991 = vmatpush.msra.mxu0 %v375
        %992 = vmatpush.msra.mxu0 %v367
        %993 = vmatpush.msra.mxu0 %v359
        %994 = vmatpush.msra.mxu0 %v351
        %995 = vmatpush.msra.mxu0 %v343
        %996 = vmatpush.msra.mxu0 %v335
        %997 = vmatpush.msra.mxu0 %v327
        %998 = vmatmul.f32.gmra.mxu0 %v308
        %v999 = vpop.f32.mrf.mxu0
        %v1000 = vadd.f32 0.0, %v999
        %1001 = vmatmul.f32.gmra.mxu0 %v310
        %v1002 = vpop.f32.mrf.mxu0
        %v1003 = vadd.f32 0.0, %v1002
        %1004 = vmatmul.f32.gmra.mxu0 %v314
        %v1005 = vpop.f32.mrf.mxu0
        %v1006 = vadd.f32 0.0, %v1005
        %1007 = vmatmul.f32.gmra.mxu0 %v316
        %v1008 = vpop.f32.mrf.mxu0
        %v1009 = vadd.f32 0.0, %v1008
        %1010 = vdwg.mxu0
        %1011 = vmatpush.msra.mxu0 %v575
        %1012 = vmatpush.msra.mxu0 %v567
        %1013 = vmatpush.msra.mxu0 %v559
        %1014 = vmatpush.msra.mxu0 %v551
        %1015 = vmatpush.msra.mxu0 %v543
        %1016 = vmatpush.msra.mxu0 %v535
        %1017 = vmatpush.msra.mxu0 %v527
        %1018 = vmatpush.msra.mxu0 %v519
        %1019 = vmatpush.msra.mxu0 %v511
        %1020 = vmatpush.msra.mxu0 %v503
        %1021 = vmatpush.msra.mxu0 %v495
        %1022 = vmatpush.msra.mxu0 %v487
        %1023 = vmatpush.msra.mxu0 %v479
        %1024 = vmatpush.msra.mxu0 %v471
        %1025 = vmatpush.msra.mxu0 %v463
        %1026 = vmatpush.msra.mxu0 %v455
        %1027 = vmatmul.f32.gmra.mxu0 %v309
        %v1028 = vpop.f32.mrf.mxu0
        %v1029 = vadd.f32 %v1000, %v1028
        %1030 = vmatmul.f32.gmra.mxu0 %v311
        %v1031 = vpop.f32.mrf.mxu0
        %v1032 = vadd.f32 %v1003, %v1031
        %1033 = vmatmul.f32.gmra.mxu0 %v315
        %v1034 = vpop.f32.mrf.mxu0
        %v1035 = vadd.f32 %v1006, %v1034
        %1036 = vmatmul.f32.gmra.mxu0 %v317
        %v1037 = vpop.f32.mrf.mxu0
        %v1038 = vadd.f32 %v1009, %v1037
        %1039 = vdwg.mxu0
        %v1040 = vadd.f32 %v276, %v623
        %v1041 = vadd.f32 %v277, %v681
        %v1042 = vadd.f32 %v278, %v739
        %v1043 = vadd.f32 %v279, %v797
        %v1044 = vadd.f32 %v280, %v855
        %v1045 = vadd.f32 %v281, %v913
        %v1046 = vadd.f32 %v282, %v971
        %v1047 = vadd.f32 %v283, %v1029
        %v1048 = vadd.f32 %v284, %v626
        %v1049 = vadd.f32 %v285, %v684
        %v1050 = vadd.f32 %v286, %v742
        %v1051 = vadd.f32 %v287, %v800
        %v1052 = vadd.f32 %v288, %v858
        %v1053 = vadd.f32 %v289, %v916
        %v1054 = vadd.f32 %v290, %v974
        %v1055 = vadd.f32 %v291, %v1032
        %v1056 = vadd.f32 %v292, %v629
        %v1057 = vadd.f32 %v293, %v687
        %v1058 = vadd.f32 %v294, %v745
        %v1059 = vadd.f32 %v295, %v803
        %v1060 = vadd.f32 %v296, %v861
        %v1061 = vadd.f32 %v297, %v919
        %v1062 = vadd.f32 %v298, %v977
        %v1063 = vadd.f32 %v299, %v1035
        %v1064 = vadd.f32 %v300, %v632
        %v1065 = vadd.f32 %v301, %v690
        %v1066 = vadd.f32 %v302, %v748
        %v1067 = vadd.f32 %v303, %v806
        %v1068 = vadd.f32 %v304, %v864
        %v1069 = vadd.f32 %v305, %v922
        %v1070 = vadd.f32 %v306, %v980
        %v1071 = vadd.f32 %v307, %v1038
        %vm1084 = vcmask 1046528
        %v1085 = vrot.slane %v308, 1
        %v1086 = vrot.slane %v310, 1
        %v1087 = vsel %vm1084, %v1085, %v1086
        %v1088 = vrot.slane %v309, 1
        %v1089 = vrot.slane %v311, 1
        %v1090 = vsel %vm1084, %v1088, %v1089
        %v1091 = vrot.slane %v312, 1
        %v1092 = vsel %vm1084, %v1086, %v1091
        %v1093 = vrot.slane %v313, 1
        %v1094 = vsel %vm1084, %v1089, %v1093
        %v1095 = vrot.slane %v314, 1
        %v1096 = vrot.slane %v316, 1
        %v1097 = vsel %vm1084, %v1095, %v1096
        %v1098 = vrot.slane %v315, 1
        %v1099 = vrot.slane %v317, 1
        %v1100 = vsel %vm1084, %v1098, %v1099
        %v1101 = vrot.slane %v318, 1
        %v1102 = vsel %vm1084, %v1096, %v1101
        %v1103 = vrot.slane %v319, 1
        %v1104 = vsel %vm1084, %v1099, %v1103
        %s1113 = scalar_lea.vmem %s217, 2048 [#allocation7]
        %v1114 = vld [vmem:[%s1113] sm:$0xff]
        %v1115 = vld [vmem:[%s1113 + $0x8] sm:$0xff]
        %v1116 = vld [vmem:[%s1113 + $0x10] sm:$0xff]
        %v1117 = vld [vmem:[%s1113 + $0x18] sm:$0xff]
        %v1118 = vld [vmem:[%s1113 + $0x20] sm:$0xff]
        %v1119 = vld [vmem:[%s1113 + $0x28] sm:$0xff]
        %v1120 = vld [vmem:[%s1113 + $0x30] sm:$0xff]
        %v1121 = vld [vmem:[%s1113 + $0x38] sm:$0xff]
        %v1122 = vld [vmem:[%s1113 + $0x40] sm:$0xff]
        %v1123 = vld [vmem:[%s1113 + $0x48] sm:$0xff]
        %v1124 = vld [vmem:[%s1113 + $0x50] sm:$0xff]
        %v1125 = vld [vmem:[%s1113 + $0x58] sm:$0xff]
        %v1126 = vld [vmem:[%s1113 + $0x60] sm:$0xff]
        %v1127 = vld [vmem:[%s1113 + $0x68] sm:$0xff]
        %v1128 = vld [vmem:[%s1113 + $0x70] sm:$0xff]
        %v1129 = vld [vmem:[%s1113 + $0x78] sm:$0xff]
        %v1130 = vld [vmem:[%s1113 + $0x80] sm:$0xff]
        %v1131 = vld [vmem:[%s1113 + $0x88] sm:$0xff]
        %v1132 = vld [vmem:[%s1113 + $0x90] sm:$0xff]
        %v1133 = vld [vmem:[%s1113 + $0x98] sm:$0xff]
        %v1134 = vld [vmem:[%s1113 + $0xa0] sm:$0xff]
        %v1135 = vld [vmem:[%s1113 + $0xa8] sm:$0xff]
        %v1136 = vld [vmem:[%s1113 + $0xb0] sm:$0xff]
        %v1137 = vld [vmem:[%s1113 + $0xb8] sm:$0xff]
        %v1138 = vld [vmem:[%s1113 + $0xc0] sm:$0xff]
        %v1139 = vld [vmem:[%s1113 + $0xc8] sm:$0xff]
        %v1140 = vld [vmem:[%s1113 + $0xd0] sm:$0xff]
        %v1141 = vld [vmem:[%s1113 + $0xd8] sm:$0xff]
        %v1142 = vld [vmem:[%s1113 + $0xe0] sm:$0xff]
        %v1143 = vld [vmem:[%s1113 + $0xe8] sm:$0xff]
        %v1144 = vld [vmem:[%s1113 + $0xf0] sm:$0xff]
        %v1145 = vld [vmem:[%s1113 + $0xf8] sm:$0xff]
        %v1146 = vld [vmem:[%s1113 + $0x100] sm:$0xff]
        %v1147 = vld [vmem:[%s1113 + $0x108] sm:$0xff]
        %v1148 = vld [vmem:[%s1113 + $0x110] sm:$0xff]
        %v1149 = vld [vmem:[%s1113 + $0x118] sm:$0xff]
        %v1150 = vld [vmem:[%s1113 + $0x120] sm:$0xff]
        %v1151 = vld [vmem:[%s1113 + $0x128] sm:$0xff]
        %v1152 = vld [vmem:[%s1113 + $0x130] sm:$0xff]
        %v1153 = vld [vmem:[%s1113 + $0x138] sm:$0xff]
        %v1154 = vld [vmem:[%s1113 + $0x140] sm:$0xff]
        %v1155 = vld [vmem:[%s1113 + $0x148] sm:$0xff]
        %v1156 = vld [vmem:[%s1113 + $0x150] sm:$0xff]
        %v1157 = vld [vmem:[%s1113 + $0x158] sm:$0xff]
        %v1158 = vld [vmem:[%s1113 + $0x160] sm:$0xff]
        %v1159 = vld [vmem:[%s1113 + $0x168] sm:$0xff]
        %v1160 = vld [vmem:[%s1113 + $0x170] sm:$0xff]
        %v1161 = vld [vmem:[%s1113 + $0x178] sm:$0xff]
        %v1162 = vld [vmem:[%s1113 + $0x180] sm:$0xff]
        %v1163 = vld [vmem:[%s1113 + $0x188] sm:$0xff]
        %v1164 = vld [vmem:[%s1113 + $0x190] sm:$0xff]
        %v1165 = vld [vmem:[%s1113 + $0x198] sm:$0xff]
        %v1166 = vld [vmem:[%s1113 + $0x1a0] sm:$0xff]
        %v1167 = vld [vmem:[%s1113 + $0x1a8] sm:$0xff]
        %v1168 = vld [vmem:[%s1113 + $0x1b0] sm:$0xff]
        %v1169 = vld [vmem:[%s1113 + $0x1b8] sm:$0xff]
        %v1170 = vld [vmem:[%s1113 + $0x1c0] sm:$0xff]
        %v1171 = vld [vmem:[%s1113 + $0x1c8] sm:$0xff]
        %v1172 = vld [vmem:[%s1113 + $0x1d0] sm:$0xff]
        %v1173 = vld [vmem:[%s1113 + $0x1d8] sm:$0xff]
        %v1174 = vld [vmem:[%s1113 + $0x1e0] sm:$0xff]
        %v1175 = vld [vmem:[%s1113 + $0x1e8] sm:$0xff]
        %v1176 = vld [vmem:[%s1113 + $0x1f0] sm:$0xff]
        %v1177 = vld [vmem:[%s1113 + $0x1f8] sm:$0xff]
        %v1178 = vld [vmem:[%s1113 + $0x200] sm:$0xff]
        %v1179 = vld [vmem:[%s1113 + $0x208] sm:$0xff]
        %v1180 = vld [vmem:[%s1113 + $0x210] sm:$0xff]
        %v1181 = vld [vmem:[%s1113 + $0x218] sm:$0xff]
        %v1182 = vld [vmem:[%s1113 + $0x220] sm:$0xff]
        %v1183 = vld [vmem:[%s1113 + $0x228] sm:$0xff]
        %v1184 = vld [vmem:[%s1113 + $0x230] sm:$0xff]
        %v1185 = vld [vmem:[%s1113 + $0x238] sm:$0xff]
        %v1186 = vld [vmem:[%s1113 + $0x240] sm:$0xff]
        %v1187 = vld [vmem:[%s1113 + $0x248] sm:$0xff]
        %v1188 = vld [vmem:[%s1113 + $0x250] sm:$0xff]
        %v1189 = vld [vmem:[%s1113 + $0x258] sm:$0xff]
        %v1190 = vld [vmem:[%s1113 + $0x260] sm:$0xff]
        %v1191 = vld [vmem:[%s1113 + $0x268] sm:$0xff]
        %v1192 = vld [vmem:[%s1113 + $0x270] sm:$0xff]
        %v1193 = vld [vmem:[%s1113 + $0x278] sm:$0xff]
        %v1194 = vld [vmem:[%s1113 + $0x280] sm:$0xff]
        %v1195 = vld [vmem:[%s1113 + $0x288] sm:$0xff]
        %v1196 = vld [vmem:[%s1113 + $0x290] sm:$0xff]
        %v1197 = vld [vmem:[%s1113 + $0x298] sm:$0xff]
        %v1198 = vld [vmem:[%s1113 + $0x2a0] sm:$0xff]
        %v1199 = vld [vmem:[%s1113 + $0x2a8] sm:$0xff]
        %v1200 = vld [vmem:[%s1113 + $0x2b0] sm:$0xff]
        %v1201 = vld [vmem:[%s1113 + $0x2b8] sm:$0xff]
        %v1202 = vld [vmem:[%s1113 + $0x2c0] sm:$0xff]
        %v1203 = vld [vmem:[%s1113 + $0x2c8] sm:$0xff]
        %v1204 = vld [vmem:[%s1113 + $0x2d0] sm:$0xff]
        %v1205 = vld [vmem:[%s1113 + $0x2d8] sm:$0xff]
        %v1206 = vld [vmem:[%s1113 + $0x2e0] sm:$0xff]
        %v1207 = vld [vmem:[%s1113 + $0x2e8] sm:$0xff]
        %v1208 = vld [vmem:[%s1113 + $0x2f0] sm:$0xff]
        %v1209 = vld [vmem:[%s1113 + $0x2f8] sm:$0xff]
        %v1210 = vld [vmem:[%s1113 + $0x300] sm:$0xff]
        %v1211 = vld [vmem:[%s1113 + $0x308] sm:$0xff]
        %v1212 = vld [vmem:[%s1113 + $0x310] sm:$0xff]
        %v1213 = vld [vmem:[%s1113 + $0x318] sm:$0xff]
        %v1214 = vld [vmem:[%s1113 + $0x320] sm:$0xff]
        %v1215 = vld [vmem:[%s1113 + $0x328] sm:$0xff]
        %v1216 = vld [vmem:[%s1113 + $0x330] sm:$0xff]
        %v1217 = vld [vmem:[%s1113 + $0x338] sm:$0xff]
        %v1218 = vld [vmem:[%s1113 + $0x340] sm:$0xff]
        %v1219 = vld [vmem:[%s1113 + $0x348] sm:$0xff]
        %v1220 = vld [vmem:[%s1113 + $0x350] sm:$0xff]
        %v1221 = vld [vmem:[%s1113 + $0x358] sm:$0xff]
        %v1222 = vld [vmem:[%s1113 + $0x360] sm:$0xff]
        %v1223 = vld [vmem:[%s1113 + $0x368] sm:$0xff]
        %v1224 = vld [vmem:[%s1113 + $0x370] sm:$0xff]
        %v1225 = vld [vmem:[%s1113 + $0x378] sm:$0xff]
        %v1226 = vld [vmem:[%s1113 + $0x380] sm:$0xff]
        %v1227 = vld [vmem:[%s1113 + $0x388] sm:$0xff]
        %v1228 = vld [vmem:[%s1113 + $0x390] sm:$0xff]
        %v1229 = vld [vmem:[%s1113 + $0x398] sm:$0xff]
        %v1230 = vld [vmem:[%s1113 + $0x3a0] sm:$0xff]
        %v1231 = vld [vmem:[%s1113 + $0x3a8] sm:$0xff]
        %v1232 = vld [vmem:[%s1113 + $0x3b0] sm:$0xff]
        %v1233 = vld [vmem:[%s1113 + $0x3b8] sm:$0xff]
        %v1234 = vld [vmem:[%s1113 + $0x3c0] sm:$0xff]
        %v1235 = vld [vmem:[%s1113 + $0x3c8] sm:$0xff]
        %v1236 = vld [vmem:[%s1113 + $0x3d0] sm:$0xff]
        %v1237 = vld [vmem:[%s1113 + $0x3d8] sm:$0xff]
        %v1238 = vld [vmem:[%s1113 + $0x3e0] sm:$0xff]
        %v1239 = vld [vmem:[%s1113 + $0x3e8] sm:$0xff]
        %v1240 = vld [vmem:[%s1113 + $0x3f0] sm:$0xff]
        %v1241 = vld [vmem:[%s1113 + $0x3f8] sm:$0xff]
        %v1242 = vld [vmem:[%s1113 + $0x400] sm:$0xff]
        %v1243 = vld [vmem:[%s1113 + $0x408] sm:$0xff]
        %v1244 = vld [vmem:[%s1113 + $0x410] sm:$0xff]
        %v1245 = vld [vmem:[%s1113 + $0x418] sm:$0xff]
        %v1246 = vld [vmem:[%s1113 + $0x420] sm:$0xff]
        %v1247 = vld [vmem:[%s1113 + $0x428] sm:$0xff]
        %v1248 = vld [vmem:[%s1113 + $0x430] sm:$0xff]
        %v1249 = vld [vmem:[%s1113 + $0x438] sm:$0xff]
        %v1250 = vld [vmem:[%s1113 + $0x440] sm:$0xff]
        %v1251 = vld [vmem:[%s1113 + $0x448] sm:$0xff]
        %v1252 = vld [vmem:[%s1113 + $0x450] sm:$0xff]
        %v1253 = vld [vmem:[%s1113 + $0x458] sm:$0xff]
        %v1254 = vld [vmem:[%s1113 + $0x460] sm:$0xff]
        %v1255 = vld [vmem:[%s1113 + $0x468] sm:$0xff]
        %v1256 = vld [vmem:[%s1113 + $0x470] sm:$0xff]
        %v1257 = vld [vmem:[%s1113 + $0x478] sm:$0xff]
        %v1258 = vld [vmem:[%s1113 + $0x480] sm:$0xff]
        %v1259 = vld [vmem:[%s1113 + $0x488] sm:$0xff]
        %v1260 = vld [vmem:[%s1113 + $0x490] sm:$0xff]
        %v1261 = vld [vmem:[%s1113 + $0x498] sm:$0xff]
        %v1262 = vld [vmem:[%s1113 + $0x4a0] sm:$0xff]
        %v1263 = vld [vmem:[%s1113 + $0x4a8] sm:$0xff]
        %v1264 = vld [vmem:[%s1113 + $0x4b0] sm:$0xff]
        %v1265 = vld [vmem:[%s1113 + $0x4b8] sm:$0xff]
        %v1266 = vld [vmem:[%s1113 + $0x4c0] sm:$0xff]
        %v1267 = vld [vmem:[%s1113 + $0x4c8] sm:$0xff]
        %v1268 = vld [vmem:[%s1113 + $0x4d0] sm:$0xff]
        %v1269 = vld [vmem:[%s1113 + $0x4d8] sm:$0xff]
        %v1270 = vld [vmem:[%s1113 + $0x4e0] sm:$0xff]
        %v1271 = vld [vmem:[%s1113 + $0x4e8] sm:$0xff]
        %v1272 = vld [vmem:[%s1113 + $0x4f0] sm:$0xff]
        %v1273 = vld [vmem:[%s1113 + $0x4f8] sm:$0xff]
        %v1274 = vld [vmem:[%s1113 + $0x500] sm:$0xff]
        %v1275 = vld [vmem:[%s1113 + $0x508] sm:$0xff]
        %v1276 = vld [vmem:[%s1113 + $0x510] sm:$0xff]
        %v1277 = vld [vmem:[%s1113 + $0x518] sm:$0xff]
        %v1278 = vld [vmem:[%s1113 + $0x520] sm:$0xff]
        %v1279 = vld [vmem:[%s1113 + $0x528] sm:$0xff]
        %v1280 = vld [vmem:[%s1113 + $0x530] sm:$0xff]
        %v1281 = vld [vmem:[%s1113 + $0x538] sm:$0xff]
        %v1282 = vld [vmem:[%s1113 + $0x540] sm:$0xff]
        %v1283 = vld [vmem:[%s1113 + $0x548] sm:$0xff]
        %v1284 = vld [vmem:[%s1113 + $0x550] sm:$0xff]
        %v1285 = vld [vmem:[%s1113 + $0x558] sm:$0xff]
        %v1286 = vld [vmem:[%s1113 + $0x560] sm:$0xff]
        %v1287 = vld [vmem:[%s1113 + $0x568] sm:$0xff]
        %v1288 = vld [vmem:[%s1113 + $0x570] sm:$0xff]
        %v1289 = vld [vmem:[%s1113 + $0x578] sm:$0xff]
        %v1290 = vld [vmem:[%s1113 + $0x580] sm:$0xff]
        %v1291 = vld [vmem:[%s1113 + $0x588] sm:$0xff]
        %v1292 = vld [vmem:[%s1113 + $0x590] sm:$0xff]
        %v1293 = vld [vmem:[%s1113 + $0x598] sm:$0xff]
        %v1294 = vld [vmem:[%s1113 + $0x5a0] sm:$0xff]
        %v1295 = vld [vmem:[%s1113 + $0x5a8] sm:$0xff]
        %v1296 = vld [vmem:[%s1113 + $0x5b0] sm:$0xff]
        %v1297 = vld [vmem:[%s1113 + $0x5b8] sm:$0xff]
        %v1298 = vld [vmem:[%s1113 + $0x5c0] sm:$0xff]
        %v1299 = vld [vmem:[%s1113 + $0x5c8] sm:$0xff]
        %v1300 = vld [vmem:[%s1113 + $0x5d0] sm:$0xff]
        %v1301 = vld [vmem:[%s1113 + $0x5d8] sm:$0xff]
        %v1302 = vld [vmem:[%s1113 + $0x5e0] sm:$0xff]
        %v1303 = vld [vmem:[%s1113 + $0x5e8] sm:$0xff]
        %v1304 = vld [vmem:[%s1113 + $0x5f0] sm:$0xff]
        %v1305 = vld [vmem:[%s1113 + $0x5f8] sm:$0xff]
        %v1306 = vld [vmem:[%s1113 + $0x600] sm:$0xff]
        %v1307 = vld [vmem:[%s1113 + $0x608] sm:$0xff]
        %v1308 = vld [vmem:[%s1113 + $0x610] sm:$0xff]
        %v1309 = vld [vmem:[%s1113 + $0x618] sm:$0xff]
        %v1310 = vld [vmem:[%s1113 + $0x620] sm:$0xff]
        %v1311 = vld [vmem:[%s1113 + $0x628] sm:$0xff]
        %v1312 = vld [vmem:[%s1113 + $0x630] sm:$0xff]
        %v1313 = vld [vmem:[%s1113 + $0x638] sm:$0xff]
        %v1314 = vld [vmem:[%s1113 + $0x640] sm:$0xff]
        %v1315 = vld [vmem:[%s1113 + $0x648] sm:$0xff]
        %v1316 = vld [vmem:[%s1113 + $0x650] sm:$0xff]
        %v1317 = vld [vmem:[%s1113 + $0x658] sm:$0xff]
        %v1318 = vld [vmem:[%s1113 + $0x660] sm:$0xff]
        %v1319 = vld [vmem:[%s1113 + $0x668] sm:$0xff]
        %v1320 = vld [vmem:[%s1113 + $0x670] sm:$0xff]
        %v1321 = vld [vmem:[%s1113 + $0x678] sm:$0xff]
        %v1322 = vld [vmem:[%s1113 + $0x680] sm:$0xff]
        %v1323 = vld [vmem:[%s1113 + $0x688] sm:$0xff]
        %v1324 = vld [vmem:[%s1113 + $0x690] sm:$0xff]
        %v1325 = vld [vmem:[%s1113 + $0x698] sm:$0xff]
        %v1326 = vld [vmem:[%s1113 + $0x6a0] sm:$0xff]
        %v1327 = vld [vmem:[%s1113 + $0x6a8] sm:$0xff]
        %v1328 = vld [vmem:[%s1113 + $0x6b0] sm:$0xff]
        %v1329 = vld [vmem:[%s1113 + $0x6b8] sm:$0xff]
        %v1330 = vld [vmem:[%s1113 + $0x6c0] sm:$0xff]
        %v1331 = vld [vmem:[%s1113 + $0x6c8] sm:$0xff]
        %v1332 = vld [vmem:[%s1113 + $0x6d0] sm:$0xff]
        %v1333 = vld [vmem:[%s1113 + $0x6d8] sm:$0xff]
        %v1334 = vld [vmem:[%s1113 + $0x6e0] sm:$0xff]
        %v1335 = vld [vmem:[%s1113 + $0x6e8] sm:$0xff]
        %v1336 = vld [vmem:[%s1113 + $0x6f0] sm:$0xff]
        %v1337 = vld [vmem:[%s1113 + $0x6f8] sm:$0xff]
        %v1338 = vld [vmem:[%s1113 + $0x700] sm:$0xff]
        %v1339 = vld [vmem:[%s1113 + $0x708] sm:$0xff]
        %v1340 = vld [vmem:[%s1113 + $0x710] sm:$0xff]
        %v1341 = vld [vmem:[%s1113 + $0x718] sm:$0xff]
        %v1342 = vld [vmem:[%s1113 + $0x720] sm:$0xff]
        %v1343 = vld [vmem:[%s1113 + $0x728] sm:$0xff]
        %v1344 = vld [vmem:[%s1113 + $0x730] sm:$0xff]
        %v1345 = vld [vmem:[%s1113 + $0x738] sm:$0xff]
        %v1346 = vld [vmem:[%s1113 + $0x740] sm:$0xff]
        %v1347 = vld [vmem:[%s1113 + $0x748] sm:$0xff]
        %v1348 = vld [vmem:[%s1113 + $0x750] sm:$0xff]
        %v1349 = vld [vmem:[%s1113 + $0x758] sm:$0xff]
        %v1350 = vld [vmem:[%s1113 + $0x760] sm:$0xff]
        %v1351 = vld [vmem:[%s1113 + $0x768] sm:$0xff]
        %v1352 = vld [vmem:[%s1113 + $0x770] sm:$0xff]
        %v1353 = vld [vmem:[%s1113 + $0x778] sm:$0xff]
        %v1354 = vld [vmem:[%s1113 + $0x780] sm:$0xff]
        %v1355 = vld [vmem:[%s1113 + $0x788] sm:$0xff]
        %v1356 = vld [vmem:[%s1113 + $0x790] sm:$0xff]
        %v1357 = vld [vmem:[%s1113 + $0x798] sm:$0xff]
        %v1358 = vld [vmem:[%s1113 + $0x7a0] sm:$0xff]
        %v1359 = vld [vmem:[%s1113 + $0x7a8] sm:$0xff]
        %v1360 = vld [vmem:[%s1113 + $0x7b0] sm:$0xff]
        %v1361 = vld [vmem:[%s1113 + $0x7b8] sm:$0xff]
        %v1362 = vld [vmem:[%s1113 + $0x7c0] sm:$0xff]
        %v1363 = vld [vmem:[%s1113 + $0x7c8] sm:$0xff]
        %v1364 = vld [vmem:[%s1113 + $0x7d0] sm:$0xff]
        %v1365 = vld [vmem:[%s1113 + $0x7d8] sm:$0xff]
        %v1366 = vld [vmem:[%s1113 + $0x7e0] sm:$0xff]
        %v1367 = vld [vmem:[%s1113 + $0x7e8] sm:$0xff]
        %v1368 = vld [vmem:[%s1113 + $0x7f0] sm:$0xff]
        %v1369 = vld [vmem:[%s1113 + $0x7f8] sm:$0xff]
        %1370 = vmatpush.msra.mxu0 %v1234
        %1371 = vmatpush.msra.mxu0 %v1226
        %1372 = vmatpush.msra.mxu0 %v1218
        %1373 = vmatpush.msra.mxu0 %v1210
        %1374 = vmatpush.msra.mxu0 %v1202
        %1375 = vmatpush.msra.mxu0 %v1194
        %1376 = vmatpush.msra.mxu0 %v1186
        %1377 = vmatpush.msra.mxu0 %v1178
        %1378 = vmatpush.msra.mxu0 %v1170
        %1379 = vmatpush.msra.mxu0 %v1162
        %1380 = vmatpush.msra.mxu0 %v1154
        %1381 = vmatpush.msra.mxu0 %v1146
        %1382 = vmatpush.msra.mxu0 %v1138
        %1383 = vmatpush.msra.mxu0 %v1130
        %1384 = vmatpush.msra.mxu0 %v1122
        %1385 = vmatpush.msra.mxu0 %v1114
        %1386 = vmatmul.f32.gmra.mxu0 %v1087
        %v1387 = vpop.f32.mrf.mxu0
        %v1388 = vadd.f32 0.0, %v1387
        %1389 = vmatmul.f32.gmra.mxu0 %v1092
        %v1390 = vpop.f32.mrf.mxu0
        %v1391 = vadd.f32 0.0, %v1390
        %1392 = vmatmul.f32.gmra.mxu0 %v1097
        %v1393 = vpop.f32.mrf.mxu0
        %v1394 = vadd.f32 0.0, %v1393
        %1395 = vmatmul.f32.gmra.mxu0 %v1102
        %v1396 = vpop.f32.mrf.mxu0
        %v1397 = vadd.f32 0.0, %v1396
        %1398 = vdwg.mxu0
        %1399 = vmatpush.msra.mxu0 %v1362
        %1400 = vmatpush.msra.mxu0 %v1354
        %1401 = vmatpush.msra.mxu0 %v1346
        %1402 = vmatpush.msra.mxu0 %v1338
        %1403 = vmatpush.msra.mxu0 %v1330
        %1404 = vmatpush.msra.mxu0 %v1322
        %1405 = vmatpush.msra.mxu0 %v1314
        %1406 = vmatpush.msra.mxu0 %v1306
        %1407 = vmatpush.msra.mxu0 %v1298
        %1408 = vmatpush.msra.mxu0 %v1290
        %1409 = vmatpush.msra.mxu0 %v1282
        %1410 = vmatpush.msra.mxu0 %v1274
        %1411 = vmatpush.msra.mxu0 %v1266
        %1412 = vmatpush.msra.mxu0 %v1258
        %1413 = vmatpush.msra.mxu0 %v1250
        %1414 = vmatpush.msra.mxu0 %v1242
        %1415 = vmatmul.f32.gmra.mxu0 %v1090
        %v1416 = vpop.f32.mrf.mxu0
        %v1417 = vadd.f32 %v1388, %v1416
        %1418 = vmatmul.f32.gmra.mxu0 %v1094
        %v1419 = vpop.f32.mrf.mxu0
        %v1420 = vadd.f32 %v1391, %v1419
        %1421 = vmatmul.f32.gmra.mxu0 %v1100
        %v1422 = vpop.f32.mrf.mxu0
        %v1423 = vadd.f32 %v1394, %v1422
        %1424 = vmatmul.f32.gmra.mxu0 %v1104
        %v1425 = vpop.f32.mrf.mxu0
        %v1426 = vadd.f32 %v1397, %v1425
        %1427 = vdwg.mxu0
        %1428 = vmatpush.msra.mxu0 %v1235
        %1429 = vmatpush.msra.mxu0 %v1227
        %1430 = vmatpush.msra.mxu0 %v1219
        %1431 = vmatpush.msra.mxu0 %v1211
        %1432 = vmatpush.msra.mxu0 %v1203
        %1433 = vmatpush.msra.mxu0 %v1195
        %1434 = vmatpush.msra.mxu0 %v1187
        %1435 = vmatpush.msra.mxu0 %v1179
        %1436 = vmatpush.msra.mxu0 %v1171
        %1437 = vmatpush.msra.mxu0 %v1163
        %1438 = vmatpush.msra.mxu0 %v1155
        %1439 = vmatpush.msra.mxu0 %v1147
        %1440 = vmatpush.msra.mxu0 %v1139
        %1441 = vmatpush.msra.mxu0 %v1131
        %1442 = vmatpush.msra.mxu0 %v1123
        %1443 = vmatpush.msra.mxu0 %v1115
        %1444 = vmatmul.f32.gmra.mxu0 %v1087
        %v1445 = vpop.f32.mrf.mxu0
        %v1446 = vadd.f32 0.0, %v1445
        %1447 = vmatmul.f32.gmra.mxu0 %v1092
        %v1448 = vpop.f32.mrf.mxu0
        %v1449 = vadd.f32 0.0, %v1448
        %1450 = vmatmul.f32.gmra.mxu0 %v1097
        %v1451 = vpop.f32.mrf.mxu0
        %v1452 = vadd.f32 0.0, %v1451
        %1453 = vmatmul.f32.gmra.mxu0 %v1102
        %v1454 = vpop.f32.mrf.mxu0
        %v1455 = vadd.f32 0.0, %v1454
        %1456 = vdwg.mxu0
        %1457 = vmatpush.msra.mxu0 %v1363
        %1458 = vmatpush.msra.mxu0 %v1355
        %1459 = vmatpush.msra.mxu0 %v1347
        %1460 = vmatpush.msra.mxu0 %v1339
        %1461 = vmatpush.msra.mxu0 %v1331
        %1462 = vmatpush.msra.mxu0 %v1323
        %1463 = vmatpush.msra.mxu0 %v1315
        %1464 = vmatpush.msra.mxu0 %v1307
        %1465 = vmatpush.msra.mxu0 %v1299
        %1466 = vmatpush.msra.mxu0 %v1291
        %1467 = vmatpush.msra.mxu0 %v1283
        %1468 = vmatpush.msra.mxu0 %v1275
        %1469 = vmatpush.msra.mxu0 %v1267
        %1470 = vmatpush.msra.mxu0 %v1259
        %1471 = vmatpush.msra.mxu0 %v1251
        %1472 = vmatpush.msra.mxu0 %v1243
        %1473 = vmatmul.f32.gmra.mxu0 %v1090
        %v1474 = vpop.f32.mrf.mxu0
        %v1475 = vadd.f32 %v1446, %v1474
        %1476 = vmatmul.f32.gmra.mxu0 %v1094
        %v1477 = vpop.f32.mrf.mxu0
        %v1478 = vadd.f32 %v1449, %v1477
        %1479 = vmatmul.f32.gmra.mxu0 %v1100
        %v1480 = vpop.f32.mrf.mxu0
        %v1481 = vadd.f32 %v1452, %v1480
        %1482 = vmatmul.f32.gmra.mxu0 %v1104
        %v1483 = vpop.f32.mrf.mxu0
        %v1484 = vadd.f32 %v1455, %v1483
        %1485 = vdwg.mxu0
        %1486 = vmatpush.msra.mxu0 %v1236
        %1487 = vmatpush.msra.mxu0 %v1228
        %1488 = vmatpush.msra.mxu0 %v1220
        %1489 = vmatpush.msra.mxu0 %v1212
        %1490 = vmatpush.msra.mxu0 %v1204
        %1491 = vmatpush.msra.mxu0 %v1196
        %1492 = vmatpush.msra.mxu0 %v1188
        %1493 = vmatpush.msra.mxu0 %v1180
        %1494 = vmatpush.msra.mxu0 %v1172
        %1495 = vmatpush.msra.mxu0 %v1164
        %1496 = vmatpush.msra.mxu0 %v1156
        %1497 = vmatpush.msra.mxu0 %v1148
        %1498 = vmatpush.msra.mxu0 %v1140
        %1499 = vmatpush.msra.mxu0 %v1132
        %1500 = vmatpush.msra.mxu0 %v1124
        %1501 = vmatpush.msra.mxu0 %v1116
        %1502 = vmatmul.f32.gmra.mxu0 %v1087
        %v1503 = vpop.f32.mrf.mxu0
        %v1504 = vadd.f32 0.0, %v1503
        %1505 = vmatmul.f32.gmra.mxu0 %v1092
        %v1506 = vpop.f32.mrf.mxu0
        %v1507 = vadd.f32 0.0, %v1506
        %1508 = vmatmul.f32.gmra.mxu0 %v1097
        %v1509 = vpop.f32.mrf.mxu0
        %v1510 = vadd.f32 0.0, %v1509
        %1511 = vmatmul.f32.gmra.mxu0 %v1102
        %v1512 = vpop.f32.mrf.mxu0
        %v1513 = vadd.f32 0.0, %v1512
        %1514 = vdwg.mxu0
        %1515 = vmatpush.msra.mxu0 %v1364
        %1516 = vmatpush.msra.mxu0 %v1356
        %1517 = vmatpush.msra.mxu0 %v1348
        %1518 = vmatpush.msra.mxu0 %v1340
        %1519 = vmatpush.msra.mxu0 %v1332
        %1520 = vmatpush.msra.mxu0 %v1324
        %1521 = vmatpush.msra.mxu0 %v1316
        %1522 = vmatpush.msra.mxu0 %v1308
        %1523 = vmatpush.msra.mxu0 %v1300
        %1524 = vmatpush.msra.mxu0 %v1292
        %1525 = vmatpush.msra.mxu0 %v1284
        %1526 = vmatpush.msra.mxu0 %v1276
        %1527 = vmatpush.msra.mxu0 %v1268
        %1528 = vmatpush.msra.mxu0 %v1260
        %1529 = vmatpush.msra.mxu0 %v1252
        %1530 = vmatpush.msra.mxu0 %v1244
        %1531 = vmatmul.f32.gmra.mxu0 %v1090
        %v1532 = vpop.f32.mrf.mxu0
        %v1533 = vadd.f32 %v1504, %v1532
        %1534 = vmatmul.f32.gmra.mxu0 %v1094
        %v1535 = vpop.f32.mrf.mxu0
        %v1536 = vadd.f32 %v1507, %v1535
        %1537 = vmatmul.f32.gmra.mxu0 %v1100
        %v1538 = vpop.f32.mrf.mxu0
        %v1539 = vadd.f32 %v1510, %v1538
        %1540 = vmatmul.f32.gmra.mxu0 %v1104
        %v1541 = vpop.f32.mrf.mxu0
        %v1542 = vadd.f32 %v1513, %v1541
        %1543 = vdwg.mxu0
        %1544 = vmatpush.msra.mxu0 %v1237
        %1545 = vmatpush.msra.mxu0 %v1229
        %1546 = vmatpush.msra.mxu0 %v1221
        %1547 = vmatpush.msra.mxu0 %v1213
        %1548 = vmatpush.msra.mxu0 %v1205
        %1549 = vmatpush.msra.mxu0 %v1197
        %1550 = vmatpush.msra.mxu0 %v1189
        %1551 = vmatpush.msra.mxu0 %v1181
        %1552 = vmatpush.msra.mxu0 %v1173
        %1553 = vmatpush.msra.mxu0 %v1165
        %1554 = vmatpush.msra.mxu0 %v1157
        %1555 = vmatpush.msra.mxu0 %v1149
        %1556 = vmatpush.msra.mxu0 %v1141
        %1557 = vmatpush.msra.mxu0 %v1133
        %1558 = vmatpush.msra.mxu0 %v1125
        %1559 = vmatpush.msra.mxu0 %v1117
        %1560 = vmatmul.f32.gmra.mxu0 %v1087
        %v1561 = vpop.f32.mrf.mxu0
        %v1562 = vadd.f32 0.0, %v1561
        %1563 = vmatmul.f32.gmra.mxu0 %v1092
        %v1564 = vpop.f32.mrf.mxu0
        %v1565 = vadd.f32 0.0, %v1564
        %1566 = vmatmul.f32.gmra.mxu0 %v1097
        %v1567 = vpop.f32.mrf.mxu0
        %v1568 = vadd.f32 0.0, %v1567
        %1569 = vmatmul.f32.gmra.mxu0 %v1102
        %v1570 = vpop.f32.mrf.mxu0
        %v1571 = vadd.f32 0.0, %v1570
        %1572 = vdwg.mxu0
        %1573 = vmatpush.msra.mxu0 %v1365
        %1574 = vmatpush.msra.mxu0 %v1357
        %1575 = vmatpush.msra.mxu0 %v1349
        %1576 = vmatpush.msra.mxu0 %v1341
        %1577 = vmatpush.msra.mxu0 %v1333
        %1578 = vmatpush.msra.mxu0 %v1325
        %1579 = vmatpush.msra.mxu0 %v1317
        %1580 = vmatpush.msra.mxu0 %v1309
        %1581 = vmatpush.msra.mxu0 %v1301
        %1582 = vmatpush.msra.mxu0 %v1293
        %1583 = vmatpush.msra.mxu0 %v1285
        %1584 = vmatpush.msra.mxu0 %v1277
        %1585 = vmatpush.msra.mxu0 %v1269
        %1586 = vmatpush.msra.mxu0 %v1261
        %1587 = vmatpush.msra.mxu0 %v1253
        %1588 = vmatpush.msra.mxu0 %v1245
        %1589 = vmatmul.f32.gmra.mxu0 %v1090
        %v1590 = vpop.f32.mrf.mxu0
        %v1591 = vadd.f32 %v1562, %v1590
        %1592 = vmatmul.f32.gmra.mxu0 %v1094
        %v1593 = vpop.f32.mrf.mxu0
        %v1594 = vadd.f32 %v1565, %v1593
        %1595 = vmatmul.f32.gmra.mxu0 %v1100
        %v1596 = vpop.f32.mrf.mxu0
        %v1597 = vadd.f32 %v1568, %v1596
        %1598 = vmatmul.f32.gmra.mxu0 %v1104
        %v1599 = vpop.f32.mrf.mxu0
        %v1600 = vadd.f32 %v1571, %v1599
        %1601 = vdwg.mxu0
        %1602 = vmatpush.msra.mxu0 %v1238
        %1603 = vmatpush.msra.mxu0 %v1230
        %1604 = vmatpush.msra.mxu0 %v1222
        %1605 = vmatpush.msra.mxu0 %v1214
        %1606 = vmatpush.msra.mxu0 %v1206
        %1607 = vmatpush.msra.mxu0 %v1198
        %1608 = vmatpush.msra.mxu0 %v1190
        %1609 = vmatpush.msra.mxu0 %v1182
        %1610 = vmatpush.msra.mxu0 %v1174
        %1611 = vmatpush.msra.mxu0 %v1166
        %1612 = vmatpush.msra.mxu0 %v1158
        %1613 = vmatpush.msra.mxu0 %v1150
        %1614 = vmatpush.msra.mxu0 %v1142
        %1615 = vmatpush.msra.mxu0 %v1134
        %1616 = vmatpush.msra.mxu0 %v1126
        %1617 = vmatpush.msra.mxu0 %v1118
        %1618 = vmatmul.f32.gmra.mxu0 %v1087
        %v1619 = vpop.f32.mrf.mxu0
        %v1620 = vadd.f32 0.0, %v1619
        %1621 = vmatmul.f32.gmra.mxu0 %v1092
        %v1622 = vpop.f32.mrf.mxu0
        %v1623 = vadd.f32 0.0, %v1622
        %1624 = vmatmul.f32.gmra.mxu0 %v1097
        %v1625 = vpop.f32.mrf.mxu0
        %v1626 = vadd.f32 0.0, %v1625
        %1627 = vmatmul.f32.gmra.mxu0 %v1102
        %v1628 = vpop.f32.mrf.mxu0
        %v1629 = vadd.f32 0.0, %v1628
        %1630 = vdwg.mxu0
        %1631 = vmatpush.msra.mxu0 %v1366
        %1632 = vmatpush.msra.mxu0 %v1358
        %1633 = vmatpush.msra.mxu0 %v1350
        %1634 = vmatpush.msra.mxu0 %v1342
        %1635 = vmatpush.msra.mxu0 %v1334
        %1636 = vmatpush.msra.mxu0 %v1326
        %1637 = vmatpush.msra.mxu0 %v1318
        %1638 = vmatpush.msra.mxu0 %v1310
        %1639 = vmatpush.msra.mxu0 %v1302
        %1640 = vmatpush.msra.mxu0 %v1294
        %1641 = vmatpush.msra.mxu0 %v1286
        %1642 = vmatpush.msra.mxu0 %v1278
        %1643 = vmatpush.msra.mxu0 %v1270
        %1644 = vmatpush.msra.mxu0 %v1262
        %1645 = vmatpush.msra.mxu0 %v1254
        %1646 = vmatpush.msra.mxu0 %v1246
        %1647 = vmatmul.f32.gmra.mxu0 %v1090
        %v1648 = vpop.f32.mrf.mxu0
        %v1649 = vadd.f32 %v1620, %v1648
        %1650 = vmatmul.f32.gmra.mxu0 %v1094
        %v1651 = vpop.f32.mrf.mxu0
        %v1652 = vadd.f32 %v1623, %v1651
        %1653 = vmatmul.f32.gmra.mxu0 %v1100
        %v1654 = vpop.f32.mrf.mxu0
        %v1655 = vadd.f32 %v1626, %v1654
        %1656 = vmatmul.f32.gmra.mxu0 %v1104
        %v1657 = vpop.f32.mrf.mxu0
        %v1658 = vadd.f32 %v1629, %v1657
        %1659 = vdwg.mxu0
        %1660 = vmatpush.msra.mxu0 %v1239
        %1661 = vmatpush.msra.mxu0 %v1231
        %1662 = vmatpush.msra.mxu0 %v1223
        %1663 = vmatpush.msra.mxu0 %v1215
        %1664 = vmatpush.msra.mxu0 %v1207
        %1665 = vmatpush.msra.mxu0 %v1199
        %1666 = vmatpush.msra.mxu0 %v1191
        %1667 = vmatpush.msra.mxu0 %v1183
        %1668 = vmatpush.msra.mxu0 %v1175
        %1669 = vmatpush.msra.mxu0 %v1167
        %1670 = vmatpush.msra.mxu0 %v1159
        %1671 = vmatpush.msra.mxu0 %v1151
        %1672 = vmatpush.msra.mxu0 %v1143
        %1673 = vmatpush.msra.mxu0 %v1135
        %1674 = vmatpush.msra.mxu0 %v1127
        %1675 = vmatpush.msra.mxu0 %v1119
        %1676 = vmatmul.f32.gmra.mxu0 %v1087
        %v1677 = vpop.f32.mrf.mxu0
        %v1678 = vadd.f32 0.0, %v1677
        %1679 = vmatmul.f32.gmra.mxu0 %v1092
        %v1680 = vpop.f32.mrf.mxu0
        %v1681 = vadd.f32 0.0, %v1680
        %1682 = vmatmul.f32.gmra.mxu0 %v1097
        %v1683 = vpop.f32.mrf.mxu0
        %v1684 = vadd.f32 0.0, %v1683
        %1685 = vmatmul.f32.gmra.mxu0 %v1102
        %v1686 = vpop.f32.mrf.mxu0
        %v1687 = vadd.f32 0.0, %v1686
        %1688 = vdwg.mxu0
        %1689 = vmatpush.msra.mxu0 %v1367
        %1690 = vmatpush.msra.mxu0 %v1359
        %1691 = vmatpush.msra.mxu0 %v1351
        %1692 = vmatpush.msra.mxu0 %v1343
        %1693 = vmatpush.msra.mxu0 %v1335
        %1694 = vmatpush.msra.mxu0 %v1327
        %1695 = vmatpush.msra.mxu0 %v1319
        %1696 = vmatpush.msra.mxu0 %v1311
        %1697 = vmatpush.msra.mxu0 %v1303
        %1698 = vmatpush.msra.mxu0 %v1295
        %1699 = vmatpush.msra.mxu0 %v1287
        %1700 = vmatpush.msra.mxu0 %v1279
        %1701 = vmatpush.msra.mxu0 %v1271
        %1702 = vmatpush.msra.mxu0 %v1263
        %1703 = vmatpush.msra.mxu0 %v1255
        %1704 = vmatpush.msra.mxu0 %v1247
        %1705 = vmatmul.f32.gmra.mxu0 %v1090
        %v1706 = vpop.f32.mrf.mxu0
        %v1707 = vadd.f32 %v1678, %v1706
        %1708 = vmatmul.f32.gmra.mxu0 %v1094
        %v1709 = vpop.f32.mrf.mxu0
        %v1710 = vadd.f32 %v1681, %v1709
        %1711 = vmatmul.f32.gmra.mxu0 %v1100
        %v1712 = vpop.f32.mrf.mxu0
        %v1713 = vadd.f32 %v1684, %v1712
        %1714 = vmatmul.f32.gmra.mxu0 %v1104
        %v1715 = vpop.f32.mrf.mxu0
        %v1716 = vadd.f32 %v1687, %v1715
        %1717 = vdwg.mxu0
        %1718 = vmatpush.msra.mxu0 %v1240
        %1719 = vmatpush.msra.mxu0 %v1232
        %1720 = vmatpush.msra.mxu0 %v1224
        %1721 = vmatpush.msra.mxu0 %v1216
        %1722 = vmatpush.msra.mxu0 %v1208
        %1723 = vmatpush.msra.mxu0 %v1200
        %1724 = vmatpush.msra.mxu0 %v1192
        %1725 = vmatpush.msra.mxu0 %v1184
        %1726 = vmatpush.msra.mxu0 %v1176
        %1727 = vmatpush.msra.mxu0 %v1168
        %1728 = vmatpush.msra.mxu0 %v1160
        %1729 = vmatpush.msra.mxu0 %v1152
        %1730 = vmatpush.msra.mxu0 %v1144
        %1731 = vmatpush.msra.mxu0 %v1136
        %1732 = vmatpush.msra.mxu0 %v1128
        %1733 = vmatpush.msra.mxu0 %v1120
        %1734 = vmatmul.f32.gmra.mxu0 %v1087
        %v1735 = vpop.f32.mrf.mxu0
        %v1736 = vadd.f32 0.0, %v1735
        %1737 = vmatmul.f32.gmra.mxu0 %v1092
        %v1738 = vpop.f32.mrf.mxu0
        %v1739 = vadd.f32 0.0, %v1738
        %1740 = vmatmul.f32.gmra.mxu0 %v1097
        %v1741 = vpop.f32.mrf.mxu0
        %v1742 = vadd.f32 0.0, %v1741
        %1743 = vmatmul.f32.gmra.mxu0 %v1102
        %v1744 = vpop.f32.mrf.mxu0
        %v1745 = vadd.f32 0.0, %v1744
        %1746 = vdwg.mxu0
        %1747 = vmatpush.msra.mxu0 %v1368
        %1748 = vmatpush.msra.mxu0 %v1360
        %1749 = vmatpush.msra.mxu0 %v1352
        %1750 = vmatpush.msra.mxu0 %v1344
        %1751 = vmatpush.msra.mxu0 %v1336
        %1752 = vmatpush.msra.mxu0 %v1328
        %1753 = vmatpush.msra.mxu0 %v1320
        %1754 = vmatpush.msra.mxu0 %v1312
        %1755 = vmatpush.msra.mxu0 %v1304
        %1756 = vmatpush.msra.mxu0 %v1296
        %1757 = vmatpush.msra.mxu0 %v1288
        %1758 = vmatpush.msra.mxu0 %v1280
        %1759 = vmatpush.msra.mxu0 %v1272
        %1760 = vmatpush.msra.mxu0 %v1264
        %1761 = vmatpush.msra.mxu0 %v1256
        %1762 = vmatpush.msra.mxu0 %v1248
        %1763 = vmatmul.f32.gmra.mxu0 %v1090
        %v1764 = vpop.f32.mrf.mxu0
        %v1765 = vadd.f32 %v1736, %v1764
        %1766 = vmatmul.f32.gmra.mxu0 %v1094
        %v1767 = vpop.f32.mrf.mxu0
        %v1768 = vadd.f32 %v1739, %v1767
        %1769 = vmatmul.f32.gmra.mxu0 %v1100
        %v1770 = vpop.f32.mrf.mxu0
        %v1771 = vadd.f32 %v1742, %v1770
        %1772 = vmatmul.f32.gmra.mxu0 %v1104
        %v1773 = vpop.f32.mrf.mxu0
        %v1774 = vadd.f32 %v1745, %v1773
        %1775 = vdwg.mxu0
        %1776 = vmatpush.msra.mxu0 %v1241
        %1777 = vmatpush.msra.mxu0 %v1233
        %1778 = vmatpush.msra.mxu0 %v1225
        %1779 = vmatpush.msra.mxu0 %v1217
        %1780 = vmatpush.msra.mxu0 %v1209
        %1781 = vmatpush.msra.mxu0 %v1201
        %1782 = vmatpush.msra.mxu0 %v1193
        %1783 = vmatpush.msra.mxu0 %v1185
        %1784 = vmatpush.msra.mxu0 %v1177
        %1785 = vmatpush.msra.mxu0 %v1169
        %1786 = vmatpush.msra.mxu0 %v1161
        %1787 = vmatpush.msra.mxu0 %v1153
        %1788 = vmatpush.msra.mxu0 %v1145
        %1789 = vmatpush.msra.mxu0 %v1137
        %1790 = vmatpush.msra.mxu0 %v1129
        %1791 = vmatpush.msra.mxu0 %v1121
        %1792 = vmatmul.f32.gmra.mxu0 %v1087
        %v1793 = vpop.f32.mrf.mxu0
        %v1794 = vadd.f32 0.0, %v1793
        %1795 = vmatmul.f32.gmra.mxu0 %v1092
        %v1796 = vpop.f32.mrf.mxu0
        %v1797 = vadd.f32 0.0, %v1796
        %1798 = vmatmul.f32.gmra.mxu0 %v1097
        %v1799 = vpop.f32.mrf.mxu0
        %v1800 = vadd.f32 0.0, %v1799
        %1801 = vmatmul.f32.gmra.mxu0 %v1102
        %v1802 = vpop.f32.mrf.mxu0
        %v1803 = vadd.f32 0.0, %v1802
        %1804 = vdwg.mxu0
        %1805 = vmatpush.msra.mxu0 %v1369
        %1806 = vmatpush.msra.mxu0 %v1361
        %1807 = vmatpush.msra.mxu0 %v1353
        %1808 = vmatpush.msra.mxu0 %v1345
        %1809 = vmatpush.msra.mxu0 %v1337
        %1810 = vmatpush.msra.mxu0 %v1329
        %1811 = vmatpush.msra.mxu0 %v1321
        %1812 = vmatpush.msra.mxu0 %v1313
        %1813 = vmatpush.msra.mxu0 %v1305
        %1814 = vmatpush.msra.mxu0 %v1297
        %1815 = vmatpush.msra.mxu0 %v1289
        %1816 = vmatpush.msra.mxu0 %v1281
        %1817 = vmatpush.msra.mxu0 %v1273
        %1818 = vmatpush.msra.mxu0 %v1265
        %1819 = vmatpush.msra.mxu0 %v1257
        %1820 = vmatpush.msra.mxu0 %v1249
        %1821 = vmatmul.f32.gmra.mxu0 %v1090
        %v1822 = vpop.f32.mrf.mxu0
        %v1823 = vadd.f32 %v1794, %v1822
        %1824 = vmatmul.f32.gmra.mxu0 %v1094
        %v1825 = vpop.f32.mrf.mxu0
        %v1826 = vadd.f32 %v1797, %v1825
        %1827 = vmatmul.f32.gmra.mxu0 %v1100
        %v1828 = vpop.f32.mrf.mxu0
        %v1829 = vadd.f32 %v1800, %v1828
        %1830 = vmatmul.f32.gmra.mxu0 %v1104
        %v1831 = vpop.f32.mrf.mxu0
        %v1832 = vadd.f32 %v1803, %v1831
        %1833 = vdwg.mxu0
        %v1834 = vadd.f32 %v1040, %v1417
        %v1835 = vadd.f32 %v1041, %v1475
        %v1836 = vadd.f32 %v1042, %v1533
        %v1837 = vadd.f32 %v1043, %v1591
        %v1838 = vadd.f32 %v1044, %v1649
        %v1839 = vadd.f32 %v1045, %v1707
        %v1840 = vadd.f32 %v1046, %v1765
        %v1841 = vadd.f32 %v1047, %v1823
        %v1842 = vadd.f32 %v1048, %v1420
        %v1843 = vadd.f32 %v1049, %v1478
        %v1844 = vadd.f32 %v1050, %v1536
        %v1845 = vadd.f32 %v1051, %v1594
        %v1846 = vadd.f32 %v1052, %v1652
        %v1847 = vadd.f32 %v1053, %v1710
        %v1848 = vadd.f32 %v1054, %v1768
        %v1849 = vadd.f32 %v1055, %v1826
        %v1850 = vadd.f32 %v1056, %v1423
        %v1851 = vadd.f32 %v1057, %v1481
        %v1852 = vadd.f32 %v1058, %v1539
        %v1853 = vadd.f32 %v1059, %v1597
        %v1854 = vadd.f32 %v1060, %v1655
        %v1855 = vadd.f32 %v1061, %v1713
        %v1856 = vadd.f32 %v1062, %v1771
        %v1857 = vadd.f32 %v1063, %v1829
        %v1858 = vadd.f32 %v1064, %v1426
        %v1859 = vadd.f32 %v1065, %v1484
        %v1860 = vadd.f32 %v1066, %v1542
        %v1861 = vadd.f32 %v1067, %v1600
        %v1862 = vadd.f32 %v1068, %v1658
        %v1863 = vadd.f32 %v1069, %v1716
        %v1864 = vadd.f32 %v1070, %v1774
        %v1865 = vadd.f32 %v1071, %v1832
        %vm1866 = vcmask 1045504
        %v1867 = vrot.slane %v308, 2
        %v1868 = vrot.slane %v310, 2
        %v1869 = vsel %vm1866, %v1867, %v1868
        %v1870 = vrot.slane %v309, 2
        %v1871 = vrot.slane %v311, 2
        %v1872 = vsel %vm1866, %v1870, %v1871
        %v1873 = vrot.slane %v312, 2
        %v1874 = vsel %vm1866, %v1868, %v1873
        %v1875 = vrot.slane %v313, 2
        %v1876 = vsel %vm1866, %v1871, %v1875
        %v1877 = vrot.slane %v314, 2
        %v1878 = vrot.slane %v316, 2
        %v1879 = vsel %vm1866, %v1877, %v1878
        %v1880 = vrot.slane %v315, 2
        %v1881 = vrot.slane %v317, 2
        %v1882 = vsel %vm1866, %v1880, %v1881
        %v1883 = vrot.slane %v318, 2
        %v1884 = vsel %vm1866, %v1878, %v1883
        %v1885 = vrot.slane %v319, 2
        %v1886 = vsel %vm1866, %v1881, %v1885
        %s1895 = scalar_lea.vmem %s217, 4096 [#allocation7]
        %v1896 = vld [vmem:[%s1895] sm:$0xff]
        %v1897 = vld [vmem:[%s1895 + $0x8] sm:$0xff]
        %v1898 = vld [vmem:[%s1895 + $0x10] sm:$0xff]
        %v1899 = vld [vmem:[%s1895 + $0x18] sm:$0xff]
        %v1900 = vld [vmem:[%s1895 + $0x20] sm:$0xff]
        %v1901 = vld [vmem:[%s1895 + $0x28] sm:$0xff]
        %v1902 = vld [vmem:[%s1895 + $0x30] sm:$0xff]
        %v1903 = vld [vmem:[%s1895 + $0x38] sm:$0xff]
        %v1904 = vld [vmem:[%s1895 + $0x40] sm:$0xff]
        %v1905 = vld [vmem:[%s1895 + $0x48] sm:$0xff]
        %v1906 = vld [vmem:[%s1895 + $0x50] sm:$0xff]
        %v1907 = vld [vmem:[%s1895 + $0x58] sm:$0xff]
        %v1908 = vld [vmem:[%s1895 + $0x60] sm:$0xff]
        %v1909 = vld [vmem:[%s1895 + $0x68] sm:$0xff]
        %v1910 = vld [vmem:[%s1895 + $0x70] sm:$0xff]
        %v1911 = vld [vmem:[%s1895 + $0x78] sm:$0xff]
        %v1912 = vld [vmem:[%s1895 + $0x80] sm:$0xff]
        %v1913 = vld [vmem:[%s1895 + $0x88] sm:$0xff]
        %v1914 = vld [vmem:[%s1895 + $0x90] sm:$0xff]
        %v1915 = vld [vmem:[%s1895 + $0x98] sm:$0xff]
        %v1916 = vld [vmem:[%s1895 + $0xa0] sm:$0xff]
        %v1917 = vld [vmem:[%s1895 + $0xa8] sm:$0xff]
        %v1918 = vld [vmem:[%s1895 + $0xb0] sm:$0xff]
        %v1919 = vld [vmem:[%s1895 + $0xb8] sm:$0xff]
        %v1920 = vld [vmem:[%s1895 + $0xc0] sm:$0xff]
        %v1921 = vld [vmem:[%s1895 + $0xc8] sm:$0xff]
        %v1922 = vld [vmem:[%s1895 + $0xd0] sm:$0xff]
        %v1923 = vld [vmem:[%s1895 + $0xd8] sm:$0xff]
        %v1924 = vld [vmem:[%s1895 + $0xe0] sm:$0xff]
        %v1925 = vld [vmem:[%s1895 + $0xe8] sm:$0xff]
        %v1926 = vld [vmem:[%s1895 + $0xf0] sm:$0xff]
        %v1927 = vld [vmem:[%s1895 + $0xf8] sm:$0xff]
        %v1928 = vld [vmem:[%s1895 + $0x100] sm:$0xff]
        %v1929 = vld [vmem:[%s1895 + $0x108] sm:$0xff]
        %v1930 = vld [vmem:[%s1895 + $0x110] sm:$0xff]
        %v1931 = vld [vmem:[%s1895 + $0x118] sm:$0xff]
        %v1932 = vld [vmem:[%s1895 + $0x120] sm:$0xff]
        %v1933 = vld [vmem:[%s1895 + $0x128] sm:$0xff]
        %v1934 = vld [vmem:[%s1895 + $0x130] sm:$0xff]
        %v1935 = vld [vmem:[%s1895 + $0x138] sm:$0xff]
        %v1936 = vld [vmem:[%s1895 + $0x140] sm:$0xff]
        %v1937 = vld [vmem:[%s1895 + $0x148] sm:$0xff]
        %v1938 = vld [vmem:[%s1895 + $0x150] sm:$0xff]
        %v1939 = vld [vmem:[%s1895 + $0x158] sm:$0xff]
        %v1940 = vld [vmem:[%s1895 + $0x160] sm:$0xff]
        %v1941 = vld [vmem:[%s1895 + $0x168] sm:$0xff]
        %v1942 = vld [vmem:[%s1895 + $0x170] sm:$0xff]
        %v1943 = vld [vmem:[%s1895 + $0x178] sm:$0xff]
        %v1944 = vld [vmem:[%s1895 + $0x180] sm:$0xff]
        %v1945 = vld [vmem:[%s1895 + $0x188] sm:$0xff]
        %v1946 = vld [vmem:[%s1895 + $0x190] sm:$0xff]
        %v1947 = vld [vmem:[%s1895 + $0x198] sm:$0xff]
        %v1948 = vld [vmem:[%s1895 + $0x1a0] sm:$0xff]
        %v1949 = vld [vmem:[%s1895 + $0x1a8] sm:$0xff]
        %v1950 = vld [vmem:[%s1895 + $0x1b0] sm:$0xff]
        %v1951 = vld [vmem:[%s1895 + $0x1b8] sm:$0xff]
        %v1952 = vld [vmem:[%s1895 + $0x1c0] sm:$0xff]
        %v1953 = vld [vmem:[%s1895 + $0x1c8] sm:$0xff]
        %v1954 = vld [vmem:[%s1895 + $0x1d0] sm:$0xff]
        %v1955 = vld [vmem:[%s1895 + $0x1d8] sm:$0xff]
        %v1956 = vld [vmem:[%s1895 + $0x1e0] sm:$0xff]
        %v1957 = vld [vmem:[%s1895 + $0x1e8] sm:$0xff]
        %v1958 = vld [vmem:[%s1895 + $0x1f0] sm:$0xff]
        %v1959 = vld [vmem:[%s1895 + $0x1f8] sm:$0xff]
        %v1960 = vld [vmem:[%s1895 + $0x200] sm:$0xff]
        %v1961 = vld [vmem:[%s1895 + $0x208] sm:$0xff]
        %v1962 = vld [vmem:[%s1895 + $0x210] sm:$0xff]
        %v1963 = vld [vmem:[%s1895 + $0x218] sm:$0xff]
        %v1964 = vld [vmem:[%s1895 + $0x220] sm:$0xff]
        %v1965 = vld [vmem:[%s1895 + $0x228] sm:$0xff]
        %v1966 = vld [vmem:[%s1895 + $0x230] sm:$0xff]
        %v1967 = vld [vmem:[%s1895 + $0x238] sm:$0xff]
        %v1968 = vld [vmem:[%s1895 + $0x240] sm:$0xff]
        %v1969 = vld [vmem:[%s1895 + $0x248] sm:$0xff]
        %v1970 = vld [vmem:[%s1895 + $0x250] sm:$0xff]
        %v1971 = vld [vmem:[%s1895 + $0x258] sm:$0xff]
        %v1972 = vld [vmem:[%s1895 + $0x260] sm:$0xff]
        %v1973 = vld [vmem:[%s1895 + $0x268] sm:$0xff]
        %v1974 = vld [vmem:[%s1895 + $0x270] sm:$0xff]
        %v1975 = vld [vmem:[%s1895 + $0x278] sm:$0xff]
        %v1976 = vld [vmem:[%s1895 + $0x280] sm:$0xff]
        %v1977 = vld [vmem:[%s1895 + $0x288] sm:$0xff]
        %v1978 = vld [vmem:[%s1895 + $0x290] sm:$0xff]
        %v1979 = vld [vmem:[%s1895 + $0x298] sm:$0xff]
        %v1980 = vld [vmem:[%s1895 + $0x2a0] sm:$0xff]
        %v1981 = vld [vmem:[%s1895 + $0x2a8] sm:$0xff]
        %v1982 = vld [vmem:[%s1895 + $0x2b0] sm:$0xff]
        %v1983 = vld [vmem:[%s1895 + $0x2b8] sm:$0xff]
        %v1984 = vld [vmem:[%s1895 + $0x2c0] sm:$0xff]
        %v1985 = vld [vmem:[%s1895 + $0x2c8] sm:$0xff]
        %v1986 = vld [vmem:[%s1895 + $0x2d0] sm:$0xff]
        %v1987 = vld [vmem:[%s1895 + $0x2d8] sm:$0xff]
        %v1988 = vld [vmem:[%s1895 + $0x2e0] sm:$0xff]
        %v1989 = vld [vmem:[%s1895 + $0x2e8] sm:$0xff]
        %v1990 = vld [vmem:[%s1895 + $0x2f0] sm:$0xff]
        %v1991 = vld [vmem:[%s1895 + $0x2f8] sm:$0xff]
        %v1992 = vld [vmem:[%s1895 + $0x300] sm:$0xff]
        %v1993 = vld [vmem:[%s1895 + $0x308] sm:$0xff]
        %v1994 = vld [vmem:[%s1895 + $0x310] sm:$0xff]
        %v1995 = vld [vmem:[%s1895 + $0x318] sm:$0xff]
        %v1996 = vld [vmem:[%s1895 + $0x320] sm:$0xff]
        %v1997 = vld [vmem:[%s1895 + $0x328] sm:$0xff]
        %v1998 = vld [vmem:[%s1895 + $0x330] sm:$0xff]
        %v1999 = vld [vmem:[%s1895 + $0x338] sm:$0xff]
        %v2000 = vld [vmem:[%s1895 + $0x340] sm:$0xff]
        %v2001 = vld [vmem:[%s1895 + $0x348] sm:$0xff]
        %v2002 = vld [vmem:[%s1895 + $0x350] sm:$0xff]
        %v2003 = vld [vmem:[%s1895 + $0x358] sm:$0xff]
        %v2004 = vld [vmem:[%s1895 + $0x360] sm:$0xff]
        %v2005 = vld [vmem:[%s1895 + $0x368] sm:$0xff]
        %v2006 = vld [vmem:[%s1895 + $0x370] sm:$0xff]
        %v2007 = vld [vmem:[%s1895 + $0x378] sm:$0xff]
        %v2008 = vld [vmem:[%s1895 + $0x380] sm:$0xff]
        %v2009 = vld [vmem:[%s1895 + $0x388] sm:$0xff]
        %v2010 = vld [vmem:[%s1895 + $0x390] sm:$0xff]
        %v2011 = vld [vmem:[%s1895 + $0x398] sm:$0xff]
        %v2012 = vld [vmem:[%s1895 + $0x3a0] sm:$0xff]
        %v2013 = vld [vmem:[%s1895 + $0x3a8] sm:$0xff]
        %v2014 = vld [vmem:[%s1895 + $0x3b0] sm:$0xff]
        %v2015 = vld [vmem:[%s1895 + $0x3b8] sm:$0xff]
        %v2016 = vld [vmem:[%s1895 + $0x3c0] sm:$0xff]
        %v2017 = vld [vmem:[%s1895 + $0x3c8] sm:$0xff]
        %v2018 = vld [vmem:[%s1895 + $0x3d0] sm:$0xff]
        %v2019 = vld [vmem:[%s1895 + $0x3d8] sm:$0xff]
        %v2020 = vld [vmem:[%s1895 + $0x3e0] sm:$0xff]
        %v2021 = vld [vmem:[%s1895 + $0x3e8] sm:$0xff]
        %v2022 = vld [vmem:[%s1895 + $0x3f0] sm:$0xff]
        %v2023 = vld [vmem:[%s1895 + $0x3f8] sm:$0xff]
        %v2024 = vld [vmem:[%s1895 + $0x400] sm:$0xff]
        %v2025 = vld [vmem:[%s1895 + $0x408] sm:$0xff]
        %v2026 = vld [vmem:[%s1895 + $0x410] sm:$0xff]
        %v2027 = vld [vmem:[%s1895 + $0x418] sm:$0xff]
        %v2028 = vld [vmem:[%s1895 + $0x420] sm:$0xff]
        %v2029 = vld [vmem:[%s1895 + $0x428] sm:$0xff]
        %v2030 = vld [vmem:[%s1895 + $0x430] sm:$0xff]
        %v2031 = vld [vmem:[%s1895 + $0x438] sm:$0xff]
        %v2032 = vld [vmem:[%s1895 + $0x440] sm:$0xff]
        %v2033 = vld [vmem:[%s1895 + $0x448] sm:$0xff]
        %v2034 = vld [vmem:[%s1895 + $0x450] sm:$0xff]
        %v2035 = vld [vmem:[%s1895 + $0x458] sm:$0xff]
        %v2036 = vld [vmem:[%s1895 + $0x460] sm:$0xff]
        %v2037 = vld [vmem:[%s1895 + $0x468] sm:$0xff]
        %v2038 = vld [vmem:[%s1895 + $0x470] sm:$0xff]
        %v2039 = vld [vmem:[%s1895 + $0x478] sm:$0xff]
        %v2040 = vld [vmem:[%s1895 + $0x480] sm:$0xff]
        %v2041 = vld [vmem:[%s1895 + $0x488] sm:$0xff]
        %v2042 = vld [vmem:[%s1895 + $0x490] sm:$0xff]
        %v2043 = vld [vmem:[%s1895 + $0x498] sm:$0xff]
        %v2044 = vld [vmem:[%s1895 + $0x4a0] sm:$0xff]
        %v2045 = vld [vmem:[%s1895 + $0x4a8] sm:$0xff]
        %v2046 = vld [vmem:[%s1895 + $0x4b0] sm:$0xff]
        %v2047 = vld [vmem:[%s1895 + $0x4b8] sm:$0xff]
        %v2048 = vld [vmem:[%s1895 + $0x4c0] sm:$0xff]
        %v2049 = vld [vmem:[%s1895 + $0x4c8] sm:$0xff]
        %v2050 = vld [vmem:[%s1895 + $0x4d0] sm:$0xff]
        %v2051 = vld [vmem:[%s1895 + $0x4d8] sm:$0xff]
        %v2052 = vld [vmem:[%s1895 + $0x4e0] sm:$0xff]
        %v2053 = vld [vmem:[%s1895 + $0x4e8] sm:$0xff]
        %v2054 = vld [vmem:[%s1895 + $0x4f0] sm:$0xff]
        %v2055 = vld [vmem:[%s1895 + $0x4f8] sm:$0xff]
        %v2056 = vld [vmem:[%s1895 + $0x500] sm:$0xff]
        %v2057 = vld [vmem:[%s1895 + $0x508] sm:$0xff]
        %v2058 = vld [vmem:[%s1895 + $0x510] sm:$0xff]
        %v2059 = vld [vmem:[%s1895 + $0x518] sm:$0xff]
        %v2060 = vld [vmem:[%s1895 + $0x520] sm:$0xff]
        %v2061 = vld [vmem:[%s1895 + $0x528] sm:$0xff]
        %v2062 = vld [vmem:[%s1895 + $0x530] sm:$0xff]
        %v2063 = vld [vmem:[%s1895 + $0x538] sm:$0xff]
        %v2064 = vld [vmem:[%s1895 + $0x540] sm:$0xff]
        %v2065 = vld [vmem:[%s1895 + $0x548] sm:$0xff]
        %v2066 = vld [vmem:[%s1895 + $0x550] sm:$0xff]
        %v2067 = vld [vmem:[%s1895 + $0x558] sm:$0xff]
        %v2068 = vld [vmem:[%s1895 + $0x560] sm:$0xff]
        %v2069 = vld [vmem:[%s1895 + $0x568] sm:$0xff]
        %v2070 = vld [vmem:[%s1895 + $0x570] sm:$0xff]
        %v2071 = vld [vmem:[%s1895 + $0x578] sm:$0xff]
        %v2072 = vld [vmem:[%s1895 + $0x580] sm:$0xff]
        %v2073 = vld [vmem:[%s1895 + $0x588] sm:$0xff]
        %v2074 = vld [vmem:[%s1895 + $0x590] sm:$0xff]
        %v2075 = vld [vmem:[%s1895 + $0x598] sm:$0xff]
        %v2076 = vld [vmem:[%s1895 + $0x5a0] sm:$0xff]
        %v2077 = vld [vmem:[%s1895 + $0x5a8] sm:$0xff]
        %v2078 = vld [vmem:[%s1895 + $0x5b0] sm:$0xff]
        %v2079 = vld [vmem:[%s1895 + $0x5b8] sm:$0xff]
        %v2080 = vld [vmem:[%s1895 + $0x5c0] sm:$0xff]
        %v2081 = vld [vmem:[%s1895 + $0x5c8] sm:$0xff]
        %v2082 = vld [vmem:[%s1895 + $0x5d0] sm:$0xff]
        %v2083 = vld [vmem:[%s1895 + $0x5d8] sm:$0xff]
        %v2084 = vld [vmem:[%s1895 + $0x5e0] sm:$0xff]
        %v2085 = vld [vmem:[%s1895 + $0x5e8] sm:$0xff]
        %v2086 = vld [vmem:[%s1895 + $0x5f0] sm:$0xff]
        %v2087 = vld [vmem:[%s1895 + $0x5f8] sm:$0xff]
        %v2088 = vld [vmem:[%s1895 + $0x600] sm:$0xff]
        %v2089 = vld [vmem:[%s1895 + $0x608] sm:$0xff]
        %v2090 = vld [vmem:[%s1895 + $0x610] sm:$0xff]
        %v2091 = vld [vmem:[%s1895 + $0x618] sm:$0xff]
        %v2092 = vld [vmem:[%s1895 + $0x620] sm:$0xff]
        %v2093 = vld [vmem:[%s1895 + $0x628] sm:$0xff]
        %v2094 = vld [vmem:[%s1895 + $0x630] sm:$0xff]
        %v2095 = vld [vmem:[%s1895 + $0x638] sm:$0xff]
        %v2096 = vld [vmem:[%s1895 + $0x640] sm:$0xff]
        %v2097 = vld [vmem:[%s1895 + $0x648] sm:$0xff]
        %v2098 = vld [vmem:[%s1895 + $0x650] sm:$0xff]
        %v2099 = vld [vmem:[%s1895 + $0x658] sm:$0xff]
        %v2100 = vld [vmem:[%s1895 + $0x660] sm:$0xff]
        %v2101 = vld [vmem:[%s1895 + $0x668] sm:$0xff]
        %v2102 = vld [vmem:[%s1895 + $0x670] sm:$0xff]
        %v2103 = vld [vmem:[%s1895 + $0x678] sm:$0xff]
        %v2104 = vld [vmem:[%s1895 + $0x680] sm:$0xff]
        %v2105 = vld [vmem:[%s1895 + $0x688] sm:$0xff]
        %v2106 = vld [vmem:[%s1895 + $0x690] sm:$0xff]
        %v2107 = vld [vmem:[%s1895 + $0x698] sm:$0xff]
        %v2108 = vld [vmem:[%s1895 + $0x6a0] sm:$0xff]
        %v2109 = vld [vmem:[%s1895 + $0x6a8] sm:$0xff]
        %v2110 = vld [vmem:[%s1895 + $0x6b0] sm:$0xff]
        %v2111 = vld [vmem:[%s1895 + $0x6b8] sm:$0xff]
        %v2112 = vld [vmem:[%s1895 + $0x6c0] sm:$0xff]
        %v2113 = vld [vmem:[%s1895 + $0x6c8] sm:$0xff]
        %v2114 = vld [vmem:[%s1895 + $0x6d0] sm:$0xff]
        %v2115 = vld [vmem:[%s1895 + $0x6d8] sm:$0xff]
        %v2116 = vld [vmem:[%s1895 + $0x6e0] sm:$0xff]
        %v2117 = vld [vmem:[%s1895 + $0x6e8] sm:$0xff]
        %v2118 = vld [vmem:[%s1895 + $0x6f0] sm:$0xff]
        %v2119 = vld [vmem:[%s1895 + $0x6f8] sm:$0xff]
        %v2120 = vld [vmem:[%s1895 + $0x700] sm:$0xff]
        %v2121 = vld [vmem:[%s1895 + $0x708] sm:$0xff]
        %v2122 = vld [vmem:[%s1895 + $0x710] sm:$0xff]
        %v2123 = vld [vmem:[%s1895 + $0x718] sm:$0xff]
        %v2124 = vld [vmem:[%s1895 + $0x720] sm:$0xff]
        %v2125 = vld [vmem:[%s1895 + $0x728] sm:$0xff]
        %v2126 = vld [vmem:[%s1895 + $0x730] sm:$0xff]
        %v2127 = vld [vmem:[%s1895 + $0x738] sm:$0xff]
        %v2128 = vld [vmem:[%s1895 + $0x740] sm:$0xff]
        %v2129 = vld [vmem:[%s1895 + $0x748] sm:$0xff]
        %v2130 = vld [vmem:[%s1895 + $0x750] sm:$0xff]
        %v2131 = vld [vmem:[%s1895 + $0x758] sm:$0xff]
        %v2132 = vld [vmem:[%s1895 + $0x760] sm:$0xff]
        %v2133 = vld [vmem:[%s1895 + $0x768] sm:$0xff]
        %v2134 = vld [vmem:[%s1895 + $0x770] sm:$0xff]
        %v2135 = vld [vmem:[%s1895 + $0x778] sm:$0xff]
        %v2136 = vld [vmem:[%s1895 + $0x780] sm:$0xff]
        %v2137 = vld [vmem:[%s1895 + $0x788] sm:$0xff]
        %v2138 = vld [vmem:[%s1895 + $0x790] sm:$0xff]
        %v2139 = vld [vmem:[%s1895 + $0x798] sm:$0xff]
        %v2140 = vld [vmem:[%s1895 + $0x7a0] sm:$0xff]
        %v2141 = vld [vmem:[%s1895 + $0x7a8] sm:$0xff]
        %v2142 = vld [vmem:[%s1895 + $0x7b0] sm:$0xff]
        %v2143 = vld [vmem:[%s1895 + $0x7b8] sm:$0xff]
        %v2144 = vld [vmem:[%s1895 + $0x7c0] sm:$0xff]
        %v2145 = vld [vmem:[%s1895 + $0x7c8] sm:$0xff]
        %v2146 = vld [vmem:[%s1895 + $0x7d0] sm:$0xff]
        %v2147 = vld [vmem:[%s1895 + $0x7d8] sm:$0xff]
        %v2148 = vld [vmem:[%s1895 + $0x7e0] sm:$0xff]
        %v2149 = vld [vmem:[%s1895 + $0x7e8] sm:$0xff]
        %v2150 = vld [vmem:[%s1895 + $0x7f0] sm:$0xff]
        %v2151 = vld [vmem:[%s1895 + $0x7f8] sm:$0xff]
        %2152 = vmatpush.msra.mxu0 %v2016
        %2153 = vmatpush.msra.mxu0 %v2008
        %2154 = vmatpush.msra.mxu0 %v2000
        %2155 = vmatpush.msra.mxu0 %v1992
        %2156 = vmatpush.msra.mxu0 %v1984
        %2157 = vmatpush.msra.mxu0 %v1976
        %2158 = vmatpush.msra.mxu0 %v1968
        %2159 = vmatpush.msra.mxu0 %v1960
        %2160 = vmatpush.msra.mxu0 %v1952
        %2161 = vmatpush.msra.mxu0 %v1944
        %2162 = vmatpush.msra.mxu0 %v1936
        %2163 = vmatpush.msra.mxu0 %v1928
        %2164 = vmatpush.msra.mxu0 %v1920
        %2165 = vmatpush.msra.mxu0 %v1912
        %2166 = vmatpush.msra.mxu0 %v1904
        %2167 = vmatpush.msra.mxu0 %v1896
        %2168 = vmatmul.f32.gmra.mxu0 %v1869
        %v2169 = vpop.f32.mrf.mxu0
        %v2170 = vadd.f32 0.0, %v2169
        %2171 = vmatmul.f32.gmra.mxu0 %v1874
        %v2172 = vpop.f32.mrf.mxu0
        %v2173 = vadd.f32 0.0, %v2172
        %2174 = vmatmul.f32.gmra.mxu0 %v1879
        %v2175 = vpop.f32.mrf.mxu0
        %v2176 = vadd.f32 0.0, %v2175
        %2177 = vmatmul.f32.gmra.mxu0 %v1884
        %v2178 = vpop.f32.mrf.mxu0
        %v2179 = vadd.f32 0.0, %v2178
        %2180 = vdwg.mxu0
        %2181 = vmatpush.msra.mxu0 %v2144
        %2182 = vmatpush.msra.mxu0 %v2136
        %2183 = vmatpush.msra.mxu0 %v2128
        %2184 = vmatpush.msra.mxu0 %v2120
        %2185 = vmatpush.msra.mxu0 %v2112
        %2186 = vmatpush.msra.mxu0 %v2104
        %2187 = vmatpush.msra.mxu0 %v2096
        %2188 = vmatpush.msra.mxu0 %v2088
        %2189 = vmatpush.msra.mxu0 %v2080
        %2190 = vmatpush.msra.mxu0 %v2072
        %2191 = vmatpush.msra.mxu0 %v2064
        %2192 = vmatpush.msra.mxu0 %v2056
        %2193 = vmatpush.msra.mxu0 %v2048
        %2194 = vmatpush.msra.mxu0 %v2040
        %2195 = vmatpush.msra.mxu0 %v2032
        %2196 = vmatpush.msra.mxu0 %v2024
        %2197 = vmatmul.f32.gmra.mxu0 %v1872
        %v2198 = vpop.f32.mrf.mxu0
        %v2199 = vadd.f32 %v2170, %v2198
        %2200 = vmatmul.f32.gmra.mxu0 %v1876
        %v2201 = vpop.f32.mrf.mxu0
        %v2202 = vadd.f32 %v2173, %v2201
        %2203 = vmatmul.f32.gmra.mxu0 %v1882
        %v2204 = vpop.f32.mrf.mxu0
        %v2205 = vadd.f32 %v2176, %v2204
        %2206 = vmatmul.f32.gmra.mxu0 %v1886
        %v2207 = vpop.f32.mrf.mxu0
        %v2208 = vadd.f32 %v2179, %v2207
        %2209 = vdwg.mxu0
        %2210 = vmatpush.msra.mxu0 %v2017
        %2211 = vmatpush.msra.mxu0 %v2009
        %2212 = vmatpush.msra.mxu0 %v2001
        %2213 = vmatpush.msra.mxu0 %v1993
        %2214 = vmatpush.msra.mxu0 %v1985
        %2215 = vmatpush.msra.mxu0 %v1977
        %2216 = vmatpush.msra.mxu0 %v1969
        %2217 = vmatpush.msra.mxu0 %v1961
        %2218 = vmatpush.msra.mxu0 %v1953
        %2219 = vmatpush.msra.mxu0 %v1945
        %2220 = vmatpush.msra.mxu0 %v1937
        %2221 = vmatpush.msra.mxu0 %v1929
        %2222 = vmatpush.msra.mxu0 %v1921
        %2223 = vmatpush.msra.mxu0 %v1913
        %2224 = vmatpush.msra.mxu0 %v1905
        %2225 = vmatpush.msra.mxu0 %v1897
        %2226 = vmatmul.f32.gmra.mxu0 %v1869
        %v2227 = vpop.f32.mrf.mxu0
        %v2228 = vadd.f32 0.0, %v2227
        %2229 = vmatmul.f32.gmra.mxu0 %v1874
        %v2230 = vpop.f32.mrf.mxu0
        %v2231 = vadd.f32 0.0, %v2230
        %2232 = vmatmul.f32.gmra.mxu0 %v1879
        %v2233 = vpop.f32.mrf.mxu0
        %v2234 = vadd.f32 0.0, %v2233
        %2235 = vmatmul.f32.gmra.mxu0 %v1884
        %v2236 = vpop.f32.mrf.mxu0
        %v2237 = vadd.f32 0.0, %v2236
        %2238 = vdwg.mxu0
        %2239 = vmatpush.msra.mxu0 %v2145
        %2240 = vmatpush.msra.mxu0 %v2137
        %2241 = vmatpush.msra.mxu0 %v2129
        %2242 = vmatpush.msra.mxu0 %v2121
        %2243 = vmatpush.msra.mxu0 %v2113
        %2244 = vmatpush.msra.mxu0 %v2105
        %2245 = vmatpush.msra.mxu0 %v2097
        %2246 = vmatpush.msra.mxu0 %v2089
        %2247 = vmatpush.msra.mxu0 %v2081
        %2248 = vmatpush.msra.mxu0 %v2073
        %2249 = vmatpush.msra.mxu0 %v2065
        %2250 = vmatpush.msra.mxu0 %v2057
        %2251 = vmatpush.msra.mxu0 %v2049
        %2252 = vmatpush.msra.mxu0 %v2041
        %2253 = vmatpush.msra.mxu0 %v2033
        %2254 = vmatpush.msra.mxu0 %v2025
        %2255 = vmatmul.f32.gmra.mxu0 %v1872
        %v2256 = vpop.f32.mrf.mxu0
        %v2257 = vadd.f32 %v2228, %v2256
        %2258 = vmatmul.f32.gmra.mxu0 %v1876
        %v2259 = vpop.f32.mrf.mxu0
        %v2260 = vadd.f32 %v2231, %v2259
        %2261 = vmatmul.f32.gmra.mxu0 %v1882
        %v2262 = vpop.f32.mrf.mxu0
        %v2263 = vadd.f32 %v2234, %v2262
        %2264 = vmatmul.f32.gmra.mxu0 %v1886
        %v2265 = vpop.f32.mrf.mxu0
        %v2266 = vadd.f32 %v2237, %v2265
        %2267 = vdwg.mxu0
        %2268 = vmatpush.msra.mxu0 %v2018
        %2269 = vmatpush.msra.mxu0 %v2010
        %2270 = vmatpush.msra.mxu0 %v2002
        %2271 = vmatpush.msra.mxu0 %v1994
        %2272 = vmatpush.msra.mxu0 %v1986
        %2273 = vmatpush.msra.mxu0 %v1978
        %2274 = vmatpush.msra.mxu0 %v1970
        %2275 = vmatpush.msra.mxu0 %v1962
        %2276 = vmatpush.msra.mxu0 %v1954
        %2277 = vmatpush.msra.mxu0 %v1946
        %2278 = vmatpush.msra.mxu0 %v1938
        %2279 = vmatpush.msra.mxu0 %v1930
        %2280 = vmatpush.msra.mxu0 %v1922
        %2281 = vmatpush.msra.mxu0 %v1914
        %2282 = vmatpush.msra.mxu0 %v1906
        %2283 = vmatpush.msra.mxu0 %v1898
        %2284 = vmatmul.f32.gmra.mxu0 %v1869
        %v2285 = vpop.f32.mrf.mxu0
        %v2286 = vadd.f32 0.0, %v2285
        %2287 = vmatmul.f32.gmra.mxu0 %v1874
        %v2288 = vpop.f32.mrf.mxu0
        %v2289 = vadd.f32 0.0, %v2288
        %2290 = vmatmul.f32.gmra.mxu0 %v1879
        %v2291 = vpop.f32.mrf.mxu0
        %v2292 = vadd.f32 0.0, %v2291
        %2293 = vmatmul.f32.gmra.mxu0 %v1884
        %v2294 = vpop.f32.mrf.mxu0
        %v2295 = vadd.f32 0.0, %v2294
        %2296 = vdwg.mxu0
        %2297 = vmatpush.msra.mxu0 %v2146
        %2298 = vmatpush.msra.mxu0 %v2138
        %2299 = vmatpush.msra.mxu0 %v2130
        %2300 = vmatpush.msra.mxu0 %v2122
        %2301 = vmatpush.msra.mxu0 %v2114
        %2302 = vmatpush.msra.mxu0 %v2106
        %2303 = vmatpush.msra.mxu0 %v2098
        %2304 = vmatpush.msra.mxu0 %v2090
        %2305 = vmatpush.msra.mxu0 %v2082
        %2306 = vmatpush.msra.mxu0 %v2074
        %2307 = vmatpush.msra.mxu0 %v2066
        %2308 = vmatpush.msra.mxu0 %v2058
        %2309 = vmatpush.msra.mxu0 %v2050
        %2310 = vmatpush.msra.mxu0 %v2042
        %2311 = vmatpush.msra.mxu0 %v2034
        %2312 = vmatpush.msra.mxu0 %v2026
        %2313 = vmatmul.f32.gmra.mxu0 %v1872
        %v2314 = vpop.f32.mrf.mxu0
        %v2315 = vadd.f32 %v2286, %v2314
        %2316 = vmatmul.f32.gmra.mxu0 %v1876
        %v2317 = vpop.f32.mrf.mxu0
        %v2318 = vadd.f32 %v2289, %v2317
        %2319 = vmatmul.f32.gmra.mxu0 %v1882
        %v2320 = vpop.f32.mrf.mxu0
        %v2321 = vadd.f32 %v2292, %v2320
        %2322 = vmatmul.f32.gmra.mxu0 %v1886
        %v2323 = vpop.f32.mrf.mxu0
        %v2324 = vadd.f32 %v2295, %v2323
        %2325 = vdwg.mxu0
        %2326 = vmatpush.msra.mxu0 %v2019
        %2327 = vmatpush.msra.mxu0 %v2011
        %2328 = vmatpush.msra.mxu0 %v2003
        %2329 = vmatpush.msra.mxu0 %v1995
        %2330 = vmatpush.msra.mxu0 %v1987
        %2331 = vmatpush.msra.mxu0 %v1979
        %2332 = vmatpush.msra.mxu0 %v1971
        %2333 = vmatpush.msra.mxu0 %v1963
        %2334 = vmatpush.msra.mxu0 %v1955
        %2335 = vmatpush.msra.mxu0 %v1947
        %2336 = vmatpush.msra.mxu0 %v1939
        %2337 = vmatpush.msra.mxu0 %v1931
        %2338 = vmatpush.msra.mxu0 %v1923
        %2339 = vmatpush.msra.mxu0 %v1915
        %2340 = vmatpush.msra.mxu0 %v1907
        %2341 = vmatpush.msra.mxu0 %v1899
        %2342 = vmatmul.f32.gmra.mxu0 %v1869
        %v2343 = vpop.f32.mrf.mxu0
        %v2344 = vadd.f32 0.0, %v2343
        %2345 = vmatmul.f32.gmra.mxu0 %v1874
        %v2346 = vpop.f32.mrf.mxu0
        %v2347 = vadd.f32 0.0, %v2346
        %2348 = vmatmul.f32.gmra.mxu0 %v1879
        %v2349 = vpop.f32.mrf.mxu0
        %v2350 = vadd.f32 0.0, %v2349
        %2351 = vmatmul.f32.gmra.mxu0 %v1884
        %v2352 = vpop.f32.mrf.mxu0
        %v2353 = vadd.f32 0.0, %v2352
        %2354 = vdwg.mxu0
        %2355 = vmatpush.msra.mxu0 %v2147
        %2356 = vmatpush.msra.mxu0 %v2139
        %2357 = vmatpush.msra.mxu0 %v2131
        %2358 = vmatpush.msra.mxu0 %v2123
        %2359 = vmatpush.msra.mxu0 %v2115
        %2360 = vmatpush.msra.mxu0 %v2107
        %2361 = vmatpush.msra.mxu0 %v2099
        %2362 = vmatpush.msra.mxu0 %v2091
        %2363 = vmatpush.msra.mxu0 %v2083
        %2364 = vmatpush.msra.mxu0 %v2075
        %2365 = vmatpush.msra.mxu0 %v2067
        %2366 = vmatpush.msra.mxu0 %v2059
        %2367 = vmatpush.msra.mxu0 %v2051
        %2368 = vmatpush.msra.mxu0 %v2043
        %2369 = vmatpush.msra.mxu0 %v2035
        %2370 = vmatpush.msra.mxu0 %v2027
        %2371 = vmatmul.f32.gmra.mxu0 %v1872
        %v2372 = vpop.f32.mrf.mxu0
        %v2373 = vadd.f32 %v2344, %v2372
        %2374 = vmatmul.f32.gmra.mxu0 %v1876
        %v2375 = vpop.f32.mrf.mxu0
        %v2376 = vadd.f32 %v2347, %v2375
        %2377 = vmatmul.f32.gmra.mxu0 %v1882
        %v2378 = vpop.f32.mrf.mxu0
        %v2379 = vadd.f32 %v2350, %v2378
        %2380 = vmatmul.f32.gmra.mxu0 %v1886
        %v2381 = vpop.f32.mrf.mxu0
        %v2382 = vadd.f32 %v2353, %v2381
        %2383 = vdwg.mxu0
        %2384 = vmatpush.msra.mxu0 %v2020
        %2385 = vmatpush.msra.mxu0 %v2012
        %2386 = vmatpush.msra.mxu0 %v2004
        %2387 = vmatpush.msra.mxu0 %v1996
        %2388 = vmatpush.msra.mxu0 %v1988
        %2389 = vmatpush.msra.mxu0 %v1980
        %2390 = vmatpush.msra.mxu0 %v1972
        %2391 = vmatpush.msra.mxu0 %v1964
        %2392 = vmatpush.msra.mxu0 %v1956
        %2393 = vmatpush.msra.mxu0 %v1948
        %2394 = vmatpush.msra.mxu0 %v1940
        %2395 = vmatpush.msra.mxu0 %v1932
        %2396 = vmatpush.msra.mxu0 %v1924
        %2397 = vmatpush.msra.mxu0 %v1916
        %2398 = vmatpush.msra.mxu0 %v1908
        %2399 = vmatpush.msra.mxu0 %v1900
        %2400 = vmatmul.f32.gmra.mxu0 %v1869
        %v2401 = vpop.f32.mrf.mxu0
        %v2402 = vadd.f32 0.0, %v2401
        %2403 = vmatmul.f32.gmra.mxu0 %v1874
        %v2404 = vpop.f32.mrf.mxu0
        %v2405 = vadd.f32 0.0, %v2404
        %2406 = vmatmul.f32.gmra.mxu0 %v1879
        %v2407 = vpop.f32.mrf.mxu0
        %v2408 = vadd.f32 0.0, %v2407
        %2409 = vmatmul.f32.gmra.mxu0 %v1884
        %v2410 = vpop.f32.mrf.mxu0
        %v2411 = vadd.f32 0.0, %v2410
        %2412 = vdwg.mxu0
        %2413 = vmatpush.msra.mxu0 %v2148
        %2414 = vmatpush.msra.mxu0 %v2140
        %2415 = vmatpush.msra.mxu0 %v2132
        %2416 = vmatpush.msra.mxu0 %v2124
        %2417 = vmatpush.msra.mxu0 %v2116
        %2418 = vmatpush.msra.mxu0 %v2108
        %2419 = vmatpush.msra.mxu0 %v2100
        %2420 = vmatpush.msra.mxu0 %v2092
        %2421 = vmatpush.msra.mxu0 %v2084
        %2422 = vmatpush.msra.mxu0 %v2076
        %2423 = vmatpush.msra.mxu0 %v2068
        %2424 = vmatpush.msra.mxu0 %v2060
        %2425 = vmatpush.msra.mxu0 %v2052
        %2426 = vmatpush.msra.mxu0 %v2044
        %2427 = vmatpush.msra.mxu0 %v2036
        %2428 = vmatpush.msra.mxu0 %v2028
        %2429 = vmatmul.f32.gmra.mxu0 %v1872
        %v2430 = vpop.f32.mrf.mxu0
        %v2431 = vadd.f32 %v2402, %v2430
        %2432 = vmatmul.f32.gmra.mxu0 %v1876
        %v2433 = vpop.f32.mrf.mxu0
        %v2434 = vadd.f32 %v2405, %v2433
        %2435 = vmatmul.f32.gmra.mxu0 %v1882
        %v2436 = vpop.f32.mrf.mxu0
        %v2437 = vadd.f32 %v2408, %v2436
        %2438 = vmatmul.f32.gmra.mxu0 %v1886
        %v2439 = vpop.f32.mrf.mxu0
        %v2440 = vadd.f32 %v2411, %v2439
        %2441 = vdwg.mxu0
        %2442 = vmatpush.msra.mxu0 %v2021
        %2443 = vmatpush.msra.mxu0 %v2013
        %2444 = vmatpush.msra.mxu0 %v2005
        %2445 = vmatpush.msra.mxu0 %v1997
        %2446 = vmatpush.msra.mxu0 %v1989
        %2447 = vmatpush.msra.mxu0 %v1981
        %2448 = vmatpush.msra.mxu0 %v1973
        %2449 = vmatpush.msra.mxu0 %v1965
        %2450 = vmatpush.msra.mxu0 %v1957
        %2451 = vmatpush.msra.mxu0 %v1949
        %2452 = vmatpush.msra.mxu0 %v1941
        %2453 = vmatpush.msra.mxu0 %v1933
        %2454 = vmatpush.msra.mxu0 %v1925
        %2455 = vmatpush.msra.mxu0 %v1917
        %2456 = vmatpush.msra.mxu0 %v1909
        %2457 = vmatpush.msra.mxu0 %v1901
        %2458 = vmatmul.f32.gmra.mxu0 %v1869
        %v2459 = vpop.f32.mrf.mxu0
        %v2460 = vadd.f32 0.0, %v2459
        %2461 = vmatmul.f32.gmra.mxu0 %v1874
        %v2462 = vpop.f32.mrf.mxu0
        %v2463 = vadd.f32 0.0, %v2462
        %2464 = vmatmul.f32.gmra.mxu0 %v1879
        %v2465 = vpop.f32.mrf.mxu0
        %v2466 = vadd.f32 0.0, %v2465
        %2467 = vmatmul.f32.gmra.mxu0 %v1884
        %v2468 = vpop.f32.mrf.mxu0
        %v2469 = vadd.f32 0.0, %v2468
        %2470 = vdwg.mxu0
        %2471 = vmatpush.msra.mxu0 %v2149
        %2472 = vmatpush.msra.mxu0 %v2141
        %2473 = vmatpush.msra.mxu0 %v2133
        %2474 = vmatpush.msra.mxu0 %v2125
        %2475 = vmatpush.msra.mxu0 %v2117
        %2476 = vmatpush.msra.mxu0 %v2109
        %2477 = vmatpush.msra.mxu0 %v2101
        %2478 = vmatpush.msra.mxu0 %v2093
        %2479 = vmatpush.msra.mxu0 %v2085
        %2480 = vmatpush.msra.mxu0 %v2077
        %2481 = vmatpush.msra.mxu0 %v2069
        %2482 = vmatpush.msra.mxu0 %v2061
        %2483 = vmatpush.msra.mxu0 %v2053
        %2484 = vmatpush.msra.mxu0 %v2045
        %2485 = vmatpush.msra.mxu0 %v2037
        %2486 = vmatpush.msra.mxu0 %v2029
        %2487 = vmatmul.f32.gmra.mxu0 %v1872
        %v2488 = vpop.f32.mrf.mxu0
        %v2489 = vadd.f32 %v2460, %v2488
        %2490 = vmatmul.f32.gmra.mxu0 %v1876
        %v2491 = vpop.f32.mrf.mxu0
        %v2492 = vadd.f32 %v2463, %v2491
        %2493 = vmatmul.f32.gmra.mxu0 %v1882
        %v2494 = vpop.f32.mrf.mxu0
        %v2495 = vadd.f32 %v2466, %v2494
        %2496 = vmatmul.f32.gmra.mxu0 %v1886
        %v2497 = vpop.f32.mrf.mxu0
        %v2498 = vadd.f32 %v2469, %v2497
        %2499 = vdwg.mxu0
        %2500 = vmatpush.msra.mxu0 %v2022
        %2501 = vmatpush.msra.mxu0 %v2014
        %2502 = vmatpush.msra.mxu0 %v2006
        %2503 = vmatpush.msra.mxu0 %v1998
        %2504 = vmatpush.msra.mxu0 %v1990
        %2505 = vmatpush.msra.mxu0 %v1982
        %2506 = vmatpush.msra.mxu0 %v1974
        %2507 = vmatpush.msra.mxu0 %v1966
        %2508 = vmatpush.msra.mxu0 %v1958
        %2509 = vmatpush.msra.mxu0 %v1950
        %2510 = vmatpush.msra.mxu0 %v1942
        %2511 = vmatpush.msra.mxu0 %v1934
        %2512 = vmatpush.msra.mxu0 %v1926
        %2513 = vmatpush.msra.mxu0 %v1918
        %2514 = vmatpush.msra.mxu0 %v1910
        %2515 = vmatpush.msra.mxu0 %v1902
        %2516 = vmatmul.f32.gmra.mxu0 %v1869
        %v2517 = vpop.f32.mrf.mxu0
        %v2518 = vadd.f32 0.0, %v2517
        %2519 = vmatmul.f32.gmra.mxu0 %v1874
        %v2520 = vpop.f32.mrf.mxu0
        %v2521 = vadd.f32 0.0, %v2520
        %2522 = vmatmul.f32.gmra.mxu0 %v1879
        %v2523 = vpop.f32.mrf.mxu0
        %v2524 = vadd.f32 0.0, %v2523
        %2525 = vmatmul.f32.gmra.mxu0 %v1884
        %v2526 = vpop.f32.mrf.mxu0
        %v2527 = vadd.f32 0.0, %v2526
        %2528 = vdwg.mxu0
        %2529 = vmatpush.msra.mxu0 %v2150
        %2530 = vmatpush.msra.mxu0 %v2142
        %2531 = vmatpush.msra.mxu0 %v2134
        %2532 = vmatpush.msra.mxu0 %v2126
        %2533 = vmatpush.msra.mxu0 %v2118
        %2534 = vmatpush.msra.mxu0 %v2110
        %2535 = vmatpush.msra.mxu0 %v2102
        %2536 = vmatpush.msra.mxu0 %v2094
        %2537 = vmatpush.msra.mxu0 %v2086
        %2538 = vmatpush.msra.mxu0 %v2078
        %2539 = vmatpush.msra.mxu0 %v2070
        %2540 = vmatpush.msra.mxu0 %v2062
        %2541 = vmatpush.msra.mxu0 %v2054
        %2542 = vmatpush.msra.mxu0 %v2046
        %2543 = vmatpush.msra.mxu0 %v2038
        %2544 = vmatpush.msra.mxu0 %v2030
        %2545 = vmatmul.f32.gmra.mxu0 %v1872
        %v2546 = vpop.f32.mrf.mxu0
        %v2547 = vadd.f32 %v2518, %v2546
        %2548 = vmatmul.f32.gmra.mxu0 %v1876
        %v2549 = vpop.f32.mrf.mxu0
        %v2550 = vadd.f32 %v2521, %v2549
        %2551 = vmatmul.f32.gmra.mxu0 %v1882
        %v2552 = vpop.f32.mrf.mxu0
        %v2553 = vadd.f32 %v2524, %v2552
        %2554 = vmatmul.f32.gmra.mxu0 %v1886
        %v2555 = vpop.f32.mrf.mxu0
        %v2556 = vadd.f32 %v2527, %v2555
        %2557 = vdwg.mxu0
        %2558 = vmatpush.msra.mxu0 %v2023
        %2559 = vmatpush.msra.mxu0 %v2015
        %2560 = vmatpush.msra.mxu0 %v2007
        %2561 = vmatpush.msra.mxu0 %v1999
        %2562 = vmatpush.msra.mxu0 %v1991
        %2563 = vmatpush.msra.mxu0 %v1983
        %2564 = vmatpush.msra.mxu0 %v1975
        %2565 = vmatpush.msra.mxu0 %v1967
        %2566 = vmatpush.msra.mxu0 %v1959
        %2567 = vmatpush.msra.mxu0 %v1951
        %2568 = vmatpush.msra.mxu0 %v1943
        %2569 = vmatpush.msra.mxu0 %v1935
        %2570 = vmatpush.msra.mxu0 %v1927
        %2571 = vmatpush.msra.mxu0 %v1919
        %2572 = vmatpush.msra.mxu0 %v1911
        %2573 = vmatpush.msra.mxu0 %v1903
        %2574 = vmatmul.f32.gmra.mxu0 %v1869
        %v2575 = vpop.f32.mrf.mxu0
        %v2576 = vadd.f32 0.0, %v2575
        %2577 = vmatmul.f32.gmra.mxu0 %v1874
        %v2578 = vpop.f32.mrf.mxu0
        %v2579 = vadd.f32 0.0, %v2578
        %2580 = vmatmul.f32.gmra.mxu0 %v1879
        %v2581 = vpop.f32.mrf.mxu0
        %v2582 = vadd.f32 0.0, %v2581
        %2583 = vmatmul.f32.gmra.mxu0 %v1884
        %v2584 = vpop.f32.mrf.mxu0
        %v2585 = vadd.f32 0.0, %v2584
        %2586 = vdwg.mxu0
        %2587 = vmatpush.msra.mxu0 %v2151
        %2588 = vmatpush.msra.mxu0 %v2143
        %2589 = vmatpush.msra.mxu0 %v2135
        %2590 = vmatpush.msra.mxu0 %v2127
        %2591 = vmatpush.msra.mxu0 %v2119
        %2592 = vmatpush.msra.mxu0 %v2111
        %2593 = vmatpush.msra.mxu0 %v2103
        %2594 = vmatpush.msra.mxu0 %v2095
        %2595 = vmatpush.msra.mxu0 %v2087
        %2596 = vmatpush.msra.mxu0 %v2079
        %2597 = vmatpush.msra.mxu0 %v2071
        %2598 = vmatpush.msra.mxu0 %v2063
        %2599 = vmatpush.msra.mxu0 %v2055
        %2600 = vmatpush.msra.mxu0 %v2047
        %2601 = vmatpush.msra.mxu0 %v2039
        %2602 = vmatpush.msra.mxu0 %v2031
        %2603 = vmatmul.f32.gmra.mxu0 %v1872
        %v2604 = vpop.f32.mrf.mxu0
        %v2605 = vadd.f32 %v2576, %v2604
        %2606 = vmatmul.f32.gmra.mxu0 %v1876
        %v2607 = vpop.f32.mrf.mxu0
        %v2608 = vadd.f32 %v2579, %v2607
        %2609 = vmatmul.f32.gmra.mxu0 %v1882
        %v2610 = vpop.f32.mrf.mxu0
        %v2611 = vadd.f32 %v2582, %v2610
        %2612 = vmatmul.f32.gmra.mxu0 %v1886
        %v2613 = vpop.f32.mrf.mxu0
        %v2614 = vadd.f32 %v2585, %v2613
        %2615 = vdwg.mxu0
        %v2616 = vadd.f32 %v1834, %v2199
        %v2617 = vadd.f32 %v1835, %v2257
        %v2618 = vadd.f32 %v1836, %v2315
        %v2619 = vadd.f32 %v1837, %v2373
        %v2620 = vadd.f32 %v1838, %v2431
        %v2621 = vadd.f32 %v1839, %v2489
        %v2622 = vadd.f32 %v1840, %v2547
        %v2623 = vadd.f32 %v1841, %v2605
        %v2624 = vadd.f32 %v1842, %v2202
        %v2625 = vadd.f32 %v1843, %v2260
        %v2626 = vadd.f32 %v1844, %v2318
        %v2627 = vadd.f32 %v1845, %v2376
        %v2628 = vadd.f32 %v1846, %v2434
        %v2629 = vadd.f32 %v1847, %v2492
        %v2630 = vadd.f32 %v1848, %v2550
        %v2631 = vadd.f32 %v1849, %v2608
        %v2632 = vadd.f32 %v1850, %v2205
        %v2633 = vadd.f32 %v1851, %v2263
        %v2634 = vadd.f32 %v1852, %v2321
        %v2635 = vadd.f32 %v1853, %v2379
        %v2636 = vadd.f32 %v1854, %v2437
        %v2637 = vadd.f32 %v1855, %v2495
        %v2638 = vadd.f32 %v1856, %v2553
        %v2639 = vadd.f32 %v1857, %v2611
        %v2640 = vadd.f32 %v1858, %v2208
        %v2641 = vadd.f32 %v1859, %v2266
        %v2642 = vadd.f32 %v1860, %v2324
        %v2643 = vadd.f32 %v1861, %v2382
        %v2644 = vadd.f32 %v1862, %v2440
        %v2645 = vadd.f32 %v1863, %v2498
        %v2646 = vadd.f32 %v1864, %v2556
        %v2647 = vadd.f32 %v1865, %v2614
        %vm2648 = vcmask 1044480
        %v2649 = vrot.slane %v308, 3
        %v2650 = vrot.slane %v310, 3
        %v2651 = vsel %vm2648, %v2649, %v2650
        %v2652 = vrot.slane %v309, 3
        %v2653 = vrot.slane %v311, 3
        %v2654 = vsel %vm2648, %v2652, %v2653
        %v2655 = vrot.slane %v312, 3
        %v2656 = vsel %vm2648, %v2650, %v2655
        %v2657 = vrot.slane %v313, 3
        %v2658 = vsel %vm2648, %v2653, %v2657
        %v2659 = vrot.slane %v314, 3
        %v2660 = vrot.slane %v316, 3
        %v2661 = vsel %vm2648, %v2659, %v2660
        %v2662 = vrot.slane %v315, 3
        %v2663 = vrot.slane %v317, 3
        %v2664 = vsel %vm2648, %v2662, %v2663
        %v2665 = vrot.slane %v318, 3
        %v2666 = vsel %vm2648, %v2660, %v2665
        %v2667 = vrot.slane %v319, 3
        %v2668 = vsel %vm2648, %v2663, %v2667
        %s2677 = scalar_lea.vmem %s217, 6144 [#allocation7]
        %v2678 = vld [vmem:[%s2677] sm:$0xff]
        %v2679 = vld [vmem:[%s2677 + $0x8] sm:$0xff]
        %v2680 = vld [vmem:[%s2677 + $0x10] sm:$0xff]
        %v2681 = vld [vmem:[%s2677 + $0x18] sm:$0xff]
        %v2682 = vld [vmem:[%s2677 + $0x20] sm:$0xff]
        %v2683 = vld [vmem:[%s2677 + $0x28] sm:$0xff]
        %v2684 = vld [vmem:[%s2677 + $0x30] sm:$0xff]
        %v2685 = vld [vmem:[%s2677 + $0x38] sm:$0xff]
        %v2686 = vld [vmem:[%s2677 + $0x40] sm:$0xff]
        %v2687 = vld [vmem:[%s2677 + $0x48] sm:$0xff]
        %v2688 = vld [vmem:[%s2677 + $0x50] sm:$0xff]
        %v2689 = vld [vmem:[%s2677 + $0x58] sm:$0xff]
        %v2690 = vld [vmem:[%s2677 + $0x60] sm:$0xff]
        %v2691 = vld [vmem:[%s2677 + $0x68] sm:$0xff]
        %v2692 = vld [vmem:[%s2677 + $0x70] sm:$0xff]
        %v2693 = vld [vmem:[%s2677 + $0x78] sm:$0xff]
        %v2694 = vld [vmem:[%s2677 + $0x80] sm:$0xff]
        %v2695 = vld [vmem:[%s2677 + $0x88] sm:$0xff]
        %v2696 = vld [vmem:[%s2677 + $0x90] sm:$0xff]
        %v2697 = vld [vmem:[%s2677 + $0x98] sm:$0xff]
        %v2698 = vld [vmem:[%s2677 + $0xa0] sm:$0xff]
        %v2699 = vld [vmem:[%s2677 + $0xa8] sm:$0xff]
        %v2700 = vld [vmem:[%s2677 + $0xb0] sm:$0xff]
        %v2701 = vld [vmem:[%s2677 + $0xb8] sm:$0xff]
        %v2702 = vld [vmem:[%s2677 + $0xc0] sm:$0xff]
        %v2703 = vld [vmem:[%s2677 + $0xc8] sm:$0xff]
        %v2704 = vld [vmem:[%s2677 + $0xd0] sm:$0xff]
        %v2705 = vld [vmem:[%s2677 + $0xd8] sm:$0xff]
        %v2706 = vld [vmem:[%s2677 + $0xe0] sm:$0xff]
        %v2707 = vld [vmem:[%s2677 + $0xe8] sm:$0xff]
        %v2708 = vld [vmem:[%s2677 + $0xf0] sm:$0xff]
        %v2709 = vld [vmem:[%s2677 + $0xf8] sm:$0xff]
        %v2710 = vld [vmem:[%s2677 + $0x100] sm:$0xff]
        %v2711 = vld [vmem:[%s2677 + $0x108] sm:$0xff]
        %v2712 = vld [vmem:[%s2677 + $0x110] sm:$0xff]
        %v2713 = vld [vmem:[%s2677 + $0x118] sm:$0xff]
        %v2714 = vld [vmem:[%s2677 + $0x120] sm:$0xff]
        %v2715 = vld [vmem:[%s2677 + $0x128] sm:$0xff]
        %v2716 = vld [vmem:[%s2677 + $0x130] sm:$0xff]
        %v2717 = vld [vmem:[%s2677 + $0x138] sm:$0xff]
        %v2718 = vld [vmem:[%s2677 + $0x140] sm:$0xff]
        %v2719 = vld [vmem:[%s2677 + $0x148] sm:$0xff]
        %v2720 = vld [vmem:[%s2677 + $0x150] sm:$0xff]
        %v2721 = vld [vmem:[%s2677 + $0x158] sm:$0xff]
        %v2722 = vld [vmem:[%s2677 + $0x160] sm:$0xff]
        %v2723 = vld [vmem:[%s2677 + $0x168] sm:$0xff]
        %v2724 = vld [vmem:[%s2677 + $0x170] sm:$0xff]
        %v2725 = vld [vmem:[%s2677 + $0x178] sm:$0xff]
        %v2726 = vld [vmem:[%s2677 + $0x180] sm:$0xff]
        %v2727 = vld [vmem:[%s2677 + $0x188] sm:$0xff]
        %v2728 = vld [vmem:[%s2677 + $0x190] sm:$0xff]
        %v2729 = vld [vmem:[%s2677 + $0x198] sm:$0xff]
        %v2730 = vld [vmem:[%s2677 + $0x1a0] sm:$0xff]
        %v2731 = vld [vmem:[%s2677 + $0x1a8] sm:$0xff]
        %v2732 = vld [vmem:[%s2677 + $0x1b0] sm:$0xff]
        %v2733 = vld [vmem:[%s2677 + $0x1b8] sm:$0xff]
        %v2734 = vld [vmem:[%s2677 + $0x1c0] sm:$0xff]
        %v2735 = vld [vmem:[%s2677 + $0x1c8] sm:$0xff]
        %v2736 = vld [vmem:[%s2677 + $0x1d0] sm:$0xff]
        %v2737 = vld [vmem:[%s2677 + $0x1d8] sm:$0xff]
        %v2738 = vld [vmem:[%s2677 + $0x1e0] sm:$0xff]
        %v2739 = vld [vmem:[%s2677 + $0x1e8] sm:$0xff]
        %v2740 = vld [vmem:[%s2677 + $0x1f0] sm:$0xff]
        %v2741 = vld [vmem:[%s2677 + $0x1f8] sm:$0xff]
        %v2742 = vld [vmem:[%s2677 + $0x200] sm:$0xff]
        %v2743 = vld [vmem:[%s2677 + $0x208] sm:$0xff]
        %v2744 = vld [vmem:[%s2677 + $0x210] sm:$0xff]
        %v2745 = vld [vmem:[%s2677 + $0x218] sm:$0xff]
        %v2746 = vld [vmem:[%s2677 + $0x220] sm:$0xff]
        %v2747 = vld [vmem:[%s2677 + $0x228] sm:$0xff]
        %v2748 = vld [vmem:[%s2677 + $0x230] sm:$0xff]
        %v2749 = vld [vmem:[%s2677 + $0x238] sm:$0xff]
        %v2750 = vld [vmem:[%s2677 + $0x240] sm:$0xff]
        %v2751 = vld [vmem:[%s2677 + $0x248] sm:$0xff]
        %v2752 = vld [vmem:[%s2677 + $0x250] sm:$0xff]
        %v2753 = vld [vmem:[%s2677 + $0x258] sm:$0xff]
        %v2754 = vld [vmem:[%s2677 + $0x260] sm:$0xff]
        %v2755 = vld [vmem:[%s2677 + $0x268] sm:$0xff]
        %v2756 = vld [vmem:[%s2677 + $0x270] sm:$0xff]
        %v2757 = vld [vmem:[%s2677 + $0x278] sm:$0xff]
        %v2758 = vld [vmem:[%s2677 + $0x280] sm:$0xff]
        %v2759 = vld [vmem:[%s2677 + $0x288] sm:$0xff]
        %v2760 = vld [vmem:[%s2677 + $0x290] sm:$0xff]
        %v2761 = vld [vmem:[%s2677 + $0x298] sm:$0xff]
        %v2762 = vld [vmem:[%s2677 + $0x2a0] sm:$0xff]
        %v2763 = vld [vmem:[%s2677 + $0x2a8] sm:$0xff]
        %v2764 = vld [vmem:[%s2677 + $0x2b0] sm:$0xff]
        %v2765 = vld [vmem:[%s2677 + $0x2b8] sm:$0xff]
        %v2766 = vld [vmem:[%s2677 + $0x2c0] sm:$0xff]
        %v2767 = vld [vmem:[%s2677 + $0x2c8] sm:$0xff]
        %v2768 = vld [vmem:[%s2677 + $0x2d0] sm:$0xff]
        %v2769 = vld [vmem:[%s2677 + $0x2d8] sm:$0xff]
        %v2770 = vld [vmem:[%s2677 + $0x2e0] sm:$0xff]
        %v2771 = vld [vmem:[%s2677 + $0x2e8] sm:$0xff]
        %v2772 = vld [vmem:[%s2677 + $0x2f0] sm:$0xff]
        %v2773 = vld [vmem:[%s2677 + $0x2f8] sm:$0xff]
        %v2774 = vld [vmem:[%s2677 + $0x300] sm:$0xff]
        %v2775 = vld [vmem:[%s2677 + $0x308] sm:$0xff]
        %v2776 = vld [vmem:[%s2677 + $0x310] sm:$0xff]
        %v2777 = vld [vmem:[%s2677 + $0x318] sm:$0xff]
        %v2778 = vld [vmem:[%s2677 + $0x320] sm:$0xff]
        %v2779 = vld [vmem:[%s2677 + $0x328] sm:$0xff]
        %v2780 = vld [vmem:[%s2677 + $0x330] sm:$0xff]
        %v2781 = vld [vmem:[%s2677 + $0x338] sm:$0xff]
        %v2782 = vld [vmem:[%s2677 + $0x340] sm:$0xff]
        %v2783 = vld [vmem:[%s2677 + $0x348] sm:$0xff]
        %v2784 = vld [vmem:[%s2677 + $0x350] sm:$0xff]
        %v2785 = vld [vmem:[%s2677 + $0x358] sm:$0xff]
        %v2786 = vld [vmem:[%s2677 + $0x360] sm:$0xff]
        %v2787 = vld [vmem:[%s2677 + $0x368] sm:$0xff]
        %v2788 = vld [vmem:[%s2677 + $0x370] sm:$0xff]
        %v2789 = vld [vmem:[%s2677 + $0x378] sm:$0xff]
        %v2790 = vld [vmem:[%s2677 + $0x380] sm:$0xff]
        %v2791 = vld [vmem:[%s2677 + $0x388] sm:$0xff]
        %v2792 = vld [vmem:[%s2677 + $0x390] sm:$0xff]
        %v2793 = vld [vmem:[%s2677 + $0x398] sm:$0xff]
        %v2794 = vld [vmem:[%s2677 + $0x3a0] sm:$0xff]
        %v2795 = vld [vmem:[%s2677 + $0x3a8] sm:$0xff]
        %v2796 = vld [vmem:[%s2677 + $0x3b0] sm:$0xff]
        %v2797 = vld [vmem:[%s2677 + $0x3b8] sm:$0xff]
        %v2798 = vld [vmem:[%s2677 + $0x3c0] sm:$0xff]
        %v2799 = vld [vmem:[%s2677 + $0x3c8] sm:$0xff]
        %v2800 = vld [vmem:[%s2677 + $0x3d0] sm:$0xff]
        %v2801 = vld [vmem:[%s2677 + $0x3d8] sm:$0xff]
        %v2802 = vld [vmem:[%s2677 + $0x3e0] sm:$0xff]
        %v2803 = vld [vmem:[%s2677 + $0x3e8] sm:$0xff]
        %v2804 = vld [vmem:[%s2677 + $0x3f0] sm:$0xff]
        %v2805 = vld [vmem:[%s2677 + $0x3f8] sm:$0xff]
        %v2806 = vld [vmem:[%s2677 + $0x400] sm:$0xff]
        %v2807 = vld [vmem:[%s2677 + $0x408] sm:$0xff]
        %v2808 = vld [vmem:[%s2677 + $0x410] sm:$0xff]
        %v2809 = vld [vmem:[%s2677 + $0x418] sm:$0xff]
        %v2810 = vld [vmem:[%s2677 + $0x420] sm:$0xff]
        %v2811 = vld [vmem:[%s2677 + $0x428] sm:$0xff]
        %v2812 = vld [vmem:[%s2677 + $0x430] sm:$0xff]
        %v2813 = vld [vmem:[%s2677 + $0x438] sm:$0xff]
        %v2814 = vld [vmem:[%s2677 + $0x440] sm:$0xff]
        %v2815 = vld [vmem:[%s2677 + $0x448] sm:$0xff]
        %v2816 = vld [vmem:[%s2677 + $0x450] sm:$0xff]
        %v2817 = vld [vmem:[%s2677 + $0x458] sm:$0xff]
        %v2818 = vld [vmem:[%s2677 + $0x460] sm:$0xff]
        %v2819 = vld [vmem:[%s2677 + $0x468] sm:$0xff]
        %v2820 = vld [vmem:[%s2677 + $0x470] sm:$0xff]
        %v2821 = vld [vmem:[%s2677 + $0x478] sm:$0xff]
        %v2822 = vld [vmem:[%s2677 + $0x480] sm:$0xff]
        %v2823 = vld [vmem:[%s2677 + $0x488] sm:$0xff]
        %v2824 = vld [vmem:[%s2677 + $0x490] sm:$0xff]
        %v2825 = vld [vmem:[%s2677 + $0x498] sm:$0xff]
        %v2826 = vld [vmem:[%s2677 + $0x4a0] sm:$0xff]
        %v2827 = vld [vmem:[%s2677 + $0x4a8] sm:$0xff]
        %v2828 = vld [vmem:[%s2677 + $0x4b0] sm:$0xff]
        %v2829 = vld [vmem:[%s2677 + $0x4b8] sm:$0xff]
        %v2830 = vld [vmem:[%s2677 + $0x4c0] sm:$0xff]
        %v2831 = vld [vmem:[%s2677 + $0x4c8] sm:$0xff]
        %v2832 = vld [vmem:[%s2677 + $0x4d0] sm:$0xff]
        %v2833 = vld [vmem:[%s2677 + $0x4d8] sm:$0xff]
        %v2834 = vld [vmem:[%s2677 + $0x4e0] sm:$0xff]
        %v2835 = vld [vmem:[%s2677 + $0x4e8] sm:$0xff]
        %v2836 = vld [vmem:[%s2677 + $0x4f0] sm:$0xff]
        %v2837 = vld [vmem:[%s2677 + $0x4f8] sm:$0xff]
        %v2838 = vld [vmem:[%s2677 + $0x500] sm:$0xff]
        %v2839 = vld [vmem:[%s2677 + $0x508] sm:$0xff]
        %v2840 = vld [vmem:[%s2677 + $0x510] sm:$0xff]
        %v2841 = vld [vmem:[%s2677 + $0x518] sm:$0xff]
        %v2842 = vld [vmem:[%s2677 + $0x520] sm:$0xff]
        %v2843 = vld [vmem:[%s2677 + $0x528] sm:$0xff]
        %v2844 = vld [vmem:[%s2677 + $0x530] sm:$0xff]
        %v2845 = vld [vmem:[%s2677 + $0x538] sm:$0xff]
        %v2846 = vld [vmem:[%s2677 + $0x540] sm:$0xff]
        %v2847 = vld [vmem:[%s2677 + $0x548] sm:$0xff]
        %v2848 = vld [vmem:[%s2677 + $0x550] sm:$0xff]
        %v2849 = vld [vmem:[%s2677 + $0x558] sm:$0xff]
        %v2850 = vld [vmem:[%s2677 + $0x560] sm:$0xff]
        %v2851 = vld [vmem:[%s2677 + $0x568] sm:$0xff]
        %v2852 = vld [vmem:[%s2677 + $0x570] sm:$0xff]
        %v2853 = vld [vmem:[%s2677 + $0x578] sm:$0xff]
        %v2854 = vld [vmem:[%s2677 + $0x580] sm:$0xff]
        %v2855 = vld [vmem:[%s2677 + $0x588] sm:$0xff]
        %v2856 = vld [vmem:[%s2677 + $0x590] sm:$0xff]
        %v2857 = vld [vmem:[%s2677 + $0x598] sm:$0xff]
        %v2858 = vld [vmem:[%s2677 + $0x5a0] sm:$0xff]
        %v2859 = vld [vmem:[%s2677 + $0x5a8] sm:$0xff]
        %v2860 = vld [vmem:[%s2677 + $0x5b0] sm:$0xff]
        %v2861 = vld [vmem:[%s2677 + $0x5b8] sm:$0xff]
        %v2862 = vld [vmem:[%s2677 + $0x5c0] sm:$0xff]
        %v2863 = vld [vmem:[%s2677 + $0x5c8] sm:$0xff]
        %v2864 = vld [vmem:[%s2677 + $0x5d0] sm:$0xff]
        %v2865 = vld [vmem:[%s2677 + $0x5d8] sm:$0xff]
        %v2866 = vld [vmem:[%s2677 + $0x5e0] sm:$0xff]
        %v2867 = vld [vmem:[%s2677 + $0x5e8] sm:$0xff]
        %v2868 = vld [vmem:[%s2677 + $0x5f0] sm:$0xff]
        %v2869 = vld [vmem:[%s2677 + $0x5f8] sm:$0xff]
        %v2870 = vld [vmem:[%s2677 + $0x600] sm:$0xff]
        %v2871 = vld [vmem:[%s2677 + $0x608] sm:$0xff]
        %v2872 = vld [vmem:[%s2677 + $0x610] sm:$0xff]
        %v2873 = vld [vmem:[%s2677 + $0x618] sm:$0xff]
        %v2874 = vld [vmem:[%s2677 + $0x620] sm:$0xff]
        %v2875 = vld [vmem:[%s2677 + $0x628] sm:$0xff]
        %v2876 = vld [vmem:[%s2677 + $0x630] sm:$0xff]
        %v2877 = vld [vmem:[%s2677 + $0x638] sm:$0xff]
        %v2878 = vld [vmem:[%s2677 + $0x640] sm:$0xff]
        %v2879 = vld [vmem:[%s2677 + $0x648] sm:$0xff]
        %v2880 = vld [vmem:[%s2677 + $0x650] sm:$0xff]
        %v2881 = vld [vmem:[%s2677 + $0x658] sm:$0xff]
        %v2882 = vld [vmem:[%s2677 + $0x660] sm:$0xff]
        %v2883 = vld [vmem:[%s2677 + $0x668] sm:$0xff]
        %v2884 = vld [vmem:[%s2677 + $0x670] sm:$0xff]
        %v2885 = vld [vmem:[%s2677 + $0x678] sm:$0xff]
        %v2886 = vld [vmem:[%s2677 + $0x680] sm:$0xff]
        %v2887 = vld [vmem:[%s2677 + $0x688] sm:$0xff]
        %v2888 = vld [vmem:[%s2677 + $0x690] sm:$0xff]
        %v2889 = vld [vmem:[%s2677 + $0x698] sm:$0xff]
        %v2890 = vld [vmem:[%s2677 + $0x6a0] sm:$0xff]
        %v2891 = vld [vmem:[%s2677 + $0x6a8] sm:$0xff]
        %v2892 = vld [vmem:[%s2677 + $0x6b0] sm:$0xff]
        %v2893 = vld [vmem:[%s2677 + $0x6b8] sm:$0xff]
        %v2894 = vld [vmem:[%s2677 + $0x6c0] sm:$0xff]
        %v2895 = vld [vmem:[%s2677 + $0x6c8] sm:$0xff]
        %v2896 = vld [vmem:[%s2677 + $0x6d0] sm:$0xff]
        %v2897 = vld [vmem:[%s2677 + $0x6d8] sm:$0xff]
        %v2898 = vld [vmem:[%s2677 + $0x6e0] sm:$0xff]
        %v2899 = vld [vmem:[%s2677 + $0x6e8] sm:$0xff]
        %v2900 = vld [vmem:[%s2677 + $0x6f0] sm:$0xff]
        %v2901 = vld [vmem:[%s2677 + $0x6f8] sm:$0xff]
        %v2902 = vld [vmem:[%s2677 + $0x700] sm:$0xff]
        %v2903 = vld [vmem:[%s2677 + $0x708] sm:$0xff]
        %v2904 = vld [vmem:[%s2677 + $0x710] sm:$0xff]
        %v2905 = vld [vmem:[%s2677 + $0x718] sm:$0xff]
        %v2906 = vld [vmem:[%s2677 + $0x720] sm:$0xff]
        %v2907 = vld [vmem:[%s2677 + $0x728] sm:$0xff]
        %v2908 = vld [vmem:[%s2677 + $0x730] sm:$0xff]
        %v2909 = vld [vmem:[%s2677 + $0x738] sm:$0xff]
        %v2910 = vld [vmem:[%s2677 + $0x740] sm:$0xff]
        %v2911 = vld [vmem:[%s2677 + $0x748] sm:$0xff]
        %v2912 = vld [vmem:[%s2677 + $0x750] sm:$0xff]
        %v2913 = vld [vmem:[%s2677 + $0x758] sm:$0xff]
        %v2914 = vld [vmem:[%s2677 + $0x760] sm:$0xff]
        %v2915 = vld [vmem:[%s2677 + $0x768] sm:$0xff]
        %v2916 = vld [vmem:[%s2677 + $0x770] sm:$0xff]
        %v2917 = vld [vmem:[%s2677 + $0x778] sm:$0xff]
        %v2918 = vld [vmem:[%s2677 + $0x780] sm:$0xff]
        %v2919 = vld [vmem:[%s2677 + $0x788] sm:$0xff]
        %v2920 = vld [vmem:[%s2677 + $0x790] sm:$0xff]
        %v2921 = vld [vmem:[%s2677 + $0x798] sm:$0xff]
        %v2922 = vld [vmem:[%s2677 + $0x7a0] sm:$0xff]
        %v2923 = vld [vmem:[%s2677 + $0x7a8] sm:$0xff]
        %v2924 = vld [vmem:[%s2677 + $0x7b0] sm:$0xff]
        %v2925 = vld [vmem:[%s2677 + $0x7b8] sm:$0xff]
        %v2926 = vld [vmem:[%s2677 + $0x7c0] sm:$0xff]
        %v2927 = vld [vmem:[%s2677 + $0x7c8] sm:$0xff]
        %v2928 = vld [vmem:[%s2677 + $0x7d0] sm:$0xff]
        %v2929 = vld [vmem:[%s2677 + $0x7d8] sm:$0xff]
        %v2930 = vld [vmem:[%s2677 + $0x7e0] sm:$0xff]
        %v2931 = vld [vmem:[%s2677 + $0x7e8] sm:$0xff]
        %v2932 = vld [vmem:[%s2677 + $0x7f0] sm:$0xff]
        %v2933 = vld [vmem:[%s2677 + $0x7f8] sm:$0xff]
        %2934 = vmatpush.msra.mxu0 %v2798
        %2935 = vmatpush.msra.mxu0 %v2790
        %2936 = vmatpush.msra.mxu0 %v2782
        %2937 = vmatpush.msra.mxu0 %v2774
        %2938 = vmatpush.msra.mxu0 %v2766
        %2939 = vmatpush.msra.mxu0 %v2758
        %2940 = vmatpush.msra.mxu0 %v2750
        %2941 = vmatpush.msra.mxu0 %v2742
        %2942 = vmatpush.msra.mxu0 %v2734
        %2943 = vmatpush.msra.mxu0 %v2726
        %2944 = vmatpush.msra.mxu0 %v2718
        %2945 = vmatpush.msra.mxu0 %v2710
        %2946 = vmatpush.msra.mxu0 %v2702
        %2947 = vmatpush.msra.mxu0 %v2694
        %2948 = vmatpush.msra.mxu0 %v2686
        %2949 = vmatpush.msra.mxu0 %v2678
        %2950 = vmatmul.f32.gmra.mxu0 %v2651
        %v2951 = vpop.f32.mrf.mxu0
        %v2952 = vadd.f32 0.0, %v2951
        %2953 = vmatmul.f32.gmra.mxu0 %v2656
        %v2954 = vpop.f32.mrf.mxu0
        %v2955 = vadd.f32 0.0, %v2954
        %2956 = vmatmul.f32.gmra.mxu0 %v2661
        %v2957 = vpop.f32.mrf.mxu0
        %v2958 = vadd.f32 0.0, %v2957
        %2959 = vmatmul.f32.gmra.mxu0 %v2666
        %v2960 = vpop.f32.mrf.mxu0
        %v2961 = vadd.f32 0.0, %v2960
        %2962 = vdwg.mxu0
        %2963 = vmatpush.msra.mxu0 %v2926
        %2964 = vmatpush.msra.mxu0 %v2918
        %2965 = vmatpush.msra.mxu0 %v2910
        %2966 = vmatpush.msra.mxu0 %v2902
        %2967 = vmatpush.msra.mxu0 %v2894
        %2968 = vmatpush.msra.mxu0 %v2886
        %2969 = vmatpush.msra.mxu0 %v2878
        %2970 = vmatpush.msra.mxu0 %v2870
        %2971 = vmatpush.msra.mxu0 %v2862
        %2972 = vmatpush.msra.mxu0 %v2854
        %2973 = vmatpush.msra.mxu0 %v2846
        %2974 = vmatpush.msra.mxu0 %v2838
        %2975 = vmatpush.msra.mxu0 %v2830
        %2976 = vmatpush.msra.mxu0 %v2822
        %2977 = vmatpush.msra.mxu0 %v2814
        %2978 = vmatpush.msra.mxu0 %v2806
        %2979 = vmatmul.f32.gmra.mxu0 %v2654
        %v2980 = vpop.f32.mrf.mxu0
        %v2981 = vadd.f32 %v2952, %v2980
        %2982 = vmatmul.f32.gmra.mxu0 %v2658
        %v2983 = vpop.f32.mrf.mxu0
        %v2984 = vadd.f32 %v2955, %v2983
        %2985 = vmatmul.f32.gmra.mxu0 %v2664
        %v2986 = vpop.f32.mrf.mxu0
        %v2987 = vadd.f32 %v2958, %v2986
        %2988 = vmatmul.f32.gmra.mxu0 %v2668
        %v2989 = vpop.f32.mrf.mxu0
        %v2990 = vadd.f32 %v2961, %v2989
        %2991 = vdwg.mxu0
        %2992 = vmatpush.msra.mxu0 %v2799
        %2993 = vmatpush.msra.mxu0 %v2791
        %2994 = vmatpush.msra.mxu0 %v2783
        %2995 = vmatpush.msra.mxu0 %v2775
        %2996 = vmatpush.msra.mxu0 %v2767
        %2997 = vmatpush.msra.mxu0 %v2759
        %2998 = vmatpush.msra.mxu0 %v2751
        %2999 = vmatpush.msra.mxu0 %v2743
        %3000 = vmatpush.msra.mxu0 %v2735
        %3001 = vmatpush.msra.mxu0 %v2727
        %3002 = vmatpush.msra.mxu0 %v2719
        %3003 = vmatpush.msra.mxu0 %v2711
        %3004 = vmatpush.msra.mxu0 %v2703
        %3005 = vmatpush.msra.mxu0 %v2695
        %3006 = vmatpush.msra.mxu0 %v2687
        %3007 = vmatpush.msra.mxu0 %v2679
        %3008 = vmatmul.f32.gmra.mxu0 %v2651
        %v3009 = vpop.f32.mrf.mxu0
        %v3010 = vadd.f32 0.0, %v3009
        %3011 = vmatmul.f32.gmra.mxu0 %v2656
        %v3012 = vpop.f32.mrf.mxu0
        %v3013 = vadd.f32 0.0, %v3012
        %3014 = vmatmul.f32.gmra.mxu0 %v2661
        %v3015 = vpop.f32.mrf.mxu0
        %v3016 = vadd.f32 0.0, %v3015
        %3017 = vmatmul.f32.gmra.mxu0 %v2666
        %v3018 = vpop.f32.mrf.mxu0
        %v3019 = vadd.f32 0.0, %v3018
        %3020 = vdwg.mxu0
        %3021 = vmatpush.msra.mxu0 %v2927
        %3022 = vmatpush.msra.mxu0 %v2919
        %3023 = vmatpush.msra.mxu0 %v2911
        %3024 = vmatpush.msra.mxu0 %v2903
        %3025 = vmatpush.msra.mxu0 %v2895
        %3026 = vmatpush.msra.mxu0 %v2887
        %3027 = vmatpush.msra.mxu0 %v2879
        %3028 = vmatpush.msra.mxu0 %v2871
        %3029 = vmatpush.msra.mxu0 %v2863
        %3030 = vmatpush.msra.mxu0 %v2855
        %3031 = vmatpush.msra.mxu0 %v2847
        %3032 = vmatpush.msra.mxu0 %v2839
        %3033 = vmatpush.msra.mxu0 %v2831
        %3034 = vmatpush.msra.mxu0 %v2823
        %3035 = vmatpush.msra.mxu0 %v2815
        %3036 = vmatpush.msra.mxu0 %v2807
        %3037 = vmatmul.f32.gmra.mxu0 %v2654
        %v3038 = vpop.f32.mrf.mxu0
        %v3039 = vadd.f32 %v3010, %v3038
        %3040 = vmatmul.f32.gmra.mxu0 %v2658
        %v3041 = vpop.f32.mrf.mxu0
        %v3042 = vadd.f32 %v3013, %v3041
        %3043 = vmatmul.f32.gmra.mxu0 %v2664
        %v3044 = vpop.f32.mrf.mxu0
        %v3045 = vadd.f32 %v3016, %v3044
        %3046 = vmatmul.f32.gmra.mxu0 %v2668
        %v3047 = vpop.f32.mrf.mxu0
        %v3048 = vadd.f32 %v3019, %v3047
        %3049 = vdwg.mxu0
        %3050 = vmatpush.msra.mxu0 %v2800
        %3051 = vmatpush.msra.mxu0 %v2792
        %3052 = vmatpush.msra.mxu0 %v2784
        %3053 = vmatpush.msra.mxu0 %v2776
        %3054 = vmatpush.msra.mxu0 %v2768
        %3055 = vmatpush.msra.mxu0 %v2760
        %3056 = vmatpush.msra.mxu0 %v2752
        %3057 = vmatpush.msra.mxu0 %v2744
        %3058 = vmatpush.msra.mxu0 %v2736
        %3059 = vmatpush.msra.mxu0 %v2728
        %3060 = vmatpush.msra.mxu0 %v2720
        %3061 = vmatpush.msra.mxu0 %v2712
        %3062 = vmatpush.msra.mxu0 %v2704
        %3063 = vmatpush.msra.mxu0 %v2696
        %3064 = vmatpush.msra.mxu0 %v2688
        %3065 = vmatpush.msra.mxu0 %v2680
        %3066 = vmatmul.f32.gmra.mxu0 %v2651
        %v3067 = vpop.f32.mrf.mxu0
        %v3068 = vadd.f32 0.0, %v3067
        %3069 = vmatmul.f32.gmra.mxu0 %v2656
        %v3070 = vpop.f32.mrf.mxu0
        %v3071 = vadd.f32 0.0, %v3070
        %3072 = vmatmul.f32.gmra.mxu0 %v2661
        %v3073 = vpop.f32.mrf.mxu0
        %v3074 = vadd.f32 0.0, %v3073
        %3075 = vmatmul.f32.gmra.mxu0 %v2666
        %v3076 = vpop.f32.mrf.mxu0
        %v3077 = vadd.f32 0.0, %v3076
        %3078 = vdwg.mxu0
        %3079 = vmatpush.msra.mxu0 %v2928
        %3080 = vmatpush.msra.mxu0 %v2920
        %3081 = vmatpush.msra.mxu0 %v2912
        %3082 = vmatpush.msra.mxu0 %v2904
        %3083 = vmatpush.msra.mxu0 %v2896
        %3084 = vmatpush.msra.mxu0 %v2888
        %3085 = vmatpush.msra.mxu0 %v2880
        %3086 = vmatpush.msra.mxu0 %v2872
        %3087 = vmatpush.msra.mxu0 %v2864
        %3088 = vmatpush.msra.mxu0 %v2856
        %3089 = vmatpush.msra.mxu0 %v2848
        %3090 = vmatpush.msra.mxu0 %v2840
        %3091 = vmatpush.msra.mxu0 %v2832
        %3092 = vmatpush.msra.mxu0 %v2824
        %3093 = vmatpush.msra.mxu0 %v2816
        %3094 = vmatpush.msra.mxu0 %v2808
        %3095 = vmatmul.f32.gmra.mxu0 %v2654
        %v3096 = vpop.f32.mrf.mxu0
        %v3097 = vadd.f32 %v3068, %v3096
        %3098 = vmatmul.f32.gmra.mxu0 %v2658
        %v3099 = vpop.f32.mrf.mxu0
        %v3100 = vadd.f32 %v3071, %v3099
        %3101 = vmatmul.f32.gmra.mxu0 %v2664
        %v3102 = vpop.f32.mrf.mxu0
        %v3103 = vadd.f32 %v3074, %v3102
        %3104 = vmatmul.f32.gmra.mxu0 %v2668
        %v3105 = vpop.f32.mrf.mxu0
        %v3106 = vadd.f32 %v3077, %v3105
        %3107 = vdwg.mxu0
        %3108 = vmatpush.msra.mxu0 %v2801
        %3109 = vmatpush.msra.mxu0 %v2793
        %3110 = vmatpush.msra.mxu0 %v2785
        %3111 = vmatpush.msra.mxu0 %v2777
        %3112 = vmatpush.msra.mxu0 %v2769
        %3113 = vmatpush.msra.mxu0 %v2761
        %3114 = vmatpush.msra.mxu0 %v2753
        %3115 = vmatpush.msra.mxu0 %v2745
        %3116 = vmatpush.msra.mxu0 %v2737
        %3117 = vmatpush.msra.mxu0 %v2729
        %3118 = vmatpush.msra.mxu0 %v2721
        %3119 = vmatpush.msra.mxu0 %v2713
        %3120 = vmatpush.msra.mxu0 %v2705
        %3121 = vmatpush.msra.mxu0 %v2697
        %3122 = vmatpush.msra.mxu0 %v2689
        %3123 = vmatpush.msra.mxu0 %v2681
        %3124 = vmatmul.f32.gmra.mxu0 %v2651
        %v3125 = vpop.f32.mrf.mxu0
        %v3126 = vadd.f32 0.0, %v3125
        %3127 = vmatmul.f32.gmra.mxu0 %v2656
        %v3128 = vpop.f32.mrf.mxu0
        %v3129 = vadd.f32 0.0, %v3128
        %3130 = vmatmul.f32.gmra.mxu0 %v2661
        %v3131 = vpop.f32.mrf.mxu0
        %v3132 = vadd.f32 0.0, %v3131
        %3133 = vmatmul.f32.gmra.mxu0 %v2666
        %v3134 = vpop.f32.mrf.mxu0
        %v3135 = vadd.f32 0.0, %v3134
        %3136 = vdwg.mxu0
        %3137 = vmatpush.msra.mxu0 %v2929
        %3138 = vmatpush.msra.mxu0 %v2921
        %3139 = vmatpush.msra.mxu0 %v2913
        %3140 = vmatpush.msra.mxu0 %v2905
        %3141 = vmatpush.msra.mxu0 %v2897
        %3142 = vmatpush.msra.mxu0 %v2889
        %3143 = vmatpush.msra.mxu0 %v2881
        %3144 = vmatpush.msra.mxu0 %v2873
        %3145 = vmatpush.msra.mxu0 %v2865
        %3146 = vmatpush.msra.mxu0 %v2857
        %3147 = vmatpush.msra.mxu0 %v2849
        %3148 = vmatpush.msra.mxu0 %v2841
        %3149 = vmatpush.msra.mxu0 %v2833
        %3150 = vmatpush.msra.mxu0 %v2825
        %3151 = vmatpush.msra.mxu0 %v2817
        %3152 = vmatpush.msra.mxu0 %v2809
        %3153 = vmatmul.f32.gmra.mxu0 %v2654
        %v3154 = vpop.f32.mrf.mxu0
        %v3155 = vadd.f32 %v3126, %v3154
        %3156 = vmatmul.f32.gmra.mxu0 %v2658
        %v3157 = vpop.f32.mrf.mxu0
        %v3158 = vadd.f32 %v3129, %v3157
        %3159 = vmatmul.f32.gmra.mxu0 %v2664
        %v3160 = vpop.f32.mrf.mxu0
        %v3161 = vadd.f32 %v3132, %v3160
        %3162 = vmatmul.f32.gmra.mxu0 %v2668
        %v3163 = vpop.f32.mrf.mxu0
        %v3164 = vadd.f32 %v3135, %v3163
        %3165 = vdwg.mxu0
        %3166 = vmatpush.msra.mxu0 %v2802
        %3167 = vmatpush.msra.mxu0 %v2794
        %3168 = vmatpush.msra.mxu0 %v2786
        %3169 = vmatpush.msra.mxu0 %v2778
        %3170 = vmatpush.msra.mxu0 %v2770
        %3171 = vmatpush.msra.mxu0 %v2762
        %3172 = vmatpush.msra.mxu0 %v2754
        %3173 = vmatpush.msra.mxu0 %v2746
        %3174 = vmatpush.msra.mxu0 %v2738
        %3175 = vmatpush.msra.mxu0 %v2730
        %3176 = vmatpush.msra.mxu0 %v2722
        %3177 = vmatpush.msra.mxu0 %v2714
        %3178 = vmatpush.msra.mxu0 %v2706
        %3179 = vmatpush.msra.mxu0 %v2698
        %3180 = vmatpush.msra.mxu0 %v2690
        %3181 = vmatpush.msra.mxu0 %v2682
        %3182 = vmatmul.f32.gmra.mxu0 %v2651
        %v3183 = vpop.f32.mrf.mxu0
        %v3184 = vadd.f32 0.0, %v3183
        %3185 = vmatmul.f32.gmra.mxu0 %v2656
        %v3186 = vpop.f32.mrf.mxu0
        %v3187 = vadd.f32 0.0, %v3186
        %3188 = vmatmul.f32.gmra.mxu0 %v2661
        %v3189 = vpop.f32.mrf.mxu0
        %v3190 = vadd.f32 0.0, %v3189
        %3191 = vmatmul.f32.gmra.mxu0 %v2666
        %v3192 = vpop.f32.mrf.mxu0
        %v3193 = vadd.f32 0.0, %v3192
        %3194 = vdwg.mxu0
        %3195 = vmatpush.msra.mxu0 %v2930
        %3196 = vmatpush.msra.mxu0 %v2922
        %3197 = vmatpush.msra.mxu0 %v2914
        %3198 = vmatpush.msra.mxu0 %v2906
        %3199 = vmatpush.msra.mxu0 %v2898
        %3200 = vmatpush.msra.mxu0 %v2890
        %3201 = vmatpush.msra.mxu0 %v2882
        %3202 = vmatpush.msra.mxu0 %v2874
        %3203 = vmatpush.msra.mxu0 %v2866
        %3204 = vmatpush.msra.mxu0 %v2858
        %3205 = vmatpush.msra.mxu0 %v2850
        %3206 = vmatpush.msra.mxu0 %v2842
        %3207 = vmatpush.msra.mxu0 %v2834
        %3208 = vmatpush.msra.mxu0 %v2826
        %3209 = vmatpush.msra.mxu0 %v2818
        %3210 = vmatpush.msra.mxu0 %v2810
        %3211 = vmatmul.f32.gmra.mxu0 %v2654
        %v3212 = vpop.f32.mrf.mxu0
        %v3213 = vadd.f32 %v3184, %v3212
        %3214 = vmatmul.f32.gmra.mxu0 %v2658
        %v3215 = vpop.f32.mrf.mxu0
        %v3216 = vadd.f32 %v3187, %v3215
        %3217 = vmatmul.f32.gmra.mxu0 %v2664
        %v3218 = vpop.f32.mrf.mxu0
        %v3219 = vadd.f32 %v3190, %v3218
        %3220 = vmatmul.f32.gmra.mxu0 %v2668
        %v3221 = vpop.f32.mrf.mxu0
        %v3222 = vadd.f32 %v3193, %v3221
        %3223 = vdwg.mxu0
        %3224 = vmatpush.msra.mxu0 %v2803
        %3225 = vmatpush.msra.mxu0 %v2795
        %3226 = vmatpush.msra.mxu0 %v2787
        %3227 = vmatpush.msra.mxu0 %v2779
        %3228 = vmatpush.msra.mxu0 %v2771
        %3229 = vmatpush.msra.mxu0 %v2763
        %3230 = vmatpush.msra.mxu0 %v2755
        %3231 = vmatpush.msra.mxu0 %v2747
        %3232 = vmatpush.msra.mxu0 %v2739
        %3233 = vmatpush.msra.mxu0 %v2731
        %3234 = vmatpush.msra.mxu0 %v2723
        %3235 = vmatpush.msra.mxu0 %v2715
        %3236 = vmatpush.msra.mxu0 %v2707
        %3237 = vmatpush.msra.mxu0 %v2699
        %3238 = vmatpush.msra.mxu0 %v2691
        %3239 = vmatpush.msra.mxu0 %v2683
        %3240 = vmatmul.f32.gmra.mxu0 %v2651
        %v3241 = vpop.f32.mrf.mxu0
        %v3242 = vadd.f32 0.0, %v3241
        %3243 = vmatmul.f32.gmra.mxu0 %v2656
        %v3244 = vpop.f32.mrf.mxu0
        %v3245 = vadd.f32 0.0, %v3244
        %3246 = vmatmul.f32.gmra.mxu0 %v2661
        %v3247 = vpop.f32.mrf.mxu0
        %v3248 = vadd.f32 0.0, %v3247
        %3249 = vmatmul.f32.gmra.mxu0 %v2666
        %v3250 = vpop.f32.mrf.mxu0
        %v3251 = vadd.f32 0.0, %v3250
        %3252 = vdwg.mxu0
        %3253 = vmatpush.msra.mxu0 %v2931
        %3254 = vmatpush.msra.mxu0 %v2923
        %3255 = vmatpush.msra.mxu0 %v2915
        %3256 = vmatpush.msra.mxu0 %v2907
        %3257 = vmatpush.msra.mxu0 %v2899
        %3258 = vmatpush.msra.mxu0 %v2891
        %3259 = vmatpush.msra.mxu0 %v2883
        %3260 = vmatpush.msra.mxu0 %v2875
        %3261 = vmatpush.msra.mxu0 %v2867
        %3262 = vmatpush.msra.mxu0 %v2859
        %3263 = vmatpush.msra.mxu0 %v2851
        %3264 = vmatpush.msra.mxu0 %v2843
        %3265 = vmatpush.msra.mxu0 %v2835
        %3266 = vmatpush.msra.mxu0 %v2827
        %3267 = vmatpush.msra.mxu0 %v2819
        %3268 = vmatpush.msra.mxu0 %v2811
        %3269 = vmatmul.f32.gmra.mxu0 %v2654
        %v3270 = vpop.f32.mrf.mxu0
        %v3271 = vadd.f32 %v3242, %v3270
        %3272 = vmatmul.f32.gmra.mxu0 %v2658
        %v3273 = vpop.f32.mrf.mxu0
        %v3274 = vadd.f32 %v3245, %v3273
        %3275 = vmatmul.f32.gmra.mxu0 %v2664
        %v3276 = vpop.f32.mrf.mxu0
        %v3277 = vadd.f32 %v3248, %v3276
        %3278 = vmatmul.f32.gmra.mxu0 %v2668
        %v3279 = vpop.f32.mrf.mxu0
        %v3280 = vadd.f32 %v3251, %v3279
        %3281 = vdwg.mxu0
        %3282 = vmatpush.msra.mxu0 %v2804
        %3283 = vmatpush.msra.mxu0 %v2796
        %3284 = vmatpush.msra.mxu0 %v2788
        %3285 = vmatpush.msra.mxu0 %v2780
        %3286 = vmatpush.msra.mxu0 %v2772
        %3287 = vmatpush.msra.mxu0 %v2764
        %3288 = vmatpush.msra.mxu0 %v2756
        %3289 = vmatpush.msra.mxu0 %v2748
        %3290 = vmatpush.msra.mxu0 %v2740
        %3291 = vmatpush.msra.mxu0 %v2732
        %3292 = vmatpush.msra.mxu0 %v2724
        %3293 = vmatpush.msra.mxu0 %v2716
        %3294 = vmatpush.msra.mxu0 %v2708
        %3295 = vmatpush.msra.mxu0 %v2700
        %3296 = vmatpush.msra.mxu0 %v2692
        %3297 = vmatpush.msra.mxu0 %v2684
        %3298 = vmatmul.f32.gmra.mxu0 %v2651
        %v3299 = vpop.f32.mrf.mxu0
        %v3300 = vadd.f32 0.0, %v3299
        %3301 = vmatmul.f32.gmra.mxu0 %v2656
        %v3302 = vpop.f32.mrf.mxu0
        %v3303 = vadd.f32 0.0, %v3302
        %3304 = vmatmul.f32.gmra.mxu0 %v2661
        %v3305 = vpop.f32.mrf.mxu0
        %v3306 = vadd.f32 0.0, %v3305
        %3307 = vmatmul.f32.gmra.mxu0 %v2666
        %v3308 = vpop.f32.mrf.mxu0
        %v3309 = vadd.f32 0.0, %v3308
        %3310 = vdwg.mxu0
        %3311 = vmatpush.msra.mxu0 %v2932
        %3312 = vmatpush.msra.mxu0 %v2924
        %3313 = vmatpush.msra.mxu0 %v2916
        %3314 = vmatpush.msra.mxu0 %v2908
        %3315 = vmatpush.msra.mxu0 %v2900
        %3316 = vmatpush.msra.mxu0 %v2892
        %3317 = vmatpush.msra.mxu0 %v2884
        %3318 = vmatpush.msra.mxu0 %v2876
        %3319 = vmatpush.msra.mxu0 %v2868
        %3320 = vmatpush.msra.mxu0 %v2860
        %3321 = vmatpush.msra.mxu0 %v2852
        %3322 = vmatpush.msra.mxu0 %v2844
        %3323 = vmatpush.msra.mxu0 %v2836
        %3324 = vmatpush.msra.mxu0 %v2828
        %3325 = vmatpush.msra.mxu0 %v2820
        %3326 = vmatpush.msra.mxu0 %v2812
        %3327 = vmatmul.f32.gmra.mxu0 %v2654
        %v3328 = vpop.f32.mrf.mxu0
        %v3329 = vadd.f32 %v3300, %v3328
        %3330 = vmatmul.f32.gmra.mxu0 %v2658
        %v3331 = vpop.f32.mrf.mxu0
        %v3332 = vadd.f32 %v3303, %v3331
        %3333 = vmatmul.f32.gmra.mxu0 %v2664
        %v3334 = vpop.f32.mrf.mxu0
        %v3335 = vadd.f32 %v3306, %v3334
        %3336 = vmatmul.f32.gmra.mxu0 %v2668
        %v3337 = vpop.f32.mrf.mxu0
        %v3338 = vadd.f32 %v3309, %v3337
        %3339 = vdwg.mxu0
        %3340 = vmatpush.msra.mxu0 %v2805
        %3341 = vmatpush.msra.mxu0 %v2797
        %3342 = vmatpush.msra.mxu0 %v2789
        %3343 = vmatpush.msra.mxu0 %v2781
        %3344 = vmatpush.msra.mxu0 %v2773
        %3345 = vmatpush.msra.mxu0 %v2765
        %3346 = vmatpush.msra.mxu0 %v2757
        %3347 = vmatpush.msra.mxu0 %v2749
        %3348 = vmatpush.msra.mxu0 %v2741
        %3349 = vmatpush.msra.mxu0 %v2733
        %3350 = vmatpush.msra.mxu0 %v2725
        %3351 = vmatpush.msra.mxu0 %v2717
        %3352 = vmatpush.msra.mxu0 %v2709
        %3353 = vmatpush.msra.mxu0 %v2701
        %3354 = vmatpush.msra.mxu0 %v2693
        %3355 = vmatpush.msra.mxu0 %v2685
        %3356 = vmatmul.f32.gmra.mxu0 %v2651
        %v3357 = vpop.f32.mrf.mxu0
        %v3358 = vadd.f32 0.0, %v3357
        %3359 = vmatmul.f32.gmra.mxu0 %v2656
        %v3360 = vpop.f32.mrf.mxu0
        %v3361 = vadd.f32 0.0, %v3360
        %3362 = vmatmul.f32.gmra.mxu0 %v2661
        %v3363 = vpop.f32.mrf.mxu0
        %v3364 = vadd.f32 0.0, %v3363
        %3365 = vmatmul.f32.gmra.mxu0 %v2666
        %v3366 = vpop.f32.mrf.mxu0
        %v3367 = vadd.f32 0.0, %v3366
        %3368 = vdwg.mxu0
        %3369 = vmatpush.msra.mxu0 %v2933
        %3370 = vmatpush.msra.mxu0 %v2925
        %3371 = vmatpush.msra.mxu0 %v2917
        %3372 = vmatpush.msra.mxu0 %v2909
        %3373 = vmatpush.msra.mxu0 %v2901
        %3374 = vmatpush.msra.mxu0 %v2893
        %3375 = vmatpush.msra.mxu0 %v2885
        %3376 = vmatpush.msra.mxu0 %v2877
        %3377 = vmatpush.msra.mxu0 %v2869
        %3378 = vmatpush.msra.mxu0 %v2861
        %3379 = vmatpush.msra.mxu0 %v2853
        %3380 = vmatpush.msra.mxu0 %v2845
        %3381 = vmatpush.msra.mxu0 %v2837
        %3382 = vmatpush.msra.mxu0 %v2829
        %3383 = vmatpush.msra.mxu0 %v2821
        %3384 = vmatpush.msra.mxu0 %v2813
        %3385 = vmatmul.f32.gmra.mxu0 %v2654
        %v3386 = vpop.f32.mrf.mxu0
        %v3387 = vadd.f32 %v3358, %v3386
        %3388 = vmatmul.f32.gmra.mxu0 %v2658
        %v3389 = vpop.f32.mrf.mxu0
        %v3390 = vadd.f32 %v3361, %v3389
        %3391 = vmatmul.f32.gmra.mxu0 %v2664
        %v3392 = vpop.f32.mrf.mxu0
        %v3393 = vadd.f32 %v3364, %v3392
        %3394 = vmatmul.f32.gmra.mxu0 %v2668
        %v3395 = vpop.f32.mrf.mxu0
        %v3396 = vadd.f32 %v3367, %v3395
        %3397 = vdwg.mxu0
        %v3398 = vadd.f32 %v2616, %v2981
        %v3399 = vadd.f32 %v2617, %v3039
        %v3400 = vadd.f32 %v2618, %v3097
        %v3401 = vadd.f32 %v2619, %v3155
        %v3402 = vadd.f32 %v2620, %v3213
        %v3403 = vadd.f32 %v2621, %v3271
        %v3404 = vadd.f32 %v2622, %v3329
        %v3405 = vadd.f32 %v2623, %v3387
        %v3406 = vadd.f32 %v2624, %v2984
        %v3407 = vadd.f32 %v2625, %v3042
        %v3408 = vadd.f32 %v2626, %v3100
        %v3409 = vadd.f32 %v2627, %v3158
        %v3410 = vadd.f32 %v2628, %v3216
        %v3411 = vadd.f32 %v2629, %v3274
        %v3412 = vadd.f32 %v2630, %v3332
        %v3413 = vadd.f32 %v2631, %v3390
        %v3414 = vadd.f32 %v2632, %v2987
        %v3415 = vadd.f32 %v2633, %v3045
        %v3416 = vadd.f32 %v2634, %v3103
        %v3417 = vadd.f32 %v2635, %v3161
        %v3418 = vadd.f32 %v2636, %v3219
        %v3419 = vadd.f32 %v2637, %v3277
        %v3420 = vadd.f32 %v2638, %v3335
        %v3421 = vadd.f32 %v2639, %v3393
        %v3422 = vadd.f32 %v2640, %v2990
        %v3423 = vadd.f32 %v2641, %v3048
        %v3424 = vadd.f32 %v2642, %v3106
        %v3425 = vadd.f32 %v2643, %v3164
        %v3426 = vadd.f32 %v2644, %v3222
        %v3427 = vadd.f32 %v2645, %v3280
        %v3428 = vadd.f32 %v2646, %v3338
        %v3429 = vadd.f32 %v2647, %v3396
        %vm3430 = vcmask 1043456
        %v3431 = vrot.slane %v308, 4
        %v3432 = vrot.slane %v310, 4
        %v3433 = vsel %vm3430, %v3431, %v3432
        %v3434 = vrot.slane %v309, 4
        %v3435 = vrot.slane %v311, 4
        %v3436 = vsel %vm3430, %v3434, %v3435
        %v3437 = vrot.slane %v312, 4
        %v3438 = vsel %vm3430, %v3432, %v3437
        %v3439 = vrot.slane %v313, 4
        %v3440 = vsel %vm3430, %v3435, %v3439
        %v3441 = vrot.slane %v314, 4
        %v3442 = vrot.slane %v316, 4
        %v3443 = vsel %vm3430, %v3441, %v3442
        %v3444 = vrot.slane %v315, 4
        %v3445 = vrot.slane %v317, 4
        %v3446 = vsel %vm3430, %v3444, %v3445
        %v3447 = vrot.slane %v318, 4
        %v3448 = vsel %vm3430, %v3442, %v3447
        %v3449 = vrot.slane %v319, 4
        %v3450 = vsel %vm3430, %v3445, %v3449
        %s3459 = scalar_lea.vmem %s217, 8192 [#allocation7]
        %v3460 = vld [vmem:[%s3459] sm:$0xff]
        %v3461 = vld [vmem:[%s3459 + $0x8] sm:$0xff]
        %v3462 = vld [vmem:[%s3459 + $0x10] sm:$0xff]
        %v3463 = vld [vmem:[%s3459 + $0x18] sm:$0xff]
        %v3464 = vld [vmem:[%s3459 + $0x20] sm:$0xff]
        %v3465 = vld [vmem:[%s3459 + $0x28] sm:$0xff]
        %v3466 = vld [vmem:[%s3459 + $0x30] sm:$0xff]
        %v3467 = vld [vmem:[%s3459 + $0x38] sm:$0xff]
        %v3468 = vld [vmem:[%s3459 + $0x40] sm:$0xff]
        %v3469 = vld [vmem:[%s3459 + $0x48] sm:$0xff]
        %v3470 = vld [vmem:[%s3459 + $0x50] sm:$0xff]
        %v3471 = vld [vmem:[%s3459 + $0x58] sm:$0xff]
        %v3472 = vld [vmem:[%s3459 + $0x60] sm:$0xff]
        %v3473 = vld [vmem:[%s3459 + $0x68] sm:$0xff]
        %v3474 = vld [vmem:[%s3459 + $0x70] sm:$0xff]
        %v3475 = vld [vmem:[%s3459 + $0x78] sm:$0xff]
        %v3476 = vld [vmem:[%s3459 + $0x80] sm:$0xff]
        %v3477 = vld [vmem:[%s3459 + $0x88] sm:$0xff]
        %v3478 = vld [vmem:[%s3459 + $0x90] sm:$0xff]
        %v3479 = vld [vmem:[%s3459 + $0x98] sm:$0xff]
        %v3480 = vld [vmem:[%s3459 + $0xa0] sm:$0xff]
        %v3481 = vld [vmem:[%s3459 + $0xa8] sm:$0xff]
        %v3482 = vld [vmem:[%s3459 + $0xb0] sm:$0xff]
        %v3483 = vld [vmem:[%s3459 + $0xb8] sm:$0xff]
        %v3484 = vld [vmem:[%s3459 + $0xc0] sm:$0xff]
        %v3485 = vld [vmem:[%s3459 + $0xc8] sm:$0xff]
        %v3486 = vld [vmem:[%s3459 + $0xd0] sm:$0xff]
        %v3487 = vld [vmem:[%s3459 + $0xd8] sm:$0xff]
        %v3488 = vld [vmem:[%s3459 + $0xe0] sm:$0xff]
        %v3489 = vld [vmem:[%s3459 + $0xe8] sm:$0xff]
        %v3490 = vld [vmem:[%s3459 + $0xf0] sm:$0xff]
        %v3491 = vld [vmem:[%s3459 + $0xf8] sm:$0xff]
        %v3492 = vld [vmem:[%s3459 + $0x100] sm:$0xff]
        %v3493 = vld [vmem:[%s3459 + $0x108] sm:$0xff]
        %v3494 = vld [vmem:[%s3459 + $0x110] sm:$0xff]
        %v3495 = vld [vmem:[%s3459 + $0x118] sm:$0xff]
        %v3496 = vld [vmem:[%s3459 + $0x120] sm:$0xff]
        %v3497 = vld [vmem:[%s3459 + $0x128] sm:$0xff]
        %v3498 = vld [vmem:[%s3459 + $0x130] sm:$0xff]
        %v3499 = vld [vmem:[%s3459 + $0x138] sm:$0xff]
        %v3500 = vld [vmem:[%s3459 + $0x140] sm:$0xff]
        %v3501 = vld [vmem:[%s3459 + $0x148] sm:$0xff]
        %v3502 = vld [vmem:[%s3459 + $0x150] sm:$0xff]
        %v3503 = vld [vmem:[%s3459 + $0x158] sm:$0xff]
        %v3504 = vld [vmem:[%s3459 + $0x160] sm:$0xff]
        %v3505 = vld [vmem:[%s3459 + $0x168] sm:$0xff]
        %v3506 = vld [vmem:[%s3459 + $0x170] sm:$0xff]
        %v3507 = vld [vmem:[%s3459 + $0x178] sm:$0xff]
        %v3508 = vld [vmem:[%s3459 + $0x180] sm:$0xff]
        %v3509 = vld [vmem:[%s3459 + $0x188] sm:$0xff]
        %v3510 = vld [vmem:[%s3459 + $0x190] sm:$0xff]
        %v3511 = vld [vmem:[%s3459 + $0x198] sm:$0xff]
        %v3512 = vld [vmem:[%s3459 + $0x1a0] sm:$0xff]
        %v3513 = vld [vmem:[%s3459 + $0x1a8] sm:$0xff]
        %v3514 = vld [vmem:[%s3459 + $0x1b0] sm:$0xff]
        %v3515 = vld [vmem:[%s3459 + $0x1b8] sm:$0xff]
        %v3516 = vld [vmem:[%s3459 + $0x1c0] sm:$0xff]
        %v3517 = vld [vmem:[%s3459 + $0x1c8] sm:$0xff]
        %v3518 = vld [vmem:[%s3459 + $0x1d0] sm:$0xff]
        %v3519 = vld [vmem:[%s3459 + $0x1d8] sm:$0xff]
        %v3520 = vld [vmem:[%s3459 + $0x1e0] sm:$0xff]
        %v3521 = vld [vmem:[%s3459 + $0x1e8] sm:$0xff]
        %v3522 = vld [vmem:[%s3459 + $0x1f0] sm:$0xff]
        %v3523 = vld [vmem:[%s3459 + $0x1f8] sm:$0xff]
        %v3524 = vld [vmem:[%s3459 + $0x200] sm:$0xff]
        %v3525 = vld [vmem:[%s3459 + $0x208] sm:$0xff]
        %v3526 = vld [vmem:[%s3459 + $0x210] sm:$0xff]
        %v3527 = vld [vmem:[%s3459 + $0x218] sm:$0xff]
        %v3528 = vld [vmem:[%s3459 + $0x220] sm:$0xff]
        %v3529 = vld [vmem:[%s3459 + $0x228] sm:$0xff]
        %v3530 = vld [vmem:[%s3459 + $0x230] sm:$0xff]
        %v3531 = vld [vmem:[%s3459 + $0x238] sm:$0xff]
        %v3532 = vld [vmem:[%s3459 + $0x240] sm:$0xff]
        %v3533 = vld [vmem:[%s3459 + $0x248] sm:$0xff]
        %v3534 = vld [vmem:[%s3459 + $0x250] sm:$0xff]
        %v3535 = vld [vmem:[%s3459 + $0x258] sm:$0xff]
        %v3536 = vld [vmem:[%s3459 + $0x260] sm:$0xff]
        %v3537 = vld [vmem:[%s3459 + $0x268] sm:$0xff]
        %v3538 = vld [vmem:[%s3459 + $0x270] sm:$0xff]
        %v3539 = vld [vmem:[%s3459 + $0x278] sm:$0xff]
        %v3540 = vld [vmem:[%s3459 + $0x280] sm:$0xff]
        %v3541 = vld [vmem:[%s3459 + $0x288] sm:$0xff]
        %v3542 = vld [vmem:[%s3459 + $0x290] sm:$0xff]
        %v3543 = vld [vmem:[%s3459 + $0x298] sm:$0xff]
        %v3544 = vld [vmem:[%s3459 + $0x2a0] sm:$0xff]
        %v3545 = vld [vmem:[%s3459 + $0x2a8] sm:$0xff]
        %v3546 = vld [vmem:[%s3459 + $0x2b0] sm:$0xff]
        %v3547 = vld [vmem:[%s3459 + $0x2b8] sm:$0xff]
        %v3548 = vld [vmem:[%s3459 + $0x2c0] sm:$0xff]
        %v3549 = vld [vmem:[%s3459 + $0x2c8] sm:$0xff]
        %v3550 = vld [vmem:[%s3459 + $0x2d0] sm:$0xff]
        %v3551 = vld [vmem:[%s3459 + $0x2d8] sm:$0xff]
        %v3552 = vld [vmem:[%s3459 + $0x2e0] sm:$0xff]
        %v3553 = vld [vmem:[%s3459 + $0x2e8] sm:$0xff]
        %v3554 = vld [vmem:[%s3459 + $0x2f0] sm:$0xff]
        %v3555 = vld [vmem:[%s3459 + $0x2f8] sm:$0xff]
        %v3556 = vld [vmem:[%s3459 + $0x300] sm:$0xff]
        %v3557 = vld [vmem:[%s3459 + $0x308] sm:$0xff]
        %v3558 = vld [vmem:[%s3459 + $0x310] sm:$0xff]
        %v3559 = vld [vmem:[%s3459 + $0x318] sm:$0xff]
        %v3560 = vld [vmem:[%s3459 + $0x320] sm:$0xff]
        %v3561 = vld [vmem:[%s3459 + $0x328] sm:$0xff]
        %v3562 = vld [vmem:[%s3459 + $0x330] sm:$0xff]
        %v3563 = vld [vmem:[%s3459 + $0x338] sm:$0xff]
        %v3564 = vld [vmem:[%s3459 + $0x340] sm:$0xff]
        %v3565 = vld [vmem:[%s3459 + $0x348] sm:$0xff]
        %v3566 = vld [vmem:[%s3459 + $0x350] sm:$0xff]
        %v3567 = vld [vmem:[%s3459 + $0x358] sm:$0xff]
        %v3568 = vld [vmem:[%s3459 + $0x360] sm:$0xff]
        %v3569 = vld [vmem:[%s3459 + $0x368] sm:$0xff]
        %v3570 = vld [vmem:[%s3459 + $0x370] sm:$0xff]
        %v3571 = vld [vmem:[%s3459 + $0x378] sm:$0xff]
        %v3572 = vld [vmem:[%s3459 + $0x380] sm:$0xff]
        %v3573 = vld [vmem:[%s3459 + $0x388] sm:$0xff]
        %v3574 = vld [vmem:[%s3459 + $0x390] sm:$0xff]
        %v3575 = vld [vmem:[%s3459 + $0x398] sm:$0xff]
        %v3576 = vld [vmem:[%s3459 + $0x3a0] sm:$0xff]
        %v3577 = vld [vmem:[%s3459 + $0x3a8] sm:$0xff]
        %v3578 = vld [vmem:[%s3459 + $0x3b0] sm:$0xff]
        %v3579 = vld [vmem:[%s3459 + $0x3b8] sm:$0xff]
        %v3580 = vld [vmem:[%s3459 + $0x3c0] sm:$0xff]
        %v3581 = vld [vmem:[%s3459 + $0x3c8] sm:$0xff]
        %v3582 = vld [vmem:[%s3459 + $0x3d0] sm:$0xff]
        %v3583 = vld [vmem:[%s3459 + $0x3d8] sm:$0xff]
        %v3584 = vld [vmem:[%s3459 + $0x3e0] sm:$0xff]
        %v3585 = vld [vmem:[%s3459 + $0x3e8] sm:$0xff]
        %v3586 = vld [vmem:[%s3459 + $0x3f0] sm:$0xff]
        %v3587 = vld [vmem:[%s3459 + $0x3f8] sm:$0xff]
        %v3588 = vld [vmem:[%s3459 + $0x400] sm:$0xff]
        %v3589 = vld [vmem:[%s3459 + $0x408] sm:$0xff]
        %v3590 = vld [vmem:[%s3459 + $0x410] sm:$0xff]
        %v3591 = vld [vmem:[%s3459 + $0x418] sm:$0xff]
        %v3592 = vld [vmem:[%s3459 + $0x420] sm:$0xff]
        %v3593 = vld [vmem:[%s3459 + $0x428] sm:$0xff]
        %v3594 = vld [vmem:[%s3459 + $0x430] sm:$0xff]
        %v3595 = vld [vmem:[%s3459 + $0x438] sm:$0xff]
        %v3596 = vld [vmem:[%s3459 + $0x440] sm:$0xff]
        %v3597 = vld [vmem:[%s3459 + $0x448] sm:$0xff]
        %v3598 = vld [vmem:[%s3459 + $0x450] sm:$0xff]
        %v3599 = vld [vmem:[%s3459 + $0x458] sm:$0xff]
        %v3600 = vld [vmem:[%s3459 + $0x460] sm:$0xff]
        %v3601 = vld [vmem:[%s3459 + $0x468] sm:$0xff]
        %v3602 = vld [vmem:[%s3459 + $0x470] sm:$0xff]
        %v3603 = vld [vmem:[%s3459 + $0x478] sm:$0xff]
        %v3604 = vld [vmem:[%s3459 + $0x480] sm:$0xff]
        %v3605 = vld [vmem:[%s3459 + $0x488] sm:$0xff]
        %v3606 = vld [vmem:[%s3459 + $0x490] sm:$0xff]
        %v3607 = vld [vmem:[%s3459 + $0x498] sm:$0xff]
        %v3608 = vld [vmem:[%s3459 + $0x4a0] sm:$0xff]
        %v3609 = vld [vmem:[%s3459 + $0x4a8] sm:$0xff]
        %v3610 = vld [vmem:[%s3459 + $0x4b0] sm:$0xff]
        %v3611 = vld [vmem:[%s3459 + $0x4b8] sm:$0xff]
        %v3612 = vld [vmem:[%s3459 + $0x4c0] sm:$0xff]
        %v3613 = vld [vmem:[%s3459 + $0x4c8] sm:$0xff]
        %v3614 = vld [vmem:[%s3459 + $0x4d0] sm:$0xff]
        %v3615 = vld [vmem:[%s3459 + $0x4d8] sm:$0xff]
        %v3616 = vld [vmem:[%s3459 + $0x4e0] sm:$0xff]
        %v3617 = vld [vmem:[%s3459 + $0x4e8] sm:$0xff]
        %v3618 = vld [vmem:[%s3459 + $0x4f0] sm:$0xff]
        %v3619 = vld [vmem:[%s3459 + $0x4f8] sm:$0xff]
        %v3620 = vld [vmem:[%s3459 + $0x500] sm:$0xff]
        %v3621 = vld [vmem:[%s3459 + $0x508] sm:$0xff]
        %v3622 = vld [vmem:[%s3459 + $0x510] sm:$0xff]
        %v3623 = vld [vmem:[%s3459 + $0x518] sm:$0xff]
        %v3624 = vld [vmem:[%s3459 + $0x520] sm:$0xff]
        %v3625 = vld [vmem:[%s3459 + $0x528] sm:$0xff]
        %v3626 = vld [vmem:[%s3459 + $0x530] sm:$0xff]
        %v3627 = vld [vmem:[%s3459 + $0x538] sm:$0xff]
        %v3628 = vld [vmem:[%s3459 + $0x540] sm:$0xff]
        %v3629 = vld [vmem:[%s3459 + $0x548] sm:$0xff]
        %v3630 = vld [vmem:[%s3459 + $0x550] sm:$0xff]
        %v3631 = vld [vmem:[%s3459 + $0x558] sm:$0xff]
        %v3632 = vld [vmem:[%s3459 + $0x560] sm:$0xff]
        %v3633 = vld [vmem:[%s3459 + $0x568] sm:$0xff]
        %v3634 = vld [vmem:[%s3459 + $0x570] sm:$0xff]
        %v3635 = vld [vmem:[%s3459 + $0x578] sm:$0xff]
        %v3636 = vld [vmem:[%s3459 + $0x580] sm:$0xff]
        %v3637 = vld [vmem:[%s3459 + $0x588] sm:$0xff]
        %v3638 = vld [vmem:[%s3459 + $0x590] sm:$0xff]
        %v3639 = vld [vmem:[%s3459 + $0x598] sm:$0xff]
        %v3640 = vld [vmem:[%s3459 + $0x5a0] sm:$0xff]
        %v3641 = vld [vmem:[%s3459 + $0x5a8] sm:$0xff]
        %v3642 = vld [vmem:[%s3459 + $0x5b0] sm:$0xff]
        %v3643 = vld [vmem:[%s3459 + $0x5b8] sm:$0xff]
        %v3644 = vld [vmem:[%s3459 + $0x5c0] sm:$0xff]
        %v3645 = vld [vmem:[%s3459 + $0x5c8] sm:$0xff]
        %v3646 = vld [vmem:[%s3459 + $0x5d0] sm:$0xff]
        %v3647 = vld [vmem:[%s3459 + $0x5d8] sm:$0xff]
        %v3648 = vld [vmem:[%s3459 + $0x5e0] sm:$0xff]
        %v3649 = vld [vmem:[%s3459 + $0x5e8] sm:$0xff]
        %v3650 = vld [vmem:[%s3459 + $0x5f0] sm:$0xff]
        %v3651 = vld [vmem:[%s3459 + $0x5f8] sm:$0xff]
        %v3652 = vld [vmem:[%s3459 + $0x600] sm:$0xff]
        %v3653 = vld [vmem:[%s3459 + $0x608] sm:$0xff]
        %v3654 = vld [vmem:[%s3459 + $0x610] sm:$0xff]
        %v3655 = vld [vmem:[%s3459 + $0x618] sm:$0xff]
        %v3656 = vld [vmem:[%s3459 + $0x620] sm:$0xff]
        %v3657 = vld [vmem:[%s3459 + $0x628] sm:$0xff]
        %v3658 = vld [vmem:[%s3459 + $0x630] sm:$0xff]
        %v3659 = vld [vmem:[%s3459 + $0x638] sm:$0xff]
        %v3660 = vld [vmem:[%s3459 + $0x640] sm:$0xff]
        %v3661 = vld [vmem:[%s3459 + $0x648] sm:$0xff]
        %v3662 = vld [vmem:[%s3459 + $0x650] sm:$0xff]
        %v3663 = vld [vmem:[%s3459 + $0x658] sm:$0xff]
        %v3664 = vld [vmem:[%s3459 + $0x660] sm:$0xff]
        %v3665 = vld [vmem:[%s3459 + $0x668] sm:$0xff]
        %v3666 = vld [vmem:[%s3459 + $0x670] sm:$0xff]
        %v3667 = vld [vmem:[%s3459 + $0x678] sm:$0xff]
        %v3668 = vld [vmem:[%s3459 + $0x680] sm:$0xff]
        %v3669 = vld [vmem:[%s3459 + $0x688] sm:$0xff]
        %v3670 = vld [vmem:[%s3459 + $0x690] sm:$0xff]
        %v3671 = vld [vmem:[%s3459 + $0x698] sm:$0xff]
        %v3672 = vld [vmem:[%s3459 + $0x6a0] sm:$0xff]
        %v3673 = vld [vmem:[%s3459 + $0x6a8] sm:$0xff]
        %v3674 = vld [vmem:[%s3459 + $0x6b0] sm:$0xff]
        %v3675 = vld [vmem:[%s3459 + $0x6b8] sm:$0xff]
        %v3676 = vld [vmem:[%s3459 + $0x6c0] sm:$0xff]
        %v3677 = vld [vmem:[%s3459 + $0x6c8] sm:$0xff]
        %v3678 = vld [vmem:[%s3459 + $0x6d0] sm:$0xff]
        %v3679 = vld [vmem:[%s3459 + $0x6d8] sm:$0xff]
        %v3680 = vld [vmem:[%s3459 + $0x6e0] sm:$0xff]
        %v3681 = vld [vmem:[%s3459 + $0x6e8] sm:$0xff]
        %v3682 = vld [vmem:[%s3459 + $0x6f0] sm:$0xff]
        %v3683 = vld [vmem:[%s3459 + $0x6f8] sm:$0xff]
        %v3684 = vld [vmem:[%s3459 + $0x700] sm:$0xff]
        %v3685 = vld [vmem:[%s3459 + $0x708] sm:$0xff]
        %v3686 = vld [vmem:[%s3459 + $0x710] sm:$0xff]
        %v3687 = vld [vmem:[%s3459 + $0x718] sm:$0xff]
        %v3688 = vld [vmem:[%s3459 + $0x720] sm:$0xff]
        %v3689 = vld [vmem:[%s3459 + $0x728] sm:$0xff]
        %v3690 = vld [vmem:[%s3459 + $0x730] sm:$0xff]
        %v3691 = vld [vmem:[%s3459 + $0x738] sm:$0xff]
        %v3692 = vld [vmem:[%s3459 + $0x740] sm:$0xff]
        %v3693 = vld [vmem:[%s3459 + $0x748] sm:$0xff]
        %v3694 = vld [vmem:[%s3459 + $0x750] sm:$0xff]
        %v3695 = vld [vmem:[%s3459 + $0x758] sm:$0xff]
        %v3696 = vld [vmem:[%s3459 + $0x760] sm:$0xff]
        %v3697 = vld [vmem:[%s3459 + $0x768] sm:$0xff]
        %v3698 = vld [vmem:[%s3459 + $0x770] sm:$0xff]
        %v3699 = vld [vmem:[%s3459 + $0x778] sm:$0xff]
        %v3700 = vld [vmem:[%s3459 + $0x780] sm:$0xff]
        %v3701 = vld [vmem:[%s3459 + $0x788] sm:$0xff]
        %v3702 = vld [vmem:[%s3459 + $0x790] sm:$0xff]
        %v3703 = vld [vmem:[%s3459 + $0x798] sm:$0xff]
        %v3704 = vld [vmem:[%s3459 + $0x7a0] sm:$0xff]
        %v3705 = vld [vmem:[%s3459 + $0x7a8] sm:$0xff]
        %v3706 = vld [vmem:[%s3459 + $0x7b0] sm:$0xff]
        %v3707 = vld [vmem:[%s3459 + $0x7b8] sm:$0xff]
        %v3708 = vld [vmem:[%s3459 + $0x7c0] sm:$0xff]
        %v3709 = vld [vmem:[%s3459 + $0x7c8] sm:$0xff]
        %v3710 = vld [vmem:[%s3459 + $0x7d0] sm:$0xff]
        %v3711 = vld [vmem:[%s3459 + $0x7d8] sm:$0xff]
        %v3712 = vld [vmem:[%s3459 + $0x7e0] sm:$0xff]
        %v3713 = vld [vmem:[%s3459 + $0x7e8] sm:$0xff]
        %v3714 = vld [vmem:[%s3459 + $0x7f0] sm:$0xff]
        %v3715 = vld [vmem:[%s3459 + $0x7f8] sm:$0xff]
        %3716 = vmatpush.msra.mxu0 %v3580
        %3717 = vmatpush.msra.mxu0 %v3572
        %3718 = vmatpush.msra.mxu0 %v3564
        %3719 = vmatpush.msra.mxu0 %v3556
        %3720 = vmatpush.msra.mxu0 %v3548
        %3721 = vmatpush.msra.mxu0 %v3540
        %3722 = vmatpush.msra.mxu0 %v3532
        %3723 = vmatpush.msra.mxu0 %v3524
        %3724 = vmatpush.msra.mxu0 %v3516
        %3725 = vmatpush.msra.mxu0 %v3508
        %3726 = vmatpush.msra.mxu0 %v3500
        %3727 = vmatpush.msra.mxu0 %v3492
        %3728 = vmatpush.msra.mxu0 %v3484
        %3729 = vmatpush.msra.mxu0 %v3476
        %3730 = vmatpush.msra.mxu0 %v3468
        %3731 = vmatpush.msra.mxu0 %v3460
        %3732 = vmatmul.f32.gmra.mxu0 %v3433
        %v3733 = vpop.f32.mrf.mxu0
        %v3734 = vadd.f32 0.0, %v3733
        %3735 = vmatmul.f32.gmra.mxu0 %v3438
        %v3736 = vpop.f32.mrf.mxu0
        %v3737 = vadd.f32 0.0, %v3736
        %3738 = vmatmul.f32.gmra.mxu0 %v3443
        %v3739 = vpop.f32.mrf.mxu0
        %v3740 = vadd.f32 0.0, %v3739
        %3741 = vmatmul.f32.gmra.mxu0 %v3448
        %v3742 = vpop.f32.mrf.mxu0
        %v3743 = vadd.f32 0.0, %v3742
        %3744 = vdwg.mxu0
        %3745 = vmatpush.msra.mxu0 %v3708
        %3746 = vmatpush.msra.mxu0 %v3700
        %3747 = vmatpush.msra.mxu0 %v3692
        %3748 = vmatpush.msra.mxu0 %v3684
        %3749 = vmatpush.msra.mxu0 %v3676
        %3750 = vmatpush.msra.mxu0 %v3668
        %3751 = vmatpush.msra.mxu0 %v3660
        %3752 = vmatpush.msra.mxu0 %v3652
        %3753 = vmatpush.msra.mxu0 %v3644
        %3754 = vmatpush.msra.mxu0 %v3636
        %3755 = vmatpush.msra.mxu0 %v3628
        %3756 = vmatpush.msra.mxu0 %v3620
        %3757 = vmatpush.msra.mxu0 %v3612
        %3758 = vmatpush.msra.mxu0 %v3604
        %3759 = vmatpush.msra.mxu0 %v3596
        %3760 = vmatpush.msra.mxu0 %v3588
        %3761 = vmatmul.f32.gmra.mxu0 %v3436
        %v3762 = vpop.f32.mrf.mxu0
        %v3763 = vadd.f32 %v3734, %v3762
        %3764 = vmatmul.f32.gmra.mxu0 %v3440
        %v3765 = vpop.f32.mrf.mxu0
        %v3766 = vadd.f32 %v3737, %v3765
        %3767 = vmatmul.f32.gmra.mxu0 %v3446
        %v3768 = vpop.f32.mrf.mxu0
        %v3769 = vadd.f32 %v3740, %v3768
        %3770 = vmatmul.f32.gmra.mxu0 %v3450
        %v3771 = vpop.f32.mrf.mxu0
        %v3772 = vadd.f32 %v3743, %v3771
        %3773 = vdwg.mxu0
        %3774 = vmatpush.msra.mxu0 %v3581
        %3775 = vmatpush.msra.mxu0 %v3573
        %3776 = vmatpush.msra.mxu0 %v3565
        %3777 = vmatpush.msra.mxu0 %v3557
        %3778 = vmatpush.msra.mxu0 %v3549
        %3779 = vmatpush.msra.mxu0 %v3541
        %3780 = vmatpush.msra.mxu0 %v3533
        %3781 = vmatpush.msra.mxu0 %v3525
        %3782 = vmatpush.msra.mxu0 %v3517
        %3783 = vmatpush.msra.mxu0 %v3509
        %3784 = vmatpush.msra.mxu0 %v3501
        %3785 = vmatpush.msra.mxu0 %v3493
        %3786 = vmatpush.msra.mxu0 %v3485
        %3787 = vmatpush.msra.mxu0 %v3477
        %3788 = vmatpush.msra.mxu0 %v3469
        %3789 = vmatpush.msra.mxu0 %v3461
        %3790 = vmatmul.f32.gmra.mxu0 %v3433
        %v3791 = vpop.f32.mrf.mxu0
        %v3792 = vadd.f32 0.0, %v3791
        %3793 = vmatmul.f32.gmra.mxu0 %v3438
        %v3794 = vpop.f32.mrf.mxu0
        %v3795 = vadd.f32 0.0, %v3794
        %3796 = vmatmul.f32.gmra.mxu0 %v3443
        %v3797 = vpop.f32.mrf.mxu0
        %v3798 = vadd.f32 0.0, %v3797
        %3799 = vmatmul.f32.gmra.mxu0 %v3448
        %v3800 = vpop.f32.mrf.mxu0
        %v3801 = vadd.f32 0.0, %v3800
        %3802 = vdwg.mxu0
        %3803 = vmatpush.msra.mxu0 %v3709
        %3804 = vmatpush.msra.mxu0 %v3701
        %3805 = vmatpush.msra.mxu0 %v3693
        %3806 = vmatpush.msra.mxu0 %v3685
        %3807 = vmatpush.msra.mxu0 %v3677
        %3808 = vmatpush.msra.mxu0 %v3669
        %3809 = vmatpush.msra.mxu0 %v3661
        %3810 = vmatpush.msra.mxu0 %v3653
        %3811 = vmatpush.msra.mxu0 %v3645
        %3812 = vmatpush.msra.mxu0 %v3637
        %3813 = vmatpush.msra.mxu0 %v3629
        %3814 = vmatpush.msra.mxu0 %v3621
        %3815 = vmatpush.msra.mxu0 %v3613
        %3816 = vmatpush.msra.mxu0 %v3605
        %3817 = vmatpush.msra.mxu0 %v3597
        %3818 = vmatpush.msra.mxu0 %v3589
        %3819 = vmatmul.f32.gmra.mxu0 %v3436
        %v3820 = vpop.f32.mrf.mxu0
        %v3821 = vadd.f32 %v3792, %v3820
        %3822 = vmatmul.f32.gmra.mxu0 %v3440
        %v3823 = vpop.f32.mrf.mxu0
        %v3824 = vadd.f32 %v3795, %v3823
        %3825 = vmatmul.f32.gmra.mxu0 %v3446
        %v3826 = vpop.f32.mrf.mxu0
        %v3827 = vadd.f32 %v3798, %v3826
        %3828 = vmatmul.f32.gmra.mxu0 %v3450
        %v3829 = vpop.f32.mrf.mxu0
        %v3830 = vadd.f32 %v3801, %v3829
        %3831 = vdwg.mxu0
        %3832 = vmatpush.msra.mxu0 %v3582
        %3833 = vmatpush.msra.mxu0 %v3574
        %3834 = vmatpush.msra.mxu0 %v3566
        %3835 = vmatpush.msra.mxu0 %v3558
        %3836 = vmatpush.msra.mxu0 %v3550
        %3837 = vmatpush.msra.mxu0 %v3542
        %3838 = vmatpush.msra.mxu0 %v3534
        %3839 = vmatpush.msra.mxu0 %v3526
        %3840 = vmatpush.msra.mxu0 %v3518
        %3841 = vmatpush.msra.mxu0 %v3510
        %3842 = vmatpush.msra.mxu0 %v3502
        %3843 = vmatpush.msra.mxu0 %v3494
        %3844 = vmatpush.msra.mxu0 %v3486
        %3845 = vmatpush.msra.mxu0 %v3478
        %3846 = vmatpush.msra.mxu0 %v3470
        %3847 = vmatpush.msra.mxu0 %v3462
        %3848 = vmatmul.f32.gmra.mxu0 %v3433
        %v3849 = vpop.f32.mrf.mxu0
        %v3850 = vadd.f32 0.0, %v3849
        %3851 = vmatmul.f32.gmra.mxu0 %v3438
        %v3852 = vpop.f32.mrf.mxu0
        %v3853 = vadd.f32 0.0, %v3852
        %3854 = vmatmul.f32.gmra.mxu0 %v3443
        %v3855 = vpop.f32.mrf.mxu0
        %v3856 = vadd.f32 0.0, %v3855
        %3857 = vmatmul.f32.gmra.mxu0 %v3448
        %v3858 = vpop.f32.mrf.mxu0
        %v3859 = vadd.f32 0.0, %v3858
        %3860 = vdwg.mxu0
        %3861 = vmatpush.msra.mxu0 %v3710
        %3862 = vmatpush.msra.mxu0 %v3702
        %3863 = vmatpush.msra.mxu0 %v3694
        %3864 = vmatpush.msra.mxu0 %v3686
        %3865 = vmatpush.msra.mxu0 %v3678
        %3866 = vmatpush.msra.mxu0 %v3670
        %3867 = vmatpush.msra.mxu0 %v3662
        %3868 = vmatpush.msra.mxu0 %v3654
        %3869 = vmatpush.msra.mxu0 %v3646
        %3870 = vmatpush.msra.mxu0 %v3638
        %3871 = vmatpush.msra.mxu0 %v3630
        %3872 = vmatpush.msra.mxu0 %v3622
        %3873 = vmatpush.msra.mxu0 %v3614
        %3874 = vmatpush.msra.mxu0 %v3606
        %3875 = vmatpush.msra.mxu0 %v3598
        %3876 = vmatpush.msra.mxu0 %v3590
        %3877 = vmatmul.f32.gmra.mxu0 %v3436
        %v3878 = vpop.f32.mrf.mxu0
        %v3879 = vadd.f32 %v3850, %v3878
        %3880 = vmatmul.f32.gmra.mxu0 %v3440
        %v3881 = vpop.f32.mrf.mxu0
        %v3882 = vadd.f32 %v3853, %v3881
        %3883 = vmatmul.f32.gmra.mxu0 %v3446
        %v3884 = vpop.f32.mrf.mxu0
        %v3885 = vadd.f32 %v3856, %v3884
        %3886 = vmatmul.f32.gmra.mxu0 %v3450
        %v3887 = vpop.f32.mrf.mxu0
        %v3888 = vadd.f32 %v3859, %v3887
        %3889 = vdwg.mxu0
        %3890 = vmatpush.msra.mxu0 %v3583
        %3891 = vmatpush.msra.mxu0 %v3575
        %3892 = vmatpush.msra.mxu0 %v3567
        %3893 = vmatpush.msra.mxu0 %v3559
        %3894 = vmatpush.msra.mxu0 %v3551
        %3895 = vmatpush.msra.mxu0 %v3543
        %3896 = vmatpush.msra.mxu0 %v3535
        %3897 = vmatpush.msra.mxu0 %v3527
        %3898 = vmatpush.msra.mxu0 %v3519
        %3899 = vmatpush.msra.mxu0 %v3511
        %3900 = vmatpush.msra.mxu0 %v3503
        %3901 = vmatpush.msra.mxu0 %v3495
        %3902 = vmatpush.msra.mxu0 %v3487
        %3903 = vmatpush.msra.mxu0 %v3479
        %3904 = vmatpush.msra.mxu0 %v3471
        %3905 = vmatpush.msra.mxu0 %v3463
        %3906 = vmatmul.f32.gmra.mxu0 %v3433
        %v3907 = vpop.f32.mrf.mxu0
        %v3908 = vadd.f32 0.0, %v3907
        %3909 = vmatmul.f32.gmra.mxu0 %v3438
        %v3910 = vpop.f32.mrf.mxu0
        %v3911 = vadd.f32 0.0, %v3910
        %3912 = vmatmul.f32.gmra.mxu0 %v3443
        %v3913 = vpop.f32.mrf.mxu0
        %v3914 = vadd.f32 0.0, %v3913
        %3915 = vmatmul.f32.gmra.mxu0 %v3448
        %v3916 = vpop.f32.mrf.mxu0
        %v3917 = vadd.f32 0.0, %v3916
        %3918 = vdwg.mxu0
        %3919 = vmatpush.msra.mxu0 %v3711
        %3920 = vmatpush.msra.mxu0 %v3703
        %3921 = vmatpush.msra.mxu0 %v3695
        %3922 = vmatpush.msra.mxu0 %v3687
        %3923 = vmatpush.msra.mxu0 %v3679
        %3924 = vmatpush.msra.mxu0 %v3671
        %3925 = vmatpush.msra.mxu0 %v3663
        %3926 = vmatpush.msra.mxu0 %v3655
        %3927 = vmatpush.msra.mxu0 %v3647
        %3928 = vmatpush.msra.mxu0 %v3639
        %3929 = vmatpush.msra.mxu0 %v3631
        %3930 = vmatpush.msra.mxu0 %v3623
        %3931 = vmatpush.msra.mxu0 %v3615
        %3932 = vmatpush.msra.mxu0 %v3607
        %3933 = vmatpush.msra.mxu0 %v3599
        %3934 = vmatpush.msra.mxu0 %v3591
        %3935 = vmatmul.f32.gmra.mxu0 %v3436
        %v3936 = vpop.f32.mrf.mxu0
        %v3937 = vadd.f32 %v3908, %v3936
        %3938 = vmatmul.f32.gmra.mxu0 %v3440
        %v3939 = vpop.f32.mrf.mxu0
        %v3940 = vadd.f32 %v3911, %v3939
        %3941 = vmatmul.f32.gmra.mxu0 %v3446
        %v3942 = vpop.f32.mrf.mxu0
        %v3943 = vadd.f32 %v3914, %v3942
        %3944 = vmatmul.f32.gmra.mxu0 %v3450
        %v3945 = vpop.f32.mrf.mxu0
        %v3946 = vadd.f32 %v3917, %v3945
        %3947 = vdwg.mxu0
        %3948 = vmatpush.msra.mxu0 %v3584
        %3949 = vmatpush.msra.mxu0 %v3576
        %3950 = vmatpush.msra.mxu0 %v3568
        %3951 = vmatpush.msra.mxu0 %v3560
        %3952 = vmatpush.msra.mxu0 %v3552
        %3953 = vmatpush.msra.mxu0 %v3544
        %3954 = vmatpush.msra.mxu0 %v3536
        %3955 = vmatpush.msra.mxu0 %v3528
        %3956 = vmatpush.msra.mxu0 %v3520
        %3957 = vmatpush.msra.mxu0 %v3512
        %3958 = vmatpush.msra.mxu0 %v3504
        %3959 = vmatpush.msra.mxu0 %v3496
        %3960 = vmatpush.msra.mxu0 %v3488
        %3961 = vmatpush.msra.mxu0 %v3480
        %3962 = vmatpush.msra.mxu0 %v3472
        %3963 = vmatpush.msra.mxu0 %v3464
        %3964 = vmatmul.f32.gmra.mxu0 %v3433
        %v3965 = vpop.f32.mrf.mxu0
        %v3966 = vadd.f32 0.0, %v3965
        %3967 = vmatmul.f32.gmra.mxu0 %v3438
        %v3968 = vpop.f32.mrf.mxu0
        %v3969 = vadd.f32 0.0, %v3968
        %3970 = vmatmul.f32.gmra.mxu0 %v3443
        %v3971 = vpop.f32.mrf.mxu0
        %v3972 = vadd.f32 0.0, %v3971
        %3973 = vmatmul.f32.gmra.mxu0 %v3448
        %v3974 = vpop.f32.mrf.mxu0
        %v3975 = vadd.f32 0.0, %v3974
        %3976 = vdwg.mxu0
        %3977 = vmatpush.msra.mxu0 %v3712
        %3978 = vmatpush.msra.mxu0 %v3704
        %3979 = vmatpush.msra.mxu0 %v3696
        %3980 = vmatpush.msra.mxu0 %v3688
        %3981 = vmatpush.msra.mxu0 %v3680
        %3982 = vmatpush.msra.mxu0 %v3672
        %3983 = vmatpush.msra.mxu0 %v3664
        %3984 = vmatpush.msra.mxu0 %v3656
        %3985 = vmatpush.msra.mxu0 %v3648
        %3986 = vmatpush.msra.mxu0 %v3640
        %3987 = vmatpush.msra.mxu0 %v3632
        %3988 = vmatpush.msra.mxu0 %v3624
        %3989 = vmatpush.msra.mxu0 %v3616
        %3990 = vmatpush.msra.mxu0 %v3608
        %3991 = vmatpush.msra.mxu0 %v3600
        %3992 = vmatpush.msra.mxu0 %v3592
        %3993 = vmatmul.f32.gmra.mxu0 %v3436
        %v3994 = vpop.f32.mrf.mxu0
        %v3995 = vadd.f32 %v3966, %v3994
        %3996 = vmatmul.f32.gmra.mxu0 %v3440
        %v3997 = vpop.f32.mrf.mxu0
        %v3998 = vadd.f32 %v3969, %v3997
        %3999 = vmatmul.f32.gmra.mxu0 %v3446
        %v4000 = vpop.f32.mrf.mxu0
        %v4001 = vadd.f32 %v3972, %v4000
        %4002 = vmatmul.f32.gmra.mxu0 %v3450
        %v4003 = vpop.f32.mrf.mxu0
        %v4004 = vadd.f32 %v3975, %v4003
        %4005 = vdwg.mxu0
        %4006 = vmatpush.msra.mxu0 %v3585
        %4007 = vmatpush.msra.mxu0 %v3577
        %4008 = vmatpush.msra.mxu0 %v3569
        %4009 = vmatpush.msra.mxu0 %v3561
        %4010 = vmatpush.msra.mxu0 %v3553
        %4011 = vmatpush.msra.mxu0 %v3545
        %4012 = vmatpush.msra.mxu0 %v3537
        %4013 = vmatpush.msra.mxu0 %v3529
        %4014 = vmatpush.msra.mxu0 %v3521
        %4015 = vmatpush.msra.mxu0 %v3513
        %4016 = vmatpush.msra.mxu0 %v3505
        %4017 = vmatpush.msra.mxu0 %v3497
        %4018 = vmatpush.msra.mxu0 %v3489
        %4019 = vmatpush.msra.mxu0 %v3481
        %4020 = vmatpush.msra.mxu0 %v3473
        %4021 = vmatpush.msra.mxu0 %v3465
        %4022 = vmatmul.f32.gmra.mxu0 %v3433
        %v4023 = vpop.f32.mrf.mxu0
        %v4024 = vadd.f32 0.0, %v4023
        %4025 = vmatmul.f32.gmra.mxu0 %v3438
        %v4026 = vpop.f32.mrf.mxu0
        %v4027 = vadd.f32 0.0, %v4026
        %4028 = vmatmul.f32.gmra.mxu0 %v3443
        %v4029 = vpop.f32.mrf.mxu0
        %v4030 = vadd.f32 0.0, %v4029
        %4031 = vmatmul.f32.gmra.mxu0 %v3448
        %v4032 = vpop.f32.mrf.mxu0
        %v4033 = vadd.f32 0.0, %v4032
        %4034 = vdwg.mxu0
        %4035 = vmatpush.msra.mxu0 %v3713
        %4036 = vmatpush.msra.mxu0 %v3705
        %4037 = vmatpush.msra.mxu0 %v3697
        %4038 = vmatpush.msra.mxu0 %v3689
        %4039 = vmatpush.msra.mxu0 %v3681
        %4040 = vmatpush.msra.mxu0 %v3673
        %4041 = vmatpush.msra.mxu0 %v3665
        %4042 = vmatpush.msra.mxu0 %v3657
        %4043 = vmatpush.msra.mxu0 %v3649
        %4044 = vmatpush.msra.mxu0 %v3641
        %4045 = vmatpush.msra.mxu0 %v3633
        %4046 = vmatpush.msra.mxu0 %v3625
        %4047 = vmatpush.msra.mxu0 %v3617
        %4048 = vmatpush.msra.mxu0 %v3609
        %4049 = vmatpush.msra.mxu0 %v3601
        %4050 = vmatpush.msra.mxu0 %v3593
        %4051 = vmatmul.f32.gmra.mxu0 %v3436
        %v4052 = vpop.f32.mrf.mxu0
        %v4053 = vadd.f32 %v4024, %v4052
        %4054 = vmatmul.f32.gmra.mxu0 %v3440
        %v4055 = vpop.f32.mrf.mxu0
        %v4056 = vadd.f32 %v4027, %v4055
        %4057 = vmatmul.f32.gmra.mxu0 %v3446
        %v4058 = vpop.f32.mrf.mxu0
        %v4059 = vadd.f32 %v4030, %v4058
        %4060 = vmatmul.f32.gmra.mxu0 %v3450
        %v4061 = vpop.f32.mrf.mxu0
        %v4062 = vadd.f32 %v4033, %v4061
        %4063 = vdwg.mxu0
        %4064 = vmatpush.msra.mxu0 %v3586
        %4065 = vmatpush.msra.mxu0 %v3578
        %4066 = vmatpush.msra.mxu0 %v3570
        %4067 = vmatpush.msra.mxu0 %v3562
        %4068 = vmatpush.msra.mxu0 %v3554
        %4069 = vmatpush.msra.mxu0 %v3546
        %4070 = vmatpush.msra.mxu0 %v3538
        %4071 = vmatpush.msra.mxu0 %v3530
        %4072 = vmatpush.msra.mxu0 %v3522
        %4073 = vmatpush.msra.mxu0 %v3514
        %4074 = vmatpush.msra.mxu0 %v3506
        %4075 = vmatpush.msra.mxu0 %v3498
        %4076 = vmatpush.msra.mxu0 %v3490
        %4077 = vmatpush.msra.mxu0 %v3482
        %4078 = vmatpush.msra.mxu0 %v3474
        %4079 = vmatpush.msra.mxu0 %v3466
        %4080 = vmatmul.f32.gmra.mxu0 %v3433
        %v4081 = vpop.f32.mrf.mxu0
        %v4082 = vadd.f32 0.0, %v4081
        %4083 = vmatmul.f32.gmra.mxu0 %v3438
        %v4084 = vpop.f32.mrf.mxu0
        %v4085 = vadd.f32 0.0, %v4084
        %4086 = vmatmul.f32.gmra.mxu0 %v3443
        %v4087 = vpop.f32.mrf.mxu0
        %v4088 = vadd.f32 0.0, %v4087
        %4089 = vmatmul.f32.gmra.mxu0 %v3448
        %v4090 = vpop.f32.mrf.mxu0
        %v4091 = vadd.f32 0.0, %v4090
        %4092 = vdwg.mxu0
        %4093 = vmatpush.msra.mxu0 %v3714
        %4094 = vmatpush.msra.mxu0 %v3706
        %4095 = vmatpush.msra.mxu0 %v3698
        %4096 = vmatpush.msra.mxu0 %v3690
        %4097 = vmatpush.msra.mxu0 %v3682
        %4098 = vmatpush.msra.mxu0 %v3674
        %4099 = vmatpush.msra.mxu0 %v3666
        %4100 = vmatpush.msra.mxu0 %v3658
        %4101 = vmatpush.msra.mxu0 %v3650
        %4102 = vmatpush.msra.mxu0 %v3642
        %4103 = vmatpush.msra.mxu0 %v3634
        %4104 = vmatpush.msra.mxu0 %v3626
        %4105 = vmatpush.msra.mxu0 %v3618
        %4106 = vmatpush.msra.mxu0 %v3610
        %4107 = vmatpush.msra.mxu0 %v3602
        %4108 = vmatpush.msra.mxu0 %v3594
        %4109 = vmatmul.f32.gmra.mxu0 %v3436
        %v4110 = vpop.f32.mrf.mxu0
        %v4111 = vadd.f32 %v4082, %v4110
        %4112 = vmatmul.f32.gmra.mxu0 %v3440
        %v4113 = vpop.f32.mrf.mxu0
        %v4114 = vadd.f32 %v4085, %v4113
        %4115 = vmatmul.f32.gmra.mxu0 %v3446
        %v4116 = vpop.f32.mrf.mxu0
        %v4117 = vadd.f32 %v4088, %v4116
        %4118 = vmatmul.f32.gmra.mxu0 %v3450
        %v4119 = vpop.f32.mrf.mxu0
        %v4120 = vadd.f32 %v4091, %v4119
        %4121 = vdwg.mxu0
        %4122 = vmatpush.msra.mxu0 %v3587
        %4123 = vmatpush.msra.mxu0 %v3579
        %4124 = vmatpush.msra.mxu0 %v3571
        %4125 = vmatpush.msra.mxu0 %v3563
        %4126 = vmatpush.msra.mxu0 %v3555
        %4127 = vmatpush.msra.mxu0 %v3547
        %4128 = vmatpush.msra.mxu0 %v3539
        %4129 = vmatpush.msra.mxu0 %v3531
        %4130 = vmatpush.msra.mxu0 %v3523
        %4131 = vmatpush.msra.mxu0 %v3515
        %4132 = vmatpush.msra.mxu0 %v3507
        %4133 = vmatpush.msra.mxu0 %v3499
        %4134 = vmatpush.msra.mxu0 %v3491
        %4135 = vmatpush.msra.mxu0 %v3483
        %4136 = vmatpush.msra.mxu0 %v3475
        %4137 = vmatpush.msra.mxu0 %v3467
        %4138 = vmatmul.f32.gmra.mxu0 %v3433
        %v4139 = vpop.f32.mrf.mxu0
        %v4140 = vadd.f32 0.0, %v4139
        %4141 = vmatmul.f32.gmra.mxu0 %v3438
        %v4142 = vpop.f32.mrf.mxu0
        %v4143 = vadd.f32 0.0, %v4142
        %4144 = vmatmul.f32.gmra.mxu0 %v3443
        %v4145 = vpop.f32.mrf.mxu0
        %v4146 = vadd.f32 0.0, %v4145
        %4147 = vmatmul.f32.gmra.mxu0 %v3448
        %v4148 = vpop.f32.mrf.mxu0
        %v4149 = vadd.f32 0.0, %v4148
        %4150 = vdwg.mxu0
        %4151 = vmatpush.msra.mxu0 %v3715
        %4152 = vmatpush.msra.mxu0 %v3707
        %4153 = vmatpush.msra.mxu0 %v3699
        %4154 = vmatpush.msra.mxu0 %v3691
        %4155 = vmatpush.msra.mxu0 %v3683
        %4156 = vmatpush.msra.mxu0 %v3675
        %4157 = vmatpush.msra.mxu0 %v3667
        %4158 = vmatpush.msra.mxu0 %v3659
        %4159 = vmatpush.msra.mxu0 %v3651
        %4160 = vmatpush.msra.mxu0 %v3643
        %4161 = vmatpush.msra.mxu0 %v3635
        %4162 = vmatpush.msra.mxu0 %v3627
        %4163 = vmatpush.msra.mxu0 %v3619
        %4164 = vmatpush.msra.mxu0 %v3611
        %4165 = vmatpush.msra.mxu0 %v3603
        %4166 = vmatpush.msra.mxu0 %v3595
        %4167 = vmatmul.f32.gmra.mxu0 %v3436
        %v4168 = vpop.f32.mrf.mxu0
        %v4169 = vadd.f32 %v4140, %v4168
        %4170 = vmatmul.f32.gmra.mxu0 %v3440
        %v4171 = vpop.f32.mrf.mxu0
        %v4172 = vadd.f32 %v4143, %v4171
        %4173 = vmatmul.f32.gmra.mxu0 %v3446
        %v4174 = vpop.f32.mrf.mxu0
        %v4175 = vadd.f32 %v4146, %v4174
        %4176 = vmatmul.f32.gmra.mxu0 %v3450
        %v4177 = vpop.f32.mrf.mxu0
        %v4178 = vadd.f32 %v4149, %v4177
        %4179 = vdwg.mxu0
        %v4180 = vadd.f32 %v3398, %v3763
        %v4181 = vadd.f32 %v3399, %v3821
        %v4182 = vadd.f32 %v3400, %v3879
        %v4183 = vadd.f32 %v3401, %v3937
        %v4184 = vadd.f32 %v3402, %v3995
        %v4185 = vadd.f32 %v3403, %v4053
        %v4186 = vadd.f32 %v3404, %v4111
        %v4187 = vadd.f32 %v3405, %v4169
        %v4188 = vadd.f32 %v3406, %v3766
        %v4189 = vadd.f32 %v3407, %v3824
        %v4190 = vadd.f32 %v3408, %v3882
        %v4191 = vadd.f32 %v3409, %v3940
        %v4192 = vadd.f32 %v3410, %v3998
        %v4193 = vadd.f32 %v3411, %v4056
        %v4194 = vadd.f32 %v3412, %v4114
        %v4195 = vadd.f32 %v3413, %v4172
        %v4196 = vadd.f32 %v3414, %v3769
        %v4197 = vadd.f32 %v3415, %v3827
        %v4198 = vadd.f32 %v3416, %v3885
        %v4199 = vadd.f32 %v3417, %v3943
        %v4200 = vadd.f32 %v3418, %v4001
        %v4201 = vadd.f32 %v3419, %v4059
        %v4202 = vadd.f32 %v3420, %v4117
        %v4203 = vadd.f32 %v3421, %v4175
        %v4204 = vadd.f32 %v3422, %v3772
        %v4205 = vadd.f32 %v3423, %v3830
        %v4206 = vadd.f32 %v3424, %v3888
        %v4207 = vadd.f32 %v3425, %v3946
        %v4208 = vadd.f32 %v3426, %v4004
        %v4209 = vadd.f32 %v3427, %v4062
        %v4210 = vadd.f32 %v3428, %v4120
        %v4211 = vadd.f32 %v3429, %v4178
        %v4212 = vxor.u32 %v4180, 2147483648
        %v4213 = vxor.u32 %v4181, 2147483648
        %v4214 = vxor.u32 %v4188, 2147483648
        %v4215 = vxor.u32 %v4189, 2147483648
        %v4216 = vxor.u32 %v4196, 2147483648
        %v4217 = vxor.u32 %v4197, 2147483648
        %v4218 = vxor.u32 %v4204, 2147483648
        %v4219 = vxor.u32 %v4205, 2147483648
        %v4220 = vmul.f32 %v4212, 1.442695
        %v4221 = vpow.pop %v4220
        %v4222 = vmul.f32 %v4213, 1.442695
        %v4223 = vpow.pop %v4222
        %v4224 = vmul.f32 %v4214, 1.442695
        %v4225 = vpow.pop %v4224
        %v4226 = vmul.f32 %v4215, 1.442695
        %v4227 = vpow.pop %v4226
        %v4228 = vmul.f32 %v4216, 1.442695
        %v4229 = vpow.pop %v4228
        %v4230 = vmul.f32 %v4217, 1.442695
        %v4231 = vpow.pop %v4230
        %v4232 = vmul.f32 %v4218, 1.442695
        %v4233 = vpow.pop %v4232
        %v4234 = vmul.f32 %v4219, 1.442695
        %v4235 = vpow.pop %v4234
        %v4236 = vadd.f32 %v4221, 1.0
        %v4237 = vadd.f32 %v4223, 1.0
        %v4238 = vadd.f32 %v4225, 1.0
        %v4239 = vadd.f32 %v4227, 1.0
        %v4240 = vadd.f32 %v4229, 1.0
        %v4241 = vadd.f32 %v4231, 1.0
        %v4242 = vadd.f32 %v4233, 1.0
        %v4243 = vadd.f32 %v4235, 1.0
        %v4244 = vrcp.pop %v4236
        %v4245 = vmul.f32 %v4236, %v4244
        %v4246 = vsub.f32 1.0, %v4245
        %v4247 = vmul.f32 %v4244, %v4246
        %v4248 = vadd.f32 %v4244, %v4247
        %vm4249 = vweird.f32 %v4236
        %vm4250 = vweird.f32 %v4244
        %vm4251 = vmor %vm4249, %vm4250
        %v4252 = vsel %vm4251, %v4244, %v4248
        %v4253 = vand.u32 2147483647, %v4236
        %vm4254 = vcmp.eq.f32.partialorder %v4253, 8.507059e+37
        %v4255 = vand.u32 %v4236, 2147483648
        %v4256 = vor.u32 1.1754944e-38, %v4255
        %v4257 = vsel %vm4254, %v4256, %v4252
        %v4258 = vmul.f32 1.0, %v4257
        %v4259 = vrcp.pop %v4237
        %v4260 = vmul.f32 %v4237, %v4259
        %v4261 = vsub.f32 1.0, %v4260
        %v4262 = vmul.f32 %v4259, %v4261
        %v4263 = vadd.f32 %v4259, %v4262
        %vm4264 = vweird.f32 %v4237
        %vm4265 = vweird.f32 %v4259
        %vm4266 = vmor %vm4264, %vm4265
        %v4267 = vsel %vm4266, %v4259, %v4263
        %v4268 = vand.u32 2147483647, %v4237
        %vm4269 = vcmp.eq.f32.partialorder %v4268, 8.507059e+37
        %v4270 = vand.u32 %v4237, 2147483648
        %v4271 = vor.u32 1.1754944e-38, %v4270
        %v4272 = vsel %vm4269, %v4271, %v4267
        %v4273 = vmul.f32 1.0, %v4272
        %v4274 = vrcp.pop %v4238
        %v4275 = vmul.f32 %v4238, %v4274
        %v4276 = vsub.f32 1.0, %v4275
        %v4277 = vmul.f32 %v4274, %v4276
        %v4278 = vadd.f32 %v4274, %v4277
        %vm4279 = vweird.f32 %v4238
        %vm4280 = vweird.f32 %v4274
        %vm4281 = vmor %vm4279, %vm4280
        %v4282 = vsel %vm4281, %v4274, %v4278
        %v4283 = vand.u32 2147483647, %v4238
        %vm4284 = vcmp.eq.f32.partialorder %v4283, 8.507059e+37
        %v4285 = vand.u32 %v4238, 2147483648
        %v4286 = vor.u32 1.1754944e-38, %v4285
        %v4287 = vsel %vm4284, %v4286, %v4282
        %v4288 = vmul.f32 1.0, %v4287
        %v4289 = vrcp.pop %v4239
        %v4290 = vmul.f32 %v4239, %v4289
        %v4291 = vsub.f32 1.0, %v4290
        %v4292 = vmul.f32 %v4289, %v4291
        %v4293 = vadd.f32 %v4289, %v4292
        %vm4294 = vweird.f32 %v4239
        %vm4295 = vweird.f32 %v4289
        %vm4296 = vmor %vm4294, %vm4295
        %v4297 = vsel %vm4296, %v4289, %v4293
        %v4298 = vand.u32 2147483647, %v4239
        %vm4299 = vcmp.eq.f32.partialorder %v4298, 8.507059e+37
        %v4300 = vand.u32 %v4239, 2147483648
        %v4301 = vor.u32 1.1754944e-38, %v4300
        %v4302 = vsel %vm4299, %v4301, %v4297
        %v4303 = vmul.f32 1.0, %v4302
        %v4304 = vrcp.pop %v4240
        %v4305 = vmul.f32 %v4240, %v4304
        %v4306 = vsub.f32 1.0, %v4305
        %v4307 = vmul.f32 %v4304, %v4306
        %v4308 = vadd.f32 %v4304, %v4307
        %vm4309 = vweird.f32 %v4240
        %vm4310 = vweird.f32 %v4304
        %vm4311 = vmor %vm4309, %vm4310
        %v4312 = vsel %vm4311, %v4304, %v4308
        %v4313 = vand.u32 2147483647, %v4240
        %vm4314 = vcmp.eq.f32.partialorder %v4313, 8.507059e+37
        %v4315 = vand.u32 %v4240, 2147483648
        %v4316 = vor.u32 1.1754944e-38, %v4315
        %v4317 = vsel %vm4314, %v4316, %v4312
        %v4318 = vmul.f32 1.0, %v4317
        %v4319 = vrcp.pop %v4241
        %v4320 = vmul.f32 %v4241, %v4319
        %v4321 = vsub.f32 1.0, %v4320
        %v4322 = vmul.f32 %v4319, %v4321
        %v4323 = vadd.f32 %v4319, %v4322
        %vm4324 = vweird.f32 %v4241
        %vm4325 = vweird.f32 %v4319
        %vm4326 = vmor %vm4324, %vm4325
        %v4327 = vsel %vm4326, %v4319, %v4323
        %v4328 = vand.u32 2147483647, %v4241
        %vm4329 = vcmp.eq.f32.partialorder %v4328, 8.507059e+37
        %v4330 = vand.u32 %v4241, 2147483648
        %v4331 = vor.u32 1.1754944e-38, %v4330
        %v4332 = vsel %vm4329, %v4331, %v4327
        %v4333 = vmul.f32 1.0, %v4332
        %v4334 = vrcp.pop %v4242
        %v4335 = vmul.f32 %v4242, %v4334
        %v4336 = vsub.f32 1.0, %v4335
        %v4337 = vmul.f32 %v4334, %v4336
        %v4338 = vadd.f32 %v4334, %v4337
        %vm4339 = vweird.f32 %v4242
        %vm4340 = vweird.f32 %v4334
        %vm4341 = vmor %vm4339, %vm4340
        %v4342 = vsel %vm4341, %v4334, %v4338
        %v4343 = vand.u32 2147483647, %v4242
        %vm4344 = vcmp.eq.f32.partialorder %v4343, 8.507059e+37
        %v4345 = vand.u32 %v4242, 2147483648
        %v4346 = vor.u32 1.1754944e-38, %v4345
        %v4347 = vsel %vm4344, %v4346, %v4342
        %v4348 = vmul.f32 1.0, %v4347
        %v4349 = vrcp.pop %v4243
        %v4350 = vmul.f32 %v4243, %v4349
        %v4351 = vsub.f32 1.0, %v4350
        %v4352 = vmul.f32 %v4349, %v4351
        %v4353 = vadd.f32 %v4349, %v4352
        %vm4354 = vweird.f32 %v4243
        %vm4355 = vweird.f32 %v4349
        %vm4356 = vmor %vm4354, %vm4355
        %v4357 = vsel %vm4356, %v4349, %v4353
        %v4358 = vand.u32 2147483647, %v4243
        %vm4359 = vcmp.eq.f32.partialorder %v4358, 8.507059e+37
        %v4360 = vand.u32 %v4243, 2147483648
        %v4361 = vor.u32 1.1754944e-38, %v4360
        %v4362 = vsel %vm4359, %v4361, %v4357
        %v4363 = vmul.f32 1.0, %v4362
        %v4364 = vxor.u32 %v4182, 2147483648
        %v4365 = vxor.u32 %v4183, 2147483648
        %v4366 = vxor.u32 %v4190, 2147483648
        %v4367 = vxor.u32 %v4191, 2147483648
        %v4368 = vxor.u32 %v4198, 2147483648
        %v4369 = vxor.u32 %v4199, 2147483648
        %v4370 = vxor.u32 %v4206, 2147483648
        %v4371 = vxor.u32 %v4207, 2147483648
        %v4372 = vmul.f32 %v4364, 1.442695
        %v4373 = vpow.pop %v4372
        %v4374 = vmul.f32 %v4365, 1.442695
        %v4375 = vpow.pop %v4374
        %v4376 = vmul.f32 %v4366, 1.442695
        %v4377 = vpow.pop %v4376
        %v4378 = vmul.f32 %v4367, 1.442695
        %v4379 = vpow.pop %v4378
        %v4380 = vmul.f32 %v4368, 1.442695
        %v4381 = vpow.pop %v4380
        %v4382 = vmul.f32 %v4369, 1.442695
        %v4383 = vpow.pop %v4382
        %v4384 = vmul.f32 %v4370, 1.442695
        %v4385 = vpow.pop %v4384
        %v4386 = vmul.f32 %v4371, 1.442695
        %v4387 = vpow.pop %v4386
        %v4388 = vadd.f32 %v4373, 1.0
        %v4389 = vadd.f32 %v4375, 1.0
        %v4390 = vadd.f32 %v4377, 1.0
        %v4391 = vadd.f32 %v4379, 1.0
        %v4392 = vadd.f32 %v4381, 1.0
        %v4393 = vadd.f32 %v4383, 1.0
        %v4394 = vadd.f32 %v4385, 1.0
        %v4395 = vadd.f32 %v4387, 1.0
        %v4396 = vrcp.pop %v4388
        %v4397 = vmul.f32 %v4388, %v4396
        %v4398 = vsub.f32 1.0, %v4397
        %v4399 = vmul.f32 %v4396, %v4398
        %v4400 = vadd.f32 %v4396, %v4399
        %vm4401 = vweird.f32 %v4388
        %vm4402 = vweird.f32 %v4396
        %vm4403 = vmor %vm4401, %vm4402
        %v4404 = vsel %vm4403, %v4396, %v4400
        %v4405 = vand.u32 2147483647, %v4388
        %vm4406 = vcmp.eq.f32.partialorder %v4405, 8.507059e+37
        %v4407 = vand.u32 %v4388, 2147483648
        %v4408 = vor.u32 1.1754944e-38, %v4407
        %v4409 = vsel %vm4406, %v4408, %v4404
        %v4410 = vmul.f32 1.0, %v4409
        %v4411 = vrcp.pop %v4389
        %v4412 = vmul.f32 %v4389, %v4411
        %v4413 = vsub.f32 1.0, %v4412
        %v4414 = vmul.f32 %v4411, %v4413
        %v4415 = vadd.f32 %v4411, %v4414
        %vm4416 = vweird.f32 %v4389
        %vm4417 = vweird.f32 %v4411
        %vm4418 = vmor %vm4416, %vm4417
        %v4419 = vsel %vm4418, %v4411, %v4415
        %v4420 = vand.u32 2147483647, %v4389
        %vm4421 = vcmp.eq.f32.partialorder %v4420, 8.507059e+37
        %v4422 = vand.u32 %v4389, 2147483648
        %v4423 = vor.u32 1.1754944e-38, %v4422
        %v4424 = vsel %vm4421, %v4423, %v4419
        %v4425 = vmul.f32 1.0, %v4424
        %v4426 = vrcp.pop %v4390
        %v4427 = vmul.f32 %v4390, %v4426
        %v4428 = vsub.f32 1.0, %v4427
        %v4429 = vmul.f32 %v4426, %v4428
        %v4430 = vadd.f32 %v4426, %v4429
        %vm4431 = vweird.f32 %v4390
        %vm4432 = vweird.f32 %v4426
        %vm4433 = vmor %vm4431, %vm4432
        %v4434 = vsel %vm4433, %v4426, %v4430
        %v4435 = vand.u32 2147483647, %v4390
        %vm4436 = vcmp.eq.f32.partialorder %v4435, 8.507059e+37
        %v4437 = vand.u32 %v4390, 2147483648
        %v4438 = vor.u32 1.1754944e-38, %v4437
        %v4439 = vsel %vm4436, %v4438, %v4434
        %v4440 = vmul.f32 1.0, %v4439
        %v4441 = vrcp.pop %v4391
        %v4442 = vmul.f32 %v4391, %v4441
        %v4443 = vsub.f32 1.0, %v4442
        %v4444 = vmul.f32 %v4441, %v4443
        %v4445 = vadd.f32 %v4441, %v4444
        %vm4446 = vweird.f32 %v4391
        %vm4447 = vweird.f32 %v4441
        %vm4448 = vmor %vm4446, %vm4447
        %v4449 = vsel %vm4448, %v4441, %v4445
        %v4450 = vand.u32 2147483647, %v4391
        %vm4451 = vcmp.eq.f32.partialorder %v4450, 8.507059e+37
        %v4452 = vand.u32 %v4391, 2147483648
        %v4453 = vor.u32 1.1754944e-38, %v4452
        %v4454 = vsel %vm4451, %v4453, %v4449
        %v4455 = vmul.f32 1.0, %v4454
        %v4456 = vrcp.pop %v4392
        %v4457 = vmul.f32 %v4392, %v4456
        %v4458 = vsub.f32 1.0, %v4457
        %v4459 = vmul.f32 %v4456, %v4458
        %v4460 = vadd.f32 %v4456, %v4459
        %vm4461 = vweird.f32 %v4392
        %vm4462 = vweird.f32 %v4456
        %vm4463 = vmor %vm4461, %vm4462
        %v4464 = vsel %vm4463, %v4456, %v4460
        %v4465 = vand.u32 2147483647, %v4392
        %vm4466 = vcmp.eq.f32.partialorder %v4465, 8.507059e+37
        %v4467 = vand.u32 %v4392, 2147483648
        %v4468 = vor.u32 1.1754944e-38, %v4467
        %v4469 = vsel %vm4466, %v4468, %v4464
        %v4470 = vmul.f32 1.0, %v4469
        %v4471 = vrcp.pop %v4393
        %v4472 = vmul.f32 %v4393, %v4471
        %v4473 = vsub.f32 1.0, %v4472
        %v4474 = vmul.f32 %v4471, %v4473
        %v4475 = vadd.f32 %v4471, %v4474
        %vm4476 = vweird.f32 %v4393
        %vm4477 = vweird.f32 %v4471
        %vm4478 = vmor %vm4476, %vm4477
        %v4479 = vsel %vm4478, %v4471, %v4475
        %v4480 = vand.u32 2147483647, %v4393
        %vm4481 = vcmp.eq.f32.partialorder %v4480, 8.507059e+37
        %v4482 = vand.u32 %v4393, 2147483648
        %v4483 = vor.u32 1.1754944e-38, %v4482
        %v4484 = vsel %vm4481, %v4483, %v4479
        %v4485 = vmul.f32 1.0, %v4484
        %v4486 = vrcp.pop %v4394
        %v4487 = vmul.f32 %v4394, %v4486
        %v4488 = vsub.f32 1.0, %v4487
        %v4489 = vmul.f32 %v4486, %v4488
        %v4490 = vadd.f32 %v4486, %v4489
        %vm4491 = vweird.f32 %v4394
        %vm4492 = vweird.f32 %v4486
        %vm4493 = vmor %vm4491, %vm4492
        %v4494 = vsel %vm4493, %v4486, %v4490
        %v4495 = vand.u32 2147483647, %v4394
        %vm4496 = vcmp.eq.f32.partialorder %v4495, 8.507059e+37
        %v4497 = vand.u32 %v4394, 2147483648
        %v4498 = vor.u32 1.1754944e-38, %v4497
        %v4499 = vsel %vm4496, %v4498, %v4494
        %v4500 = vmul.f32 1.0, %v4499
        %v4501 = vrcp.pop %v4395
        %v4502 = vmul.f32 %v4395, %v4501
        %v4503 = vsub.f32 1.0, %v4502
        %v4504 = vmul.f32 %v4501, %v4503
        %v4505 = vadd.f32 %v4501, %v4504
        %vm4506 = vweird.f32 %v4395
        %vm4507 = vweird.f32 %v4501
        %vm4508 = vmor %vm4506, %vm4507
        %v4509 = vsel %vm4508, %v4501, %v4505
        %v4510 = vand.u32 2147483647, %v4395
        %vm4511 = vcmp.eq.f32.partialorder %v4510, 8.507059e+37
        %v4512 = vand.u32 %v4395, 2147483648
        %v4513 = vor.u32 1.1754944e-38, %v4512
        %v4514 = vsel %vm4511, %v4513, %v4509
        %v4515 = vmul.f32 1.0, %v4514
        %v4516 = vxor.u32 %v4184, 2147483648
        %v4517 = vxor.u32 %v4185, 2147483648
        %v4518 = vxor.u32 %v4192, 2147483648
        %v4519 = vxor.u32 %v4193, 2147483648
        %v4520 = vxor.u32 %v4200, 2147483648
        %v4521 = vxor.u32 %v4201, 2147483648
        %v4522 = vxor.u32 %v4208, 2147483648
        %v4523 = vxor.u32 %v4209, 2147483648
        %v4524 = vmul.f32 %v4516, 1.442695
        %v4525 = vpow.pop %v4524
        %v4526 = vmul.f32 %v4517, 1.442695
        %v4527 = vpow.pop %v4526
        %v4528 = vmul.f32 %v4518, 1.442695
        %v4529 = vpow.pop %v4528
        %v4530 = vmul.f32 %v4519, 1.442695
        %v4531 = vpow.pop %v4530
        %v4532 = vmul.f32 %v4520, 1.442695
        %v4533 = vpow.pop %v4532
        %v4534 = vmul.f32 %v4521, 1.442695
        %v4535 = vpow.pop %v4534
        %v4536 = vmul.f32 %v4522, 1.442695
        %v4537 = vpow.pop %v4536
        %v4538 = vmul.f32 %v4523, 1.442695
        %v4539 = vpow.pop %v4538
        %v4540 = vadd.f32 %v4525, 1.0
        %v4541 = vadd.f32 %v4527, 1.0
        %v4542 = vadd.f32 %v4529, 1.0
        %v4543 = vadd.f32 %v4531, 1.0
        %v4544 = vadd.f32 %v4533, 1.0
        %v4545 = vadd.f32 %v4535, 1.0
        %v4546 = vadd.f32 %v4537, 1.0
        %v4547 = vadd.f32 %v4539, 1.0
        %v4548 = vrcp.pop %v4540
        %v4549 = vmul.f32 %v4540, %v4548
        %v4550 = vsub.f32 1.0, %v4549
        %v4551 = vmul.f32 %v4548, %v4550
        %v4552 = vadd.f32 %v4548, %v4551
        %vm4553 = vweird.f32 %v4540
        %vm4554 = vweird.f32 %v4548
        %vm4555 = vmor %vm4553, %vm4554
        %v4556 = vsel %vm4555, %v4548, %v4552
        %v4557 = vand.u32 2147483647, %v4540
        %vm4558 = vcmp.eq.f32.partialorder %v4557, 8.507059e+37
        %v4559 = vand.u32 %v4540, 2147483648
        %v4560 = vor.u32 1.1754944e-38, %v4559
        %v4561 = vsel %vm4558, %v4560, %v4556
        %v4562 = vmul.f32 1.0, %v4561
        %v4563 = vrcp.pop %v4541
        %v4564 = vmul.f32 %v4541, %v4563
        %v4565 = vsub.f32 1.0, %v4564
        %v4566 = vmul.f32 %v4563, %v4565
        %v4567 = vadd.f32 %v4563, %v4566
        %vm4568 = vweird.f32 %v4541
        %vm4569 = vweird.f32 %v4563
        %vm4570 = vmor %vm4568, %vm4569
        %v4571 = vsel %vm4570, %v4563, %v4567
        %v4572 = vand.u32 2147483647, %v4541
        %vm4573 = vcmp.eq.f32.partialorder %v4572, 8.507059e+37
        %v4574 = vand.u32 %v4541, 2147483648
        %v4575 = vor.u32 1.1754944e-38, %v4574
        %v4576 = vsel %vm4573, %v4575, %v4571
        %v4577 = vmul.f32 1.0, %v4576
        %v4578 = vrcp.pop %v4542
        %v4579 = vmul.f32 %v4542, %v4578
        %v4580 = vsub.f32 1.0, %v4579
        %v4581 = vmul.f32 %v4578, %v4580
        %v4582 = vadd.f32 %v4578, %v4581
        %vm4583 = vweird.f32 %v4542
        %vm4584 = vweird.f32 %v4578
        %vm4585 = vmor %vm4583, %vm4584
        %v4586 = vsel %vm4585, %v4578, %v4582
        %v4587 = vand.u32 2147483647, %v4542
        %vm4588 = vcmp.eq.f32.partialorder %v4587, 8.507059e+37
        %v4589 = vand.u32 %v4542, 2147483648
        %v4590 = vor.u32 1.1754944e-38, %v4589
        %v4591 = vsel %vm4588, %v4590, %v4586
        %v4592 = vmul.f32 1.0, %v4591
        %v4593 = vrcp.pop %v4543
        %v4594 = vmul.f32 %v4543, %v4593
        %v4595 = vsub.f32 1.0, %v4594
        %v4596 = vmul.f32 %v4593, %v4595
        %v4597 = vadd.f32 %v4593, %v4596
        %vm4598 = vweird.f32 %v4543
        %vm4599 = vweird.f32 %v4593
        %vm4600 = vmor %vm4598, %vm4599
        %v4601 = vsel %vm4600, %v4593, %v4597
        %v4602 = vand.u32 2147483647, %v4543
        %vm4603 = vcmp.eq.f32.partialorder %v4602, 8.507059e+37
        %v4604 = vand.u32 %v4543, 2147483648
        %v4605 = vor.u32 1.1754944e-38, %v4604
        %v4606 = vsel %vm4603, %v4605, %v4601
        %v4607 = vmul.f32 1.0, %v4606
        %v4608 = vrcp.pop %v4544
        %v4609 = vmul.f32 %v4544, %v4608
        %v4610 = vsub.f32 1.0, %v4609
        %v4611 = vmul.f32 %v4608, %v4610
        %v4612 = vadd.f32 %v4608, %v4611
        %vm4613 = vweird.f32 %v4544
        %vm4614 = vweird.f32 %v4608
        %vm4615 = vmor %vm4613, %vm4614
        %v4616 = vsel %vm4615, %v4608, %v4612
        %v4617 = vand.u32 2147483647, %v4544
        %vm4618 = vcmp.eq.f32.partialorder %v4617, 8.507059e+37
        %v4619 = vand.u32 %v4544, 2147483648
        %v4620 = vor.u32 1.1754944e-38, %v4619
        %v4621 = vsel %vm4618, %v4620, %v4616
        %v4622 = vmul.f32 1.0, %v4621
        %v4623 = vrcp.pop %v4545
        %v4624 = vmul.f32 %v4545, %v4623
        %v4625 = vsub.f32 1.0, %v4624
        %v4626 = vmul.f32 %v4623, %v4625
        %v4627 = vadd.f32 %v4623, %v4626
        %vm4628 = vweird.f32 %v4545
        %vm4629 = vweird.f32 %v4623
        %vm4630 = vmor %vm4628, %vm4629
        %v4631 = vsel %vm4630, %v4623, %v4627
        %v4632 = vand.u32 2147483647, %v4545
        %vm4633 = vcmp.eq.f32.partialorder %v4632, 8.507059e+37
        %v4634 = vand.u32 %v4545, 2147483648
        %v4635 = vor.u32 1.1754944e-38, %v4634
        %v4636 = vsel %vm4633, %v4635, %v4631
        %v4637 = vmul.f32 1.0, %v4636
        %v4638 = vrcp.pop %v4546
        %v4639 = vmul.f32 %v4546, %v4638
        %v4640 = vsub.f32 1.0, %v4639
        %v4641 = vmul.f32 %v4638, %v4640
        %v4642 = vadd.f32 %v4638, %v4641
        %vm4643 = vweird.f32 %v4546
        %vm4644 = vweird.f32 %v4638
        %vm4645 = vmor %vm4643, %vm4644
        %v4646 = vsel %vm4645, %v4638, %v4642
        %v4647 = vand.u32 2147483647, %v4546
        %vm4648 = vcmp.eq.f32.partialorder %v4647, 8.507059e+37
        %v4649 = vand.u32 %v4546, 2147483648
        %v4650 = vor.u32 1.1754944e-38, %v4649
        %v4651 = vsel %vm4648, %v4650, %v4646
        %v4652 = vmul.f32 1.0, %v4651
        %v4653 = vrcp.pop %v4547
        %v4654 = vmul.f32 %v4547, %v4653
        %v4655 = vsub.f32 1.0, %v4654
        %v4656 = vmul.f32 %v4653, %v4655
        %v4657 = vadd.f32 %v4653, %v4656
        %vm4658 = vweird.f32 %v4547
        %vm4659 = vweird.f32 %v4653
        %vm4660 = vmor %vm4658, %vm4659
        %v4661 = vsel %vm4660, %v4653, %v4657
        %v4662 = vand.u32 2147483647, %v4547
        %vm4663 = vcmp.eq.f32.partialorder %v4662, 8.507059e+37
        %v4664 = vand.u32 %v4547, 2147483648
        %v4665 = vor.u32 1.1754944e-38, %v4664
        %v4666 = vsel %vm4663, %v4665, %v4661
        %v4667 = vmul.f32 1.0, %v4666
        %v4668 = vtanh.pop %v4186
        %v4669 = vtanh.pop %v4187
        %v4670 = vtanh.pop %v4194
        %v4671 = vtanh.pop %v4195
        %v4672 = vtanh.pop %v4202
        %v4673 = vtanh.pop %v4203
        %v4674 = vtanh.pop %v4210
        %v4675 = vtanh.pop %v4211
        %v4676 = vld [vmem:[#allocation3] sm:$0xff]
        %v4677 = vld [vmem:[#allocation3 + $0x8] sm:$0xff]
        %v4678 = vld [vmem:[#allocation3 + $0x10] sm:$0xff]
        %v4679 = vld [vmem:[#allocation3 + $0x18] sm:$0xff]
        %v4680 = vld [vmem:[#allocation3 + $0x20] sm:$0xff]
        %v4681 = vld [vmem:[#allocation3 + $0x28] sm:$0xff]
        %v4682 = vld [vmem:[#allocation3 + $0x30] sm:$0xff]
        %v4683 = vld [vmem:[#allocation3 + $0x38] sm:$0xff]
        %v4684 = vmul.f32 %v4410, %v4676
        %v4685 = vmul.f32 %v4425, %v4677
        %v4686 = vmul.f32 %v4440, %v4678
        %v4687 = vmul.f32 %v4455, %v4679
        %v4688 = vmul.f32 %v4470, %v4680
        %v4689 = vmul.f32 %v4485, %v4681
        %v4690 = vmul.f32 %v4500, %v4682
        %v4691 = vmul.f32 %v4515, %v4683
        %v4692 = vmul.f32 %v4258, %v4668
        %v4693 = vmul.f32 %v4273, %v4669
        %v4694 = vmul.f32 %v4288, %v4670
        %v4695 = vmul.f32 %v4303, %v4671
        %v4696 = vmul.f32 %v4318, %v4672
        %v4697 = vmul.f32 %v4333, %v4673
        %v4698 = vmul.f32 %v4348, %v4674
        %v4699 = vmul.f32 %v4363, %v4675
        %v4700 = vadd.f32 %v4684, %v4692
        %v4701 = vadd.f32 %v4685, %v4693
        %v4702 = vadd.f32 %v4686, %v4694
        %v4703 = vadd.f32 %v4687, %v4695
        %v4704 = vadd.f32 %v4688, %v4696
        %v4705 = vadd.f32 %v4689, %v4697
        %v4706 = vadd.f32 %v4690, %v4698
        %v4707 = vadd.f32 %v4691, %v4699
        %v4708 = vtanh.pop %v4700
        %v4709 = vtanh.pop %v4701
        %v4710 = vtanh.pop %v4702
        %v4711 = vtanh.pop %v4703
        %v4712 = vtanh.pop %v4704
        %v4713 = vtanh.pop %v4705
        %v4714 = vtanh.pop %v4706
        %v4715 = vtanh.pop %v4707
        %v4716 = vmul.f32 %v4562, %v4708
        %v4717 = vmul.f32 %v4577, %v4709
        %v4718 = vmul.f32 %v4592, %v4710
        %v4719 = vmul.f32 %v4607, %v4711
        %v4720 = vmul.f32 %v4622, %v4712
        %v4721 = vmul.f32 %v4637, %v4713
        %v4722 = vmul.f32 %v4652, %v4714
        %v4723 = vmul.f32 %v4667, %v4715
        %4724 = vst [vmem:[#allocation3] sm:$0xff] %v4700
        %4725 = vst [vmem:[#allocation3 + $0x8] sm:$0xff] %v4701
        %4726 = vst [vmem:[#allocation3 + $0x10] sm:$0xff] %v4702
        %4727 = vst [vmem:[#allocation3 + $0x18] sm:$0xff] %v4703
        %4728 = vst [vmem:[#allocation3 + $0x20] sm:$0xff] %v4704
        %4729 = vst [vmem:[#allocation3 + $0x28] sm:$0xff] %v4705
        %4730 = vst [vmem:[#allocation3 + $0x30] sm:$0xff] %v4706
        %4731 = vst [vmem:[#allocation3 + $0x38] sm:$0xff] %v4707
        %vm4740 = vcmask 1041408
        %v4741 = vrot.slane %v4716, 6
        %v4742 = vrot.slane %v4717, 6
        %v4743 = vrot.slane %v4718, 6
        %v4744 = vsel %vm4740, %v4741, %v4743
        %v4745 = vrot.slane %v4719, 6
        %v4746 = vsel %vm4740, %v4742, %v4745
        %v4747 = vrot.slane %v4720, 6
        %v4748 = vrot.slane %v4721, 6
        %v4749 = vrot.slane %v4722, 6
        %v4750 = vsel %vm4740, %v4747, %v4749
        %v4751 = vrot.slane %v4723, 6
        %v4752 = vsel %vm4740, %v4748, %v4751
        %4765 = vst [vmem:[#allocation2] sm:$0xfc] %v4741
        %4766 = vst [vmem:[#allocation2 + $0x8] sm:$0xfc] %v4742
        %4767 = vst [vmem:[#allocation2 + $0x10] sm:$0xff] %v4744
        %4768 = vst [vmem:[#allocation2 + $0x18] sm:$0xff] %v4746
        %4769 = vst [vmem:[#allocation2 + $0x20] sm:$0x3] %v4743
        %4770 = vst [vmem:[#allocation2 + $0x28] sm:$0x3] %v4745
        %4771 = vst [vmem:[#allocation2 + $0x30] sm:$0xfc] %v4747
        %4772 = vst [vmem:[#allocation2 + $0x38] sm:$0xfc] %v4748
        %4773 = vst [vmem:[#allocation2 + $0x40] sm:$0xff] %v4750
        %4774 = vst [vmem:[#allocation2 + $0x48] sm:$0xff] %v4752
        %4775 = vst [vmem:[#allocation2 + $0x50] sm:$0x3] %v4749
        %4776 = vst [vmem:[#allocation2 + $0x58] sm:$0x3] %v4751
        %4777 = vst [vmem:[%s243] sm:$0xff] %v4716
        %4778 = vst [vmem:[%s243 + $0x8] sm:$0xff] %v4717
        %4779 = vst [vmem:[%s243 + $0x10] sm:$0xff] %v4718
        %4780 = vst [vmem:[%s243 + $0x18] sm:$0xff] %v4719
        %4781 = vst [vmem:[%s243 + $0x20] sm:$0xff] %v4720
        %4782 = vst [vmem:[%s243 + $0x28] sm:$0xff] %v4721
        %4783 = vst [vmem:[%s243 + $0x30] sm:$0xff] %v4722
        %4784 = vst [vmem:[%s243 + $0x38] sm:$0xff] %v4723
        %s4785 = sand.u32 %s114, 1
        %s4786 = scalar_lea.sflag [#allocation6], %s4785
        %s4787 = sand.u32 %s114, 1
        %s4788 = smul.addr %s4787, 64
        %s4789 = scalar_lea.vmem [#allocation9], %s4788
        // Predicated region
        $region41: #{tpu_custom_call.1} parent=27 // pred_check
          %p4790 = pneg %p124
        $region42: #{tpu_custom_call.1} parent=27 // pred_check_branch
          %4792 = sbr.rel (%p4790) target = $region44
        $region43: #{tpu_custom_call.1} parent=27 // pred_region
          %s4793 = smul.u32 %s27, 2
          %s4794 = ssub.s32 7, %s4793
          %s4795 = smul.u32 %s26, %s4794
          %s4796 = sadd.s32 %s27, %s4795
          %4798 = vsyncadd %s4786, 0
          %s4799 = smul.addr %s4796, 8
          %s4800 = smul.addr %s26, 64
          %s4801 = sadd.s32 %s4799, %s4800
          %s4802 = smul.addr %s4801, 8
          %s4803 = scalar_lea.hbm %s2, %s4802
          %s4804 = sshll.u32 %s4789, 4
          %s4805 = int_to_ptr.vmem [resolvable:$true] %s4804
          %s4806 = sshll.u32 %s4803, 4
          %s4807 = int_to_ptr.hbm [resolvable:$true] %s4806
          %4812 = dma.vmem_to_hbm [thread:$0]  %s4805, 1024, %s4807, %s4786, 256, 256, 16
        $region44: #{tpu_custom_call.1} parent=27 // pred_fallthru
          _
      $region28: #{tpu_custom_call.1} parent=5 // pred_fallthru
        _
      %p4813 = scmp.le.s32.totalorder 2, %s17
      // Predicated region
      $region45: #{tpu_custom_call.1} parent=5 // pred_check
        %p4814 = pneg %p4813
      $region46: #{tpu_custom_call.1} parent=5 // pred_check_branch
        %4816 = sbr.rel (%p4814) target = $region48
      $region47: #{tpu_custom_call.1} parent=5 // pred_region
        %s4817 = ssub.s32 %s17, 2
        // Predicated region
        $region49: #{tpu_custom_call.1} parent=47 // pred_check
          %p4818 = pneg %p130
        $region50: #{tpu_custom_call.1} parent=47 // pred_check_branch
          %4820 = sbr.rel (%p4818) target = $region52
        $region51: #{tpu_custom_call.1} parent=47 // pred_region
          %s4821 = sand.u32 %s115, 1
          %s4822 = scalar_lea.sflag [#allocation6], %s4821
          %s4823 = sand.u32 %s115, 1
          %s4824 = smul.addr %s4823, 64
          %s4825 = scalar_lea.vmem [#allocation9], %s4824
          %4827 = dma.done %s4822, 1024
        $region52: #{tpu_custom_call.1} parent=47 // pred_fallthru
          _
      $region48: #{tpu_custom_call.1} parent=5 // pred_fallthru
        _
    $region6: #{tpu_custom_call.1} parent=1 // loop_footer
      %s21 = sadd.s32 1, %s17
    $region7: #{tpu_custom_call.1} parent=1 // loop_footer_branch
      %16 = sbr.rel target = $region3
    $region8: #{tpu_custom_call.1} parent=1 // loop_exit
      _
    %4828 = vsyncpa [#allocation5], 1
    %s4829 = scalar_lea.sflag [#allocation5], 1
    %4830 = vsyncpa %s4829, 1
    %4831 = vsyncpa [#allocation8], 1
    %s4832 = scalar_lea.sflag [#allocation8], 1
    %4833 = vsyncpa %s4832, 1
    %4834 = vsyncpa [#allocation6], 1
    %s4835 = scalar_lea.sflag [#allocation6], 1
    %4836 = vsyncpa %s4835, 1

</llo_original>
